<compile_context>
chip_gen: v6e
topology: v6e:2x2x1
jax: 0.10.0
libtpu: 0.0.40
codegen_flags: <defaults>
</compile_context>

<pallas_src>
import numpy as np
import jax
import jax.numpy as jnp
from jax.experimental import pallas as pl
from jax.experimental.pallas import tpu as pltpu


def _silu(v):
    # swish activation (DimeNet default act); kept in f32 on the VPU/EUP.
    return v * jax.nn.sigmoid(v)


def _round_up(a, b):
    return -(-a // b) * b


def _default_config():
    """Per-generation tile / VMEM defaults (v5e: 128, v6e: 256, v7x: 256 + 2 TCs)."""
    kind = ""
    try:
        kind = jax.devices()[0].device_kind.lower()
    except Exception:
        pass
    if "v5" in kind:
        # 4x128x128 MXU: tile_n=128 already saturates the LHS M dim.
        return dict(tile_n=128, tile_e=512, vmem=64 * 1024 * 1024, two_tc=False)
    if "v7" in kind:
        # 64 MiB physical VMEM, 2 TensorCores per chip.
        return dict(tile_n=256, tile_e=512, vmem=48 * 1024 * 1024, two_tc=True)
    # v6e and unknown chips.
    return dict(tile_n=256, tile_e=512, vmem=64 * 1024 * 1024, two_tc=False)


def output_pp_block_kernel(i_ref, h_ref, w_up_ref, w_lins_ref, b_lins_ref,
                           w_out_ref, o_ref, node_acc):
    n = pl.program_id(0)
    e = pl.program_id(1)

    # zero the node accumulator at the start of each E reduction
    @pl.when(e == 0)
    def _():
        node_acc[...] = jnp.zeros_like(node_acc)

    tile_n = node_acc.shape[0]
    tile_e = h_ref.shape[0]

    # scatter-sum over this edge tile: build the 0/1 scatter matrix for this
    # (node tile, edge tile) in-registers (no HBM one-hot stream) and run it
    # on the MXU in bf16 with f32 accumulation.
    rows = jax.lax.broadcasted_iota(jnp.int32, (tile_n, tile_e), 0) + n * tile_n
    onehot = (rows == i_ref[...]).astype(jnp.bfloat16)            # [tile_n, tile_e]
    node_acc[...] += jnp.dot(onehot, h_ref[...],
                             preferred_element_type=jnp.float32)  # [tile_n, H] f32

    # after the last edge tile: per-head MLP + projection (bf16 MXU ops, f32 acc)
    @pl.when(e == pl.num_programs(1) - 1)
    def _():
        node = node_acc[...].astype(jnp.bfloat16)                 # [tile_n, H]
        A = w_up_ref.shape[0]
        L = w_lins_ref.shape[0] // A
        for a in range(A):                      # static unroll (A small)
            y = jnp.dot(node, w_up_ref[a], preferred_element_type=jnp.float32)
            for l in range(L):                  # static unroll (L small)
                y = jnp.dot(y.astype(jnp.bfloat16), w_lins_ref[a * L + l],
                            preferred_element_type=jnp.float32)
                y = _silu(y + b_lins_ref[pl.ds(a * L + l, 1), :])  # bias/act in f32
            o_ref[a] = jnp.dot(y.astype(jnp.bfloat16), w_out_ref[a],
                               preferred_element_type=jnp.float32
                               ).astype(o_ref.dtype)


def output_pp_block_forward(x, rbf, i, num_nodes,
                            w_rbfs, w_ups, w_linss, b_linss, w_outs,
                            *, tile_n=None, tile_e=None, vmem_limit_bytes=None):
    """Pallas implementation of OutputPPBlockSMP.forward (bt=None path)."""
    cfg = _default_config()
    tile_n = cfg["tile_n"] if tile_n is None else tile_n
    tile_e = cfg["tile_e"] if tile_e is None else tile_e
    vmem_limit_bytes = cfg["vmem"] if vmem_limit_bytes is None else vmem_limit_bytes

    E, R = rbf.shape
    H = x.shape[1]
    A, _, M = w_ups.shape
    L = w_linss.shape[0] // A
    C = w_outs.shape[-1]

    # clamp / align tiles ((8,128) rule: tile_n multiple of 8, tile_e multiple of 128)
    tile_n = max(8, min(_round_up(tile_n, 8), _round_up(num_nodes, 8)))
    tile_e = max(128, min(_round_up(tile_e, 128), _round_up(E, 128)))
    if cfg["two_tc"] and tile_n >= 16 and _round_up(num_nodes, tile_n) // tile_n < 2:
        # keep >= 2 N tiles so both v7x TensorCores get work on the "parallel" axis
        tile_n = max(8, _round_up(tile_n // 2, 8))

    EP = _round_up(E, tile_e)
    NP = _round_up(num_nodes, tile_n)
    CP = _round_up(C, 128)            # lane-dense output (unmasked vst)

    # h = lin_rbf(rbf) * x computed ONCE outside the kernel, cast to bf16 once.
    # Only the last lin_rbf contributes when bt is None (alpha forced to 1.0).
    h = ((rbf @ w_rbfs[-1]) * x).astype(jnp.bfloat16)
    h_p = jnp.pad(h, ((0, EP - E), (0, 0)))
    # padded edges get node index NP -> outside every node tile -> contribute 0
    i_p = jnp.pad(i.astype(jnp.int32), (0, EP - E),
                  constant_values=NP).reshape(1, EP)

    w_ups_b = w_ups.astype(jnp.bfloat16)                               # [A, H, M]
    w_linss_b = w_linss.astype(jnp.bfloat16)                           # [A*L, M, M]
    b_linss_2d = b_linss.reshape(A * L, M).astype(jnp.float32)         # [A*L, M]
    w_outs_b = jnp.pad(w_outs, ((0, 0), (0, 0), (0, CP - C))).astype(jnp.bfloat16)

    grid = (NP // tile_n, EP // tile_e)
    n_tiles = grid[0]

    flops = 2 * (NP * EP * H                                          # scatter matmul
                 + A * (NP * H * M + L * NP * M * M + NP * M * CP))   # epilogue
    transcendentals = A * L * NP * M
    bytes_accessed = (n_tiles * (EP * H * 2 + EP * 4)                 # edge stream per N tile
                      + (w_ups_b.size + w_linss_b.size + w_outs_b.size) * 2
                      + b_linss_2d.size * 4
                      + A * NP * CP * 4)

    out = pl.pallas_call(
        output_pp_block_kernel,
        out_shape=jax.ShapeDtypeStruct((A, NP, CP), jnp.float32),
        grid_spec=pltpu.PrefetchScalarGridSpec(
            num_scalar_prefetch=0,
            grid=grid,
            in_specs=[
                pl.BlockSpec((1, tile_e), lambda n, e: (0, e)),        # edge node indices
                pl.BlockSpec((tile_e, H), lambda n, e: (e, 0)),        # h tile (bf16)
                # weights: constant block index -> VMEM-resident across the grid
                pl.BlockSpec((A, H, M), lambda n, e: (0, 0, 0)),       # w_ups   (bf16)
                pl.BlockSpec((A * L, M, M), lambda n, e: (0, 0, 0)),   # w_linss (bf16)
                pl.BlockSpec((A * L, M), lambda n, e: (0, 0)),         # b_linss (f32)
                pl.BlockSpec((A, M, CP), lambda n, e: (0, 0, 0)),      # w_outs  (bf16, padded)
            ],
            out_specs=pl.BlockSpec((A, tile_n, CP), lambda n, e: (0, n, 0)),
            scratch_shapes=[pltpu.VMEM((tile_n, H), jnp.float32)],     # node accumulator
        ),
        compiler_params=pltpu.CompilerParams(
            dimension_semantics=("parallel", "arbitrary"),
            vmem_limit_bytes=vmem_limit_bytes,
        ),
        cost_estimate=pl.CostEstimate(flops=flops,
                                      transcendentals=transcendentals,
                                      bytes_accessed=bytes_accessed),
    )(i_p, h_p, w_ups_b, w_linss_b, b_linss_2d, w_outs_b)

    # strip node / channel padding
    return out[:, :num_nodes, :C]


def reference_forward(x, rbf, i, num_nodes,
                      w_rbfs, w_ups, w_linss, b_linss, w_outs):
    A = w_ups.shape[0]
    L = w_linss.shape[0] // A
    h = (rbf @ w_rbfs[-1]) * x
    node = jax.ops.segment_sum(h, i, num_segments=num_nodes)
    outs = []
    for a in range(A):
        y = node @ w_ups[a]
        for l in range(L):
            y = _silu(y @ w_linss[a * L + l] + b_linss[a * L + l])
        outs.append(y @ w_outs[a])
    return jnp.stack(outs)


if __name__ == "__main__":
    # small, TPU-friendly shapes consistent with the module
    E = 500           # number of edges (non-multiple of tile -> exercises padding)
    N = 120           # number of nodes
    R = 8             # num_radial
    H = 128           # hidden_channels (lane-dense)
    M = 128           # out_emb_channels (lane-dense)
    C = 48            # out_channels (padded to 128 inside the kernel)
    L = 3             # num_layers
    NUM_BT = 5        # -> 6 lin_rbfs (only the last is used when bt is None)
    NUM_AUX = 1
    A = NUM_AUX + 1   # number of output heads

    key = jax.random.PRNGKey(0)
    ks = jax.random.split(key, 8)

    rbf = jax.random.normal(ks[0], (E, R), dtype=jnp.float32)
    x = jax.random.normal(ks[1], (E, H), dtype=jnp.float32)
    i = jax.random.randint(ks[2], (E,), 0, N, dtype=jnp.int32)

    # torch Linear stores weight as [out, in]; we store the transpose so y = x @ W.
    # TODO(synk): glorot_orthogonal init not reproduced exactly; scaled-normal init used
    # (shapes match). The module zero-inits the final `lins` and the biases; nonzero
    # deterministic values are used here so the test output is non-trivial.
    w_rbfs = jax.random.normal(ks[3], (NUM_BT + 1, R, H), jnp.float32) * (2.0 / (R + H)) ** 0.5
    w_ups = jax.random.normal(ks[4], (A, H, M), jnp.float32) * (2.0 / (H + M)) ** 0.5
    w_linss = jax.random.normal(ks[5], (A * L, M, M), jnp.float32) * (2.0 / (M + M)) ** 0.5
    b_linss = jax.random.normal(ks[6], (A * L, 1, M), jnp.float32) * 0.1
    w_outs = jax.random.normal(ks[7], (A, M, C), jnp.float32) * (2.0 / (M + C)) ** 0.5

    out = output_pp_block_forward(x, rbf, i, N, w_rbfs, w_ups, w_linss, b_linss, w_outs)
    out = jax.block_until_ready(out)

    ref = reference_forward(x, rbf, i, N, w_rbfs, w_ups, w_linss, b_linss, w_outs)
    # tolerance loosened vs pure-f32: h is bf16 for the scatter matmul and the MLP epilogue
    # runs with bf16 operands (f32 accumulation)
    np.testing.assert_allclose(np.asarray(out), np.asarray(ref), rtol=5e-2, atol=5e-2)

    print("KERNEL_OK")
</pallas_src>

<mosaic_0001>
module attributes {stable_mosaic.version = 11 : i64} {
  func.func @output_pp_block_kernel(%arg0: i32, %arg1: i32, %arg2: memref<1x512xi32, #tpu.memory_space<vmem>>, %arg3: memref<512x128xbf16, #tpu.memory_space<vmem>>, %arg4: memref<2x128x128xbf16, #tpu.memory_space<vmem>>, %arg5: memref<6x128x128xbf16, #tpu.memory_space<vmem>>, %arg6: memref<6x128xf32, #tpu.memory_space<vmem>>, %arg7: memref<2x128x128xbf16, #tpu.memory_space<vmem>>, %arg8: memref<2x120x128xf32, #tpu.memory_space<vmem>>, %arg9: memref<120x128xf32, #tpu.memory_space<vmem>>) attributes {dimension_semantics = [#tpu.dimension_semantics<parallel>, #tpu.dimension_semantics<arbitrary>], iteration_bounds = array<i64: 1, 1>, scalar_prefetch = 0 : i64, scratch_operands = 1 : i64, tpu.core_type = #tpu.core_type<tc>, window_params = [{transform_indices = @transform_0, window_bounds = array<i64: 1, 512>}, {transform_indices = @transform_1, window_bounds = array<i64: 512, 128>}, {pipeline_mode = #tpu.pipeline_mode<synchronous>, transform_indices = @transform_2, window_bounds = array<i64: 2, 128, 128>}, {pipeline_mode = #tpu.pipeline_mode<synchronous>, transform_indices = @transform_3, window_bounds = array<i64: 6, 128, 128>}, {pipeline_mode = #tpu.pipeline_mode<synchronous>, transform_indices = @transform_4, window_bounds = array<i64: 6, 128>}, {pipeline_mode = #tpu.pipeline_mode<synchronous>, transform_indices = @transform_5, window_bounds = array<i64: 2, 128, 128>}, {transform_indices = @transform_6, window_bounds = array<i64: 2, 120, 128>}]} {
    %c0_i32 = arith.constant 0 : i32
    %0 = arith.cmpi eq, %arg1, %c0_i32 : i32
    %1 = arith.extui %0 : i1 to i32
    %c0_i32_0 = arith.constant 0 : i32
    %2 = arith.cmpi ne, %1, %c0_i32_0 : i32
    scf.if %2 {
      %cst_10 = arith.constant 0.000000e+00 : f32
      %21 = vector.broadcast %cst_10 : f32 to vector<120x128xf32>
      %c0_11 = arith.constant 0 : index
      %c0_12 = arith.constant 0 : index
      %22 = vector.load %arg9[%c0_11, %c0_12] : memref<120x128xf32, #tpu.memory_space<vmem>>, vector<120x128xf32>
      tpu.vector_store %arg9[%c0_11, %c0_12], %21 {strides = array<i32>} : memref<120x128xf32, #tpu.memory_space<vmem>>, vector<120x128xf32>,
    } else {
    }
    %3 = tpu.iota {dimensions = array<i32: 0>} : vector<120x512xi32>
    %c120_i32 = arith.constant 120 : i32
    %4 = arith.muli %arg0, %c120_i32 : i32
    %5 = vector.broadcast %4 : i32 to vector<120x512xi32>
    %6 = arith.addi %3, %5 : vector<120x512xi32>
    %c0 = arith.constant 0 : index
    %c0_1 = arith.constant 0 : index
    %7 = vector.load %arg2[%c0, %c0_1] : memref<1x512xi32, #tpu.memory_space<vmem>>, vector<1x512xi32>
    %8 = vector.broadcast %7 : vector<1x512xi32> to vector<120x512xi32>
    %9 = arith.cmpi eq, %6, %8 : vector<120x512xi32>
    %10 = arith.extui %9 : vector<120x512xi1> to vector<120x512xi32>
    %11 = arith.sitofp %10 : vector<120x512xi32> to vector<120x512xf32>
    %12 = arith.truncf %11 : vector<120x512xf32> to vector<120x512xbf16>
    %c0_2 = arith.constant 0 : index
    %c0_3 = arith.constant 0 : index
    %13 = vector.load %arg9[%c0_2, %c0_3] : memref<120x128xf32, #tpu.memory_space<vmem>>, vector<120x128xf32>
    %c0_4 = arith.constant 0 : index
    %c0_5 = arith.constant 0 : index
    %14 = vector.load %arg3[%c0_4, %c0_5] : memref<512x128xbf16, #tpu.memory_space<vmem>>, vector<512x128xbf16>
    %cst = arith.constant dense<0.000000e+00> : vector<120x128xf32>
    %15 = tpu.matmul %12, %14, %cst {dimension_numbers = #tpu.dot_dimension_numbers<[1], [0], [0], [1], [0, 0, 1, 1], [], []>} : vector<120x512xbf16>, vector<512x128xbf16>, vector<120x128xf32> -> vector<120x128xf32>
    %16 = arith.addf %13, %15 : vector<120x128xf32>
    %c0_6 = arith.constant 0 : index
    %c0_7 = arith.constant 0 : index
    %17 = vector.load %arg9[%c0_6, %c0_7] : memref<120x128xf32, #tpu.memory_space<vmem>>, vector<120x128xf32>
    tpu.vector_store %arg9[%c0_6, %c0_7], %16 {strides = array<i32>} : memref<120x128xf32, #tpu.memory_space<vmem>>, vector<120x128xf32>,
    %c0_i32_8 = arith.constant 0 : i32
    %18 = arith.cmpi eq, %arg1, %c0_i32_8 : i32
    %19 = arith.extui %18 : i1 to i32
    %c0_i32_9 = arith.constant 0 : i32
    %20 = arith.cmpi ne, %19, %c0_i32_9 : i32
    scf.if %20 {
      %c0_10 = arith.constant 0 : index
      %c0_11 = arith.constant 0 : index
      %21 = vector.load %arg9[%c0_10, %c0_11] : memref<120x128xf32, #tpu.memory_space<vmem>>, vector<120x128xf32>
      %22 = arith.truncf %21 : vector<120x128xf32> to vector<120x128xbf16>
      %c0_12 = arith.constant 0 : index
      %c0_13 = arith.constant 0 : index
      %c0_14 = arith.constant 0 : index
      %23 = vector.load %arg4[%c0_12, %c0_13, %c0_14] : memref<2x128x128xbf16, #tpu.memory_space<vmem>>, vector<1x128x128xbf16>
      %24 = vector.shape_cast %23 : vector<1x128x128xbf16> to vector<128x128xbf16>
      %cst_15 = arith.constant dense<0.000000e+00> : vector<120x128xf32>
      %25 = tpu.matmul %22, %24, %cst_15 {dimension_numbers = #tpu.dot_dimension_numbers<[1], [0], [0], [1], [0, 0, 1, 1], [], []>} : vector<120x128xbf16>, vector<128x128xbf16>, vector<120x128xf32> -> vector<120x128xf32>
      %26 = arith.truncf %25 : vector<120x128xf32> to vector<120x128xbf16>
      %c0_16 = arith.constant 0 : index
      %c0_17 = arith.constant 0 : index
      %c0_18 = arith.constant 0 : index
      %27 = vector.load %arg5[%c0_16, %c0_17, %c0_18] : memref<6x128x128xbf16, #tpu.memory_space<vmem>>, vector<1x128x128xbf16>
      %28 = vector.shape_cast %27 : vector<1x128x128xbf16> to vector<128x128xbf16>
      %cst_19 = arith.constant dense<0.000000e+00> : vector<120x128xf32>
      %29 = tpu.matmul %26, %28, %cst_19 {dimension_numbers = #tpu.dot_dimension_numbers<[1], [0], [0], [1], [0, 0, 1, 1], [], []>} : vector<120x128xbf16>, vector<128x128xbf16>, vector<120x128xf32> -> vector<120x128xf32>
      %c0_20 = arith.constant 0 : index
      %c0_21 = arith.constant 0 : index
      %30 = vector.load %arg6[%c0_20, %c0_21] : memref<6x128xf32, #tpu.memory_space<vmem>>, vector<1x128xf32>
      %31 = vector.broadcast %30 : vector<1x128xf32> to vector<120x128xf32>
      %32 = arith.addf %29, %31 : vector<120x128xf32>
      %33 = arith.negf %32 : vector<120x128xf32>
      %34 = math.exp %33 : vector<120x128xf32>
      %cst_22 = arith.constant 1.000000e+00 : f32
      %35 = vector.broadcast %cst_22 : f32 to vector<120x128xf32>
      %36 = arith.addf %35, %34 : vector<120x128xf32>
      %37 = arith.divf %35, %36 : vector<120x128xf32>
      %38 = arith.mulf %32, %37 : vector<120x128xf32>
      %39 = arith.truncf %38 : vector<120x128xf32> to vector<120x128xbf16>
      %c1 = arith.constant 1 : index
      %c0_23 = arith.constant 0 : index
      %c0_24 = arith.constant 0 : index
      %40 = vector.load %arg5[%c1, %c0_23, %c0_24] : memref<6x128x128xbf16, #tpu.memory_space<vmem>>, vector<1x128x128xbf16>
      %41 = vector.shape_cast %40 : vector<1x128x128xbf16> to vector<128x128xbf16>
      %cst_25 = arith.constant dense<0.000000e+00> : vector<120x128xf32>
      %42 = tpu.matmul %39, %41, %cst_25 {dimension_numbers = #tpu.dot_dimension_numbers<[1], [0], [0], [1], [0, 0, 1, 1], [], []>} : vector<120x128xbf16>, vector<128x128xbf16>, vector<120x128xf32> -> vector<120x128xf32>
      %c1_26 = arith.constant 1 : index
      %c0_27 = arith.constant 0 : index
      %43 = vector.load %arg6[%c1_26, %c0_27] : memref<6x128xf32, #tpu.memory_space<vmem>>, vector<1x128xf32>
      %44 = vector.broadcast %43 : vector<1x128xf32> to vector<120x128xf32>
      %45 = arith.addf %42, %44 : vector<120x128xf32>
      %46 = arith.negf %45 : vector<120x128xf32>
      %47 = math.exp %46 : vector<120x128xf32>
      %cst_28 = arith.constant 1.000000e+00 : f32
      %48 = vector.broadcast %cst_28 : f32 to vector<120x128xf32>
      %49 = arith.addf %48, %47 : vector<120x128xf32>
      %50 = arith.divf %48, %49 : vector<120x128xf32>
      %51 = arith.mulf %45, %50 : vector<120x128xf32>
      %52 = arith.truncf %51 : vector<120x128xf32> to vector<120x128xbf16>
      %c2 = arith.constant 2 : index
      %c0_29 = arith.constant 0 : index
      %c0_30 = arith.constant 0 : index
      %53 = vector.load %arg5[%c2, %c0_29, %c0_30] : memref<6x128x128xbf16, #tpu.memory_space<vmem>>, vector<1x128x128xbf16>
      %54 = vector.shape_cast %53 : vector<1x128x128xbf16> to vector<128x128xbf16>
      %cst_31 = arith.constant dense<0.000000e+00> : vector<120x128xf32>
      %55 = tpu.matmul %52, %54, %cst_31 {dimension_numbers = #tpu.dot_dimension_numbers<[1], [0], [0], [1], [0, 0, 1, 1], [], []>} : vector<120x128xbf16>, vector<128x128xbf16>, vector<120x128xf32> -> vector<120x128xf32>
      %c2_32 = arith.constant 2 : index
      %c0_33 = arith.constant 0 : index
      %56 = vector.load %arg6[%c2_32, %c0_33] : memref<6x128xf32, #tpu.memory_space<vmem>>, vector<1x128xf32>
      %57 = vector.broadcast %56 : vector<1x128xf32> to vector<120x128xf32>
      %58 = arith.addf %55, %57 : vector<120x128xf32>
      %59 = arith.negf %58 : vector<120x128xf32>
      %60 = math.exp %59 : vector<120x128xf32>
      %cst_34 = arith.constant 1.000000e+00 : f32
      %61 = vector.broadcast %cst_34 : f32 to vector<120x128xf32>
      %62 = arith.addf %61, %60 : vector<120x128xf32>
      %63 = arith.divf %61, %62 : vector<120x128xf32>
      %64 = arith.mulf %58, %63 : vector<120x128xf32>
      %65 = arith.truncf %64 : vector<120x128xf32> to vector<120x128xbf16>
      %c0_35 = arith.constant 0 : index
      %c0_36 = arith.constant 0 : index
      %c0_37 = arith.constant 0 : index
      %66 = vector.load %arg7[%c0_35, %c0_36, %c0_37] : memref<2x128x128xbf16, #tpu.memory_space<vmem>>, vector<1x128x128xbf16>
      %67 = vector.shape_cast %66 : vector<1x128x128xbf16> to vector<128x128xbf16>
      %cst_38 = arith.constant dense<0.000000e+00> : vector<120x128xf32>
      %68 = tpu.matmul %65, %67, %cst_38 {dimension_numbers = #tpu.dot_dimension_numbers<[1], [0], [0], [1], [0, 0, 1, 1], [], []>} : vector<120x128xbf16>, vector<128x128xbf16>, vector<120x128xf32> -> vector<120x128xf32>
      %c0_39 = arith.constant 0 : index
      %c0_40 = arith.constant 0 : index
      %c0_41 = arith.constant 0 : index
      %69 = vector.load %arg8[%c0_39, %c0_40, %c0_41] : memref<2x120x128xf32, #tpu.memory_space<vmem>>, vector<1x120x128xf32>
      %70 = vector.shape_cast %69 : vector<1x120x128xf32> to vector<120x128xf32>
      %71 = vector.shape_cast %68 : vector<120x128xf32> to vector<1x120x128xf32>
      tpu.vector_store %arg8[%c0_39, %c0_40, %c0_41], %71 {strides = array<i32>} : memref<2x120x128xf32, #tpu.memory_space<vmem>>, vector<1x120x128xf32>,
      %c1_42 = arith.constant 1 : index
      %c0_43 = arith.constant 0 : index
      %c0_44 = arith.constant 0 : index
      %72 = vector.load %arg4[%c1_42, %c0_43, %c0_44] : memref<2x128x128xbf16, #tpu.memory_space<vmem>>, vector<1x128x128xbf16>
      %73 = vector.shape_cast %72 : vector<1x128x128xbf16> to vector<128x128xbf16>
      %cst_45 = arith.constant dense<0.000000e+00> : vector<120x128xf32>
      %74 = tpu.matmul %22, %73, %cst_45 {dimension_numbers = #tpu.dot_dimension_numbers<[1], [0], [0], [1], [0, 0, 1, 1], [], []>} : vector<120x128xbf16>, vector<128x128xbf16>, vector<120x128xf32> -> vector<120x128xf32>
      %75 = arith.truncf %74 : vector<120x128xf32> to vector<120x128xbf16>
      %c3 = arith.constant 3 : index
      %c0_46 = arith.constant 0 : index
      %c0_47 = arith.constant 0 : index
      %76 = vector.load %arg5[%c3, %c0_46, %c0_47] : memref<6x128x128xbf16, #tpu.memory_space<vmem>>, vector<1x128x128xbf16>
      %77 = vector.shape_cast %76 : vector<1x128x128xbf16> to vector<128x128xbf16>
      %cst_48 = arith.constant dense<0.000000e+00> : vector<120x128xf32>
      %78 = tpu.matmul %75, %77, %cst_48 {dimension_numbers = #tpu.dot_dimension_numbers<[1], [0], [0], [1], [0, 0, 1, 1], [], []>} : vector<120x128xbf16>, vector<128x128xbf16>, vector<120x128xf32> -> vector<120x128xf32>
      %c3_49 = arith.constant 3 : index
      %c0_50 = arith.constant 0 : index
      %79 = vector.load %arg6[%c3_49, %c0_50] : memref<6x128xf32, #tpu.memory_space<vmem>>, vector<1x128xf32>
      %80 = vector.broadcast %79 : vector<1x128xf32> to vector<120x128xf32>
      %81 = arith.addf %78, %80 : vector<120x128xf32>
      %82 = arith.negf %81 : vector<120x128xf32>
      %83 = math.exp %82 : vector<120x128xf32>
      %cst_51 = arith.constant 1.000000e+00 : f32
      %84 = vector.broadcast %cst_51 : f32 to vector<120x128xf32>
      %85 = arith.addf %84, %83 : vector<120x128xf32>
      %86 = arith.divf %84, %85 : vector<120x128xf32>
      %87 = arith.mulf %81, %86 : vector<120x128xf32>
      %88 = arith.truncf %87 : vector<120x128xf32> to vector<120x128xbf16>
      %c4 = arith.constant 4 : index
      %c0_52 = arith.constant 0 : index
      %c0_53 = arith.constant 0 : index
      %89 = vector.load %arg5[%c4, %c0_52, %c0_53] : memref<6x128x128xbf16, #tpu.memory_space<vmem>>, vector<1x128x128xbf16>
      %90 = vector.shape_cast %89 : vector<1x128x128xbf16> to vector<128x128xbf16>
      %cst_54 = arith.constant dense<0.000000e+00> : vector<120x128xf32>
      %91 = tpu.matmul %88, %90, %cst_54 {dimension_numbers = #tpu.dot_dimension_numbers<[1], [0], [0], [1], [0, 0, 1, 1], [], []>} : vector<120x128xbf16>, vector<128x128xbf16>, vector<120x128xf32> -> vector<120x128xf32>
      %c4_55 = arith.constant 4 : index
      %c0_56 = arith.constant 0 : index
      %92 = vector.load %arg6[%c4_55, %c0_56] : memref<6x128xf32, #tpu.memory_space<vmem>>, vector<1x128xf32>
      %93 = vector.broadcast %92 : vector<1x128xf32> to vector<120x128xf32>
      %94 = arith.addf %91, %93 : vector<120x128xf32>
      %95 = arith.negf %94 : vector<120x128xf32>
      %96 = math.exp %95 : vector<120x128xf32>
      %cst_57 = arith.constant 1.000000e+00 : f32
      %97 = vector.broadcast %cst_57 : f32 to vector<120x128xf32>
      %98 = arith.addf %97, %96 : vector<120x128xf32>
      %99 = arith.divf %97, %98 : vector<120x128xf32>
      %100 = arith.mulf %94, %99 : vector<120x128xf32>
      %101 = arith.truncf %100 : vector<120x128xf32> to vector<120x128xbf16>
      %c5 = arith.constant 5 : index
      %c0_58 = arith.constant 0 : index
      %c0_59 = arith.constant 0 : index
      %102 = vector.load %arg5[%c5, %c0_58, %c0_59] : memref<6x128x128xbf16, #tpu.memory_space<vmem>>, vector<1x128x128xbf16>
      %103 = vector.shape_cast %102 : vector<1x128x128xbf16> to vector<128x128xbf16>
      %cst_60 = arith.constant dense<0.000000e+00> : vector<120x128xf32>
      %104 = tpu.matmul %101, %103, %cst_60 {dimension_numbers = #tpu.dot_dimension_numbers<[1], [0], [0], [1], [0, 0, 1, 1], [], []>} : vector<120x128xbf16>, vector<128x128xbf16>, vector<120x128xf32> -> vector<120x128xf32>
      %c5_61 = arith.constant 5 : index
      %c0_62 = arith.constant 0 : index
      %105 = vector.load %arg6[%c5_61, %c0_62] : memref<6x128xf32, #tpu.memory_space<vmem>>, vector<1x128xf32>
      %106 = vector.broadcast %105 : vector<1x128xf32> to vector<120x128xf32>
      %107 = arith.addf %104, %106 : vector<120x128xf32>
      %108 = arith.negf %107 : vector<120x128xf32>
      %109 = math.exp %108 : vector<120x128xf32>
      %cst_63 = arith.constant 1.000000e+00 : f32
      %110 = vector.broadcast %cst_63 : f32 to vector<120x128xf32>
      %111 = arith.addf %110, %109 : vector<120x128xf32>
      %112 = arith.divf %110, %111 : vector<120x128xf32>
      %113 = arith.mulf %107, %112 : vector<120x128xf32>
      %114 = arith.truncf %113 : vector<120x128xf32> to vector<120x128xbf16>
      %c1_64 = arith.constant 1 : index
      %c0_65 = arith.constant 0 : index
      %c0_66 = arith.constant 0 : index
      %115 = vector.load %arg7[%c1_64, %c0_65, %c0_66] : memref<2x128x128xbf16, #tpu.memory_space<vmem>>, vector<1x128x128xbf16>
      %116 = vector.shape_cast %115 : vector<1x128x128xbf16> to vector<128x128xbf16>
      %cst_67 = arith.constant dense<0.000000e+00> : vector<120x128xf32>
      %117 = tpu.matmul %114, %116, %cst_67 {dimension_numbers = #tpu.dot_dimension_numbers<[1], [0], [0], [1], [0, 0, 1, 1], [], []>} : vector<120x128xbf16>, vector<128x128xbf16>, vector<120x128xf32> -> vector<120x128xf32>
      %c1_68 = arith.constant 1 : index
      %c0_69 = arith.constant 0 : index
      %c0_70 = arith.constant 0 : index
      %118 = vector.load %arg8[%c1_68, %c0_69, %c0_70] : memref<2x120x128xf32, #tpu.memory_space<vmem>>, vector<1x120x128xf32>
      %119 = vector.shape_cast %118 : vector<1x120x128xf32> to vector<120x128xf32>
      %120 = vector.shape_cast %117 : vector<120x128xf32> to vector<1x120x128xf32>
      tpu.vector_store %arg8[%c1_68, %c0_69, %c0_70], %120 {strides = array<i32>} : memref<2x120x128xf32, #tpu.memory_space<vmem>>, vector<1x120x128xf32>,
    } else {
    }
    return
  }
  func.func @transform_0(%arg0: i32, %arg1: i32) -> (i32, i32) {
    %c0_i32 = arith.constant 0 : i32
    %c0_i32_0 = arith.constant 0 : i32
    return %c0_i32, %arg1 : i32, i32
  }
  func.func @transform_1(%arg0: i32, %arg1: i32) -> (i32, i32) {
    %c0_i32 = arith.constant 0 : i32
    %c0_i32_0 = arith.constant 0 : i32
    return %arg1, %c0_i32 : i32, i32
  }
  func.func @transform_2(%arg0: i32, %arg1: i32) -> (i32, i32, i32) {
    %c0_i32 = arith.constant 0 : i32
    %c0_i32_0 = arith.constant 0 : i32
    %c0_i32_1 = arith.constant 0 : i32
    %c0_i32_2 = arith.constant 0 : i32
    return %c0_i32, %c0_i32_0, %c0_i32_1 : i32, i32, i32
  }
  func.func @transform_3(%arg0: i32, %arg1: i32) -> (i32, i32, i32) {
    %c0_i32 = arith.constant 0 : i32
    %c0_i32_0 = arith.constant 0 : i32
    %c0_i32_1 = arith.constant 0 : i32
    %c0_i32_2 = arith.constant 0 : i32
    return %c0_i32, %c0_i32_0, %c0_i32_1 : i32, i32, i32
  }
  func.func @transform_4(%arg0: i32, %arg1: i32) -> (i32, i32) {
    %c0_i32 = arith.constant 0 : i32
    %c0_i32_0 = arith.constant 0 : i32
    %c0_i32_1 = arith.constant 0 : i32
    return %c0_i32, %c0_i32_0 : i32, i32
  }
  func.func @transform_5(%arg0: i32, %arg1: i32) -> (i32, i32, i32) {
    %c0_i32 = arith.constant 0 : i32
    %c0_i32_0 = arith.constant 0 : i32
    %c0_i32_1 = arith.constant 0 : i32
    %c0_i32_2 = arith.constant 0 : i32
    return %c0_i32, %c0_i32_0, %c0_i32_1 : i32, i32, i32
  }
  func.func @transform_6(%arg0: i32, %arg1: i32) -> (i32, i32, i32) {
    %c0_i32 = arith.constant 0 : i32
    %c0_i32_0 = arith.constant 0 : i32
    %c0_i32_1 = arith.constant 0 : i32
    return %c0_i32, %arg0, %c0_i32_0 : i32, i32, i32
  }
}

</mosaic_0001>

<llo_original>
// kernel: tpu_custom_call.1
$region0: #{tpu_custom_call.1}
  #allocation0 [shape = 'u32[]', space=smem, size = 0x4, offset = 0x4, fixed_abs, tag = 'smem constant byte address 0x4 - core index']
  #allocation1 [shape = 'u32[144,128]{1,0:T(1,128)}', space=vmem, size = 0x12000, scoped, tag = 'internal scratch']
  #allocation2 [shape = 'f32[120,128]{1,0:T(8,128)}', space=vmem, size = 0xf000, scoped, tag = 'scratch operand']
  %s0 = inlined_call_operand.hbm [shape: s32[1,512], index: 0, kind: input, shape index: {}]
  %s1 = inlined_call_operand.hbm [shape: bf16[512,128], index: 1, kind: input, shape index: {}]
  %s2 = inlined_call_operand.hbm [shape: bf16[2,128,128], index: 2, kind: input, shape index: {}]
  %s3 = inlined_call_operand.hbm [shape: bf16[6,128,128], index: 3, kind: input, shape index: {}]
  %s4 = inlined_call_operand.hbm [shape: f32[6,128], index: 4, kind: input, shape index: {}]
  %s5 = inlined_call_operand.hbm [shape: bf16[2,128,128], index: 5, kind: input, shape index: {}]
  %s6 = inlined_call_operand.hbm [shape: f32[2,120,128], index: 6, kind: output, shape index: {}]
  %s7 = sld [smem:[#allocation0]]
  $region66: #{tpu_custom_call.1} parent=0
    _
  %s9 = ssub.s32 1, %s7
  %s10 = scalar_select 0, %s9, %s7
  $region1: #{tpu_custom_call.1} parent=0
    #allocation3 [shape = 'u8[2048]{0}', space=vmem, size = 0x800, scoped, tag = 'input window, operand 0, single buffered']
    #allocation4 [shape = 's32[1]{0}', space=sflag, size = 0x4, scoped, tag = 'scoped memory for tpu_custom_call.1']
    #allocation5 [shape = 's32[1]{0}', space=sflag, size = 0x4, scoped, tag = 'scoped memory for tpu_custom_call.1']
    #allocation6 [shape = 'u8[131072]{0}', space=vmem, size = 0x20000, scoped, tag = 'input window, operand 1, single buffered']
    #allocation7 [shape = 's32[1]{0}', space=sflag, size = 0x4, scoped, tag = 'scoped memory for tpu_custom_call.1']
    #allocation8 [shape = 'u8[65536]{0}', space=vmem, size = 0x10000, scoped, tag = 'input window, operand 2, single buffered']
    #allocation9 [shape = 'u8[196608]{0}', space=vmem, size = 0x30000, scoped, tag = 'input window, operand 3, single buffered']
    #allocation10 [shape = 's32[1]{0}', space=sflag, size = 0x4, scoped, tag = 'scoped memory for tpu_custom_call.1']
    #allocation11 [shape = 'u8[4096]{0}', space=vmem, size = 0x1000, scoped, tag = 'input window, operand 4, single buffered']
    #allocation12 [shape = 'u8[65536]{0}', space=vmem, size = 0x10000, scoped, tag = 'input window, operand 5, single buffered']
    #allocation13 [shape = 's32[1]{0}', space=sflag, size = 0x4, scoped, tag = 'scoped memory for tpu_custom_call.1']
    #allocation14 [shape = 'u8[122880]{0}', space=vmem, size = 0x1e000, scoped, tag = 'output window, operand 0, single buffered']
    %11 = vsyncpa [#allocation4], 0
    %12 = vsyncpa [#allocation7], 0
    %13 = vsyncpa [#allocation10], 0
    %14 = vsyncpa [#allocation13], 0
    %15 = vsyncpa [#allocation5], 0
    // Predicated region
    $region2: #{tpu_custom_call.1} parent=1 // pred_check
      _
    $region3: #{tpu_custom_call.1} parent=1 // pred_check_branch
      %17 = sbr.rel (0) target = $region5
    $region4: #{tpu_custom_call.1} parent=1 // pred_region
      %s19 = ssub.s32 64, 64
      %20 = vsyncadd [#allocation4], %s19
      %s22 = sshll.u32 [#allocation3], 4
      %s23 = int_to_ptr.vmem [resolvable:$true] %s22
      %25 = dma.hbm_to_vmem [thread:$0]  %s0, 64, %s23, [#allocation4]
    $region5: #{tpu_custom_call.1} parent=1 // pred_fallthru
      _
    // Predicated region
    $region6: #{tpu_custom_call.1} parent=1 // pred_check
      _
    $region7: #{tpu_custom_call.1} parent=1 // pred_check_branch
      %27 = sbr.rel (0) target = $region9
    $region8: #{tpu_custom_call.1} parent=1 // pred_region
      %s29 = ssub.s32 4096, 4096
      %30 = vsyncadd [#allocation7], %s29
      %s31 = sshll.u32 [#allocation6], 4
      %s32 = int_to_ptr.vmem [resolvable:$true] %s31
      %37 = dma.hbm_to_vmem [thread:$0]  %s1, 4096, %s32, [#allocation7], 64, 64, 4
    $region9: #{tpu_custom_call.1} parent=1 // pred_fallthru
      _
    // Predicated region
    $region10: #{tpu_custom_call.1} parent=1 // pred_check
      _
    $region11: #{tpu_custom_call.1} parent=1 // pred_check_branch
      %39 = sbr.rel (0) target = $region13
    $region12: #{tpu_custom_call.1} parent=1 // pred_region
      %s41 = ssub.s32 2048, 2048
      %42 = vsyncadd [#allocation7], %s41
      %s43 = sshll.u32 [#allocation8], 4
      %s44 = int_to_ptr.vmem [resolvable:$true] %s43
      %49 = dma.hbm_to_vmem [thread:$0]  %s2, 2048, %s44, [#allocation7], 64, 64, 4
    $region13: #{tpu_custom_call.1} parent=1 // pred_fallthru
      _
    // Predicated region
    $region14: #{tpu_custom_call.1} parent=1 // pred_check
      _
    $region15: #{tpu_custom_call.1} parent=1 // pred_check_branch
      %51 = sbr.rel (0) target = $region17
    $region16: #{tpu_custom_call.1} parent=1 // pred_region
      %s53 = ssub.s32 6144, 6144
      %54 = vsyncadd [#allocation10], %s53
      %s55 = sshll.u32 [#allocation9], 4
      %s56 = int_to_ptr.vmem [resolvable:$true] %s55
      %61 = dma.hbm_to_vmem [thread:$0]  %s3, 6144, %s56, [#allocation10], 64, 64, 4
    $region17: #{tpu_custom_call.1} parent=1 // pred_fallthru
      _
    // Predicated region
    $region18: #{tpu_custom_call.1} parent=1 // pred_check
      _
    $region19: #{tpu_custom_call.1} parent=1 // pred_check_branch
      %63 = sbr.rel (0) target = $region21
    $region20: #{tpu_custom_call.1} parent=1 // pred_region
      %s65 = ssub.s32 128, 128
      %66 = vsyncadd [#allocation10], %s65
      %s68 = sshll.u32 [#allocation11], 4
      %s69 = int_to_ptr.vmem [resolvable:$true] %s68
      %71 = dma.hbm_to_vmem [thread:$0]  %s4, 128, %s69, [#allocation10]
    $region21: #{tpu_custom_call.1} parent=1 // pred_fallthru
      _
    // Predicated region
    $region22: #{tpu_custom_call.1} parent=1 // pred_check
      _
    $region23: #{tpu_custom_call.1} parent=1 // pred_check_branch
      %73 = sbr.rel (0) target = $region25
    $region24: #{tpu_custom_call.1} parent=1 // pred_region
      %s75 = ssub.s32 2048, 2048
      %76 = vsyncadd [#allocation13], %s75
      %s77 = sshll.u32 [#allocation12], 4
      %s78 = int_to_ptr.vmem [resolvable:$true] %s77
      %83 = dma.hbm_to_vmem [thread:$0]  %s5, 2048, %s78, [#allocation13], 64, 64, 4
    $region25: #{tpu_custom_call.1} parent=1 // pred_fallthru
      _
    // Predicated region
    $region26: #{tpu_custom_call.1} parent=1 // pred_check
      _
    $region27: #{tpu_custom_call.1} parent=1 // pred_check_branch
      %85 = sbr.rel (0) target = $region29
    $region28: #{tpu_custom_call.1} parent=1 // pred_region
      %86 = dma.done [#allocation4], 64
    $region29: #{tpu_custom_call.1} parent=1 // pred_fallthru
      _
    // Predicated region
    $region30: #{tpu_custom_call.1} parent=1 // pred_check
      _
    $region31: #{tpu_custom_call.1} parent=1 // pred_check_branch
      %88 = sbr.rel (0) target = $region33
    $region32: #{tpu_custom_call.1} parent=1 // pred_region
      %89 = dma.done [#allocation7], 4096
    $region33: #{tpu_custom_call.1} parent=1 // pred_fallthru
      _
    // Predicated region
    $region34: #{tpu_custom_call.1} parent=1 // pred_check
      _
    $region35: #{tpu_custom_call.1} parent=1 // pred_check_branch
      %91 = sbr.rel (0) target = $region37
    $region36: #{tpu_custom_call.1} parent=1 // pred_region
      %92 = dma.done [#allocation7], 2048
    $region37: #{tpu_custom_call.1} parent=1 // pred_fallthru
      _
    // Predicated region
    $region38: #{tpu_custom_call.1} parent=1 // pred_check
      _
    $region39: #{tpu_custom_call.1} parent=1 // pred_check_branch
      %94 = sbr.rel (0) target = $region41
    $region40: #{tpu_custom_call.1} parent=1 // pred_region
      %95 = dma.done [#allocation10], 6144
    $region41: #{tpu_custom_call.1} parent=1 // pred_fallthru
      _
    // Predicated region
    $region42: #{tpu_custom_call.1} parent=1 // pred_check
      _
    $region43: #{tpu_custom_call.1} parent=1 // pred_check_branch
      %97 = sbr.rel (0) target = $region45
    $region44: #{tpu_custom_call.1} parent=1 // pred_region
      %98 = dma.done [#allocation10], 128
    $region45: #{tpu_custom_call.1} parent=1 // pred_fallthru
      _
    // Predicated region
    $region46: #{tpu_custom_call.1} parent=1 // pred_check
      _
    $region47: #{tpu_custom_call.1} parent=1 // pred_check_branch
      %100 = sbr.rel (0) target = $region49
    $region48: #{tpu_custom_call.1} parent=1 // pred_region
      %101 = dma.done [#allocation13], 2048
    $region49: #{tpu_custom_call.1} parent=1 // pred_fallthru
      _
    %p103 = scmp.eq.s32.totalorder 0, 0
    // Predicated region
    $region50: #{tpu_custom_call.1} parent=1 // pred_check
      %p104 = pneg %p103
    $region51: #{tpu_custom_call.1} parent=1 // pred_check_branch
      %106 = sbr.rel (%p104) target = $region53
    $region52: #{tpu_custom_call.1} parent=1 // pred_region
      %107 = vst [vmem:[#allocation2] sm:$0xff] 0.0
      %108 = vst [vmem:[#allocation2 + $0x8] sm:$0xff] 0.0
      %109 = vst [vmem:[#allocation2 + $0x10] sm:$0xff] 0.0
      %110 = vst [vmem:[#allocation2 + $0x18] sm:$0xff] 0.0
      %111 = vst [vmem:[#allocation2 + $0x20] sm:$0xff] 0.0
      %112 = vst [vmem:[#allocation2 + $0x28] sm:$0xff] 0.0
      %113 = vst [vmem:[#allocation2 + $0x30] sm:$0xff] 0.0
      %114 = vst [vmem:[#allocation2 + $0x38] sm:$0xff] 0.0
      %115 = vst [vmem:[#allocation2 + $0x40] sm:$0xff] 0.0
      %116 = vst [vmem:[#allocation2 + $0x48] sm:$0xff] 0.0
      %117 = vst [vmem:[#allocation2 + $0x50] sm:$0xff] 0.0
      %118 = vst [vmem:[#allocation2 + $0x58] sm:$0xff] 0.0
      %119 = vst [vmem:[#allocation2 + $0x60] sm:$0xff] 0.0
      %120 = vst [vmem:[#allocation2 + $0x68] sm:$0xff] 0.0
      %121 = vst [vmem:[#allocation2 + $0x70] sm:$0xff] 0.0
    $region53: #{tpu_custom_call.1} parent=1 // pred_fallthru
      _
    %v122 = vlaneseq
    %v123 = vshrl.u32 %v122, 7
    %v124 = vadd.s32 %v123, 8
    %v125 = vadd.s32 %v123, 16
    %v126 = vadd.s32 %v123, 24
    %v127 = vadd.s32 %v123, 32
    %v128 = vadd.s32 %v123, 40
    %v129 = vadd.s32 %v123, 48
    %v130 = vadd.s32 %v123, 56
    %v131 = vadd.s32 %v123, 64
    %v132 = vadd.s32 %v123, 72
    %v133 = vadd.s32 %v123, 80
    %v134 = vadd.s32 %v123, 88
    %v135 = vadd.s32 %v123, 96
    %v136 = vadd.s32 %v123, 104
    %v137 = vadd.s32 %v123, 112
    %s138 = smul.u32 0, 120
    %v139 = vstv %s138
    %v140 = vadd.s32 %v123, %v139
    %v141 = vadd.s32 %v124, %v139
    %v142 = vadd.s32 %v125, %v139
    %v143 = vadd.s32 %v126, %v139
    %v144 = vadd.s32 %v127, %v139
    %v145 = vadd.s32 %v128, %v139
    %v146 = vadd.s32 %v129, %v139
    %v147 = vadd.s32 %v130, %v139
    %v148 = vadd.s32 %v131, %v139
    %v149 = vadd.s32 %v132, %v139
    %v150 = vadd.s32 %v133, %v139
    %v151 = vadd.s32 %v134, %v139
    %v152 = vadd.s32 %v135, %v139
    %v153 = vadd.s32 %v136, %v139
    %v154 = vadd.s32 %v137, %v139
    %v155 = vld [vmem:[#allocation3] sm:$0xf]
    %v156 = vlaneseq
    %v157 = vshrl.u32 %v156, 7
    %v158 = vsub.s32 0, %v157
    %v159 = vrot.slane %v155, %v158
    %v160 = vlaneseq
    %v161 = vshrl.u32 %v160, 7
    %v162 = vsub.s32 1, %v161
    %v163 = vrot.slane %v155, %v162
    %v164 = vlaneseq
    %v165 = vshrl.u32 %v164, 7
    %v166 = vsub.s32 2, %v165
    %v167 = vrot.slane %v155, %v166
    %v168 = vlaneseq
    %v169 = vshrl.u32 %v168, 7
    %v170 = vsub.s32 3, %v169
    %v171 = vrot.slane %v155, %v170
    %vm172 = vcmp.eq.s32.totalorder %v140, %v159
    %vm173 = vcmp.eq.s32.totalorder %v140, %v163
    %vm174 = vcmp.eq.s32.totalorder %v140, %v167
    %vm175 = vcmp.eq.s32.totalorder %v140, %v171
    %vm176 = vcmp.eq.s32.totalorder %v141, %v159
    %vm177 = vcmp.eq.s32.totalorder %v141, %v163
    %vm178 = vcmp.eq.s32.totalorder %v141, %v167
    %vm179 = vcmp.eq.s32.totalorder %v141, %v171
    %vm180 = vcmp.eq.s32.totalorder %v142, %v159
    %vm181 = vcmp.eq.s32.totalorder %v142, %v163
    %vm182 = vcmp.eq.s32.totalorder %v142, %v167
    %vm183 = vcmp.eq.s32.totalorder %v142, %v171
    %vm184 = vcmp.eq.s32.totalorder %v143, %v159
    %vm185 = vcmp.eq.s32.totalorder %v143, %v163
    %vm186 = vcmp.eq.s32.totalorder %v143, %v167
    %vm187 = vcmp.eq.s32.totalorder %v143, %v171
    %vm188 = vcmp.eq.s32.totalorder %v144, %v159
    %vm189 = vcmp.eq.s32.totalorder %v144, %v163
    %vm190 = vcmp.eq.s32.totalorder %v144, %v167
    %vm191 = vcmp.eq.s32.totalorder %v144, %v171
    %vm192 = vcmp.eq.s32.totalorder %v145, %v159
    %vm193 = vcmp.eq.s32.totalorder %v145, %v163
    %vm194 = vcmp.eq.s32.totalorder %v145, %v167
    %vm195 = vcmp.eq.s32.totalorder %v145, %v171
    %vm196 = vcmp.eq.s32.totalorder %v146, %v159
    %vm197 = vcmp.eq.s32.totalorder %v146, %v163
    %vm198 = vcmp.eq.s32.totalorder %v146, %v167
    %vm199 = vcmp.eq.s32.totalorder %v146, %v171
    %vm200 = vcmp.eq.s32.totalorder %v147, %v159
    %vm201 = vcmp.eq.s32.totalorder %v147, %v163
    %vm202 = vcmp.eq.s32.totalorder %v147, %v167
    %vm203 = vcmp.eq.s32.totalorder %v147, %v171
    %vm204 = vcmp.eq.s32.totalorder %v148, %v159
    %vm205 = vcmp.eq.s32.totalorder %v148, %v163
    %vm206 = vcmp.eq.s32.totalorder %v148, %v167
    %vm207 = vcmp.eq.s32.totalorder %v148, %v171
    %vm208 = vcmp.eq.s32.totalorder %v149, %v159
    %vm209 = vcmp.eq.s32.totalorder %v149, %v163
    %vm210 = vcmp.eq.s32.totalorder %v149, %v167
    %vm211 = vcmp.eq.s32.totalorder %v149, %v171
    %vm212 = vcmp.eq.s32.totalorder %v150, %v159
    %vm213 = vcmp.eq.s32.totalorder %v150, %v163
    %vm214 = vcmp.eq.s32.totalorder %v150, %v167
    %vm215 = vcmp.eq.s32.totalorder %v150, %v171
    %vm216 = vcmp.eq.s32.totalorder %v151, %v159
    %vm217 = vcmp.eq.s32.totalorder %v151, %v163
    %vm218 = vcmp.eq.s32.totalorder %v151, %v167
    %vm219 = vcmp.eq.s32.totalorder %v151, %v171
    %vm220 = vcmp.eq.s32.totalorder %v152, %v159
    %vm221 = vcmp.eq.s32.totalorder %v152, %v163
    %vm222 = vcmp.eq.s32.totalorder %v152, %v167
    %vm223 = vcmp.eq.s32.totalorder %v152, %v171
    %vm224 = vcmp.eq.s32.totalorder %v153, %v159
    %vm225 = vcmp.eq.s32.totalorder %v153, %v163
    %vm226 = vcmp.eq.s32.totalorder %v153, %v167
    %vm227 = vcmp.eq.s32.totalorder %v153, %v171
    %vm228 = vcmp.eq.s32.totalorder %v154, %v159
    %vm229 = vcmp.eq.s32.totalorder %v154, %v163
    %vm230 = vcmp.eq.s32.totalorder %v154, %v167
    %vm231 = vcmp.eq.s32.totalorder %v154, %v171
    %v232 = vsel %vm172, 1, 0
    %v233 = vsel %vm173, 1, 0
    %v234 = vsel %vm174, 1, 0
    %v235 = vsel %vm175, 1, 0
    %v236 = vsel %vm176, 1, 0
    %v237 = vsel %vm177, 1, 0
    %v238 = vsel %vm178, 1, 0
    %v239 = vsel %vm179, 1, 0
    %v240 = vsel %vm180, 1, 0
    %v241 = vsel %vm181, 1, 0
    %v242 = vsel %vm182, 1, 0
    %v243 = vsel %vm183, 1, 0
    %v244 = vsel %vm184, 1, 0
    %v245 = vsel %vm185, 1, 0
    %v246 = vsel %vm186, 1, 0
    %v247 = vsel %vm187, 1, 0
    %v248 = vsel %vm188, 1, 0
    %v249 = vsel %vm189, 1, 0
    %v250 = vsel %vm190, 1, 0
    %v251 = vsel %vm191, 1, 0
    %v252 = vsel %vm192, 1, 0
    %v253 = vsel %vm193, 1, 0
    %v254 = vsel %vm194, 1, 0
    %v255 = vsel %vm195, 1, 0
    %v256 = vsel %vm196, 1, 0
    %v257 = vsel %vm197, 1, 0
    %v258 = vsel %vm198, 1, 0
    %v259 = vsel %vm199, 1, 0
    %v260 = vsel %vm200, 1, 0
    %v261 = vsel %vm201, 1, 0
    %v262 = vsel %vm202, 1, 0
    %v263 = vsel %vm203, 1, 0
    %v264 = vsel %vm204, 1, 0
    %v265 = vsel %vm205, 1, 0
    %v266 = vsel %vm206, 1, 0
    %v267 = vsel %vm207, 1, 0
    %v268 = vsel %vm208, 1, 0
    %v269 = vsel %vm209, 1, 0
    %v270 = vsel %vm210, 1, 0
    %v271 = vsel %vm211, 1, 0
    %v272 = vsel %vm212, 1, 0
    %v273 = vsel %vm213, 1, 0
    %v274 = vsel %vm214, 1, 0
    %v275 = vsel %vm215, 1, 0
    %v276 = vsel %vm216, 1, 0
    %v277 = vsel %vm217, 1, 0
    %v278 = vsel %vm218, 1, 0
    %v279 = vsel %vm219, 1, 0
    %v280 = vsel %vm220, 1, 0
    %v281 = vsel %vm221, 1, 0
    %v282 = vsel %vm222, 1, 0
    %v283 = vsel %vm223, 1, 0
    %v284 = vsel %vm224, 1, 0
    %v285 = vsel %vm225, 1, 0
    %v286 = vsel %vm226, 1, 0
    %v287 = vsel %vm227, 1, 0
    %v288 = vsel %vm228, 1, 0
    %v289 = vsel %vm229, 1, 0
    %v290 = vsel %vm230, 1, 0
    %v291 = vsel %vm231, 1, 0
    %v292 = vcvt.s32.f32 %v232
    %v293 = vcvt.s32.f32 %v233
    %v294 = vcvt.s32.f32 %v234
    %v295 = vcvt.s32.f32 %v235
    %v296 = vcvt.s32.f32 %v236
    %v297 = vcvt.s32.f32 %v237
    %v298 = vcvt.s32.f32 %v238
    %v299 = vcvt.s32.f32 %v239
    %v300 = vcvt.s32.f32 %v240
    %v301 = vcvt.s32.f32 %v241
    %v302 = vcvt.s32.f32 %v242
    %v303 = vcvt.s32.f32 %v243
    %v304 = vcvt.s32.f32 %v244
    %v305 = vcvt.s32.f32 %v245
    %v306 = vcvt.s32.f32 %v246
    %v307 = vcvt.s32.f32 %v247
    %v308 = vcvt.s32.f32 %v248
    %v309 = vcvt.s32.f32 %v249
    %v310 = vcvt.s32.f32 %v250
    %v311 = vcvt.s32.f32 %v251
    %v312 = vcvt.s32.f32 %v252
    %v313 = vcvt.s32.f32 %v253
    %v314 = vcvt.s32.f32 %v254
    %v315 = vcvt.s32.f32 %v255
    %v316 = vcvt.s32.f32 %v256
    %v317 = vcvt.s32.f32 %v257
    %v318 = vcvt.s32.f32 %v258
    %v319 = vcvt.s32.f32 %v259
    %v320 = vcvt.s32.f32 %v260
    %v321 = vcvt.s32.f32 %v261
    %v322 = vcvt.s32.f32 %v262
    %v323 = vcvt.s32.f32 %v263
    %v324 = vcvt.s32.f32 %v264
    %v325 = vcvt.s32.f32 %v265
    %v326 = vcvt.s32.f32 %v266
    %v327 = vcvt.s32.f32 %v267
    %v328 = vcvt.s32.f32 %v268
    %v329 = vcvt.s32.f32 %v269
    %v330 = vcvt.s32.f32 %v270
    %v331 = vcvt.s32.f32 %v271
    %v332 = vcvt.s32.f32 %v272
    %v333 = vcvt.s32.f32 %v273
    %v334 = vcvt.s32.f32 %v274
    %v335 = vcvt.s32.f32 %v275
    %v336 = vcvt.s32.f32 %v276
    %v337 = vcvt.s32.f32 %v277
    %v338 = vcvt.s32.f32 %v278
    %v339 = vcvt.s32.f32 %v279
    %v340 = vcvt.s32.f32 %v280
    %v341 = vcvt.s32.f32 %v281
    %v342 = vcvt.s32.f32 %v282
    %v343 = vcvt.s32.f32 %v283
    %v344 = vcvt.s32.f32 %v284
    %v345 = vcvt.s32.f32 %v285
    %v346 = vcvt.s32.f32 %v286
    %v347 = vcvt.s32.f32 %v287
    %v348 = vcvt.s32.f32 %v288
    %v349 = vcvt.s32.f32 %v289
    %v350 = vcvt.s32.f32 %v290
    %v351 = vcvt.s32.f32 %v291
    %v352 = vpack.c.bf16 %v296, %v292
    %v353 = vpack.c.bf16 %v297, %v293
    %v354 = vpack.c.bf16 %v298, %v294
    %v355 = vpack.c.bf16 %v299, %v295
    %v356 = vpack.c.bf16 %v304, %v300
    %v357 = vpack.c.bf16 %v305, %v301
    %v358 = vpack.c.bf16 %v306, %v302
    %v359 = vpack.c.bf16 %v307, %v303
    %v360 = vpack.c.bf16 %v312, %v308
    %v361 = vpack.c.bf16 %v313, %v309
    %v362 = vpack.c.bf16 %v314, %v310
    %v363 = vpack.c.bf16 %v315, %v311
    %v364 = vpack.c.bf16 %v320, %v316
    %v365 = vpack.c.bf16 %v321, %v317
    %v366 = vpack.c.bf16 %v322, %v318
    %v367 = vpack.c.bf16 %v323, %v319
    %v368 = vpack.c.bf16 %v328, %v324
    %v369 = vpack.c.bf16 %v329, %v325
    %v370 = vpack.c.bf16 %v330, %v326
    %v371 = vpack.c.bf16 %v331, %v327
    %v372 = vpack.c.bf16 %v336, %v332
    %v373 = vpack.c.bf16 %v337, %v333
    %v374 = vpack.c.bf16 %v338, %v334
    %v375 = vpack.c.bf16 %v339, %v335
    %v376 = vpack.c.bf16 %v344, %v340
    %v377 = vpack.c.bf16 %v345, %v341
    %v378 = vpack.c.bf16 %v346, %v342
    %v379 = vpack.c.bf16 %v347, %v343
    %v380 = vpack.c.bf16 %v348, %v348
    %v381 = vpack.c.bf16 %v349, %v349
    %v382 = vpack.c.bf16 %v350, %v350
    %v383 = vpack.c.bf16 %v351, %v351
    %v384 = vld [vmem:[#allocation2] sm:$0xff]
    %v385 = vld [vmem:[#allocation2 + $0x8] sm:$0xff]
    %v386 = vld [vmem:[#allocation2 + $0x10] sm:$0xff]
    %v387 = vld [vmem:[#allocation2 + $0x18] sm:$0xff]
    %v388 = vld [vmem:[#allocation2 + $0x20] sm:$0xff]
    %v389 = vld [vmem:[#allocation2 + $0x28] sm:$0xff]
    %v390 = vld [vmem:[#allocation2 + $0x30] sm:$0xff]
    %v391 = vld [vmem:[#allocation2 + $0x38] sm:$0xff]
    %v392 = vld [vmem:[#allocation2 + $0x40] sm:$0xff]
    %v393 = vld [vmem:[#allocation2 + $0x48] sm:$0xff]
    %v394 = vld [vmem:[#allocation2 + $0x50] sm:$0xff]
    %v395 = vld [vmem:[#allocation2 + $0x58] sm:$0xff]
    %v396 = vld [vmem:[#allocation2 + $0x60] sm:$0xff]
    %v397 = vld [vmem:[#allocation2 + $0x68] sm:$0xff]
    %v398 = vld [vmem:[#allocation2 + $0x70] sm:$0xff]
    %v399 = vld [vmem:[#allocation6] sm:$0xf]
    %v400 = vld [vmem:[#allocation6 + $0x4] sm:$0xf]
    %v401 = vld [vmem:[#allocation6 + $0x8] sm:$0xf]
    %v402 = vld [vmem:[#allocation6 + $0xc] sm:$0xf]
    %v403 = vld [vmem:[#allocation6 + $0x10] sm:$0xf]
    %v404 = vld [vmem:[#allocation6 + $0x14] sm:$0xf]
    %v405 = vld [vmem:[#allocation6 + $0x18] sm:$0xf]
    %v406 = vld [vmem:[#allocation6 + $0x1c] sm:$0xf]
    %v407 = vld [vmem:[#allocation6 + $0x20] sm:$0xf]
    %v408 = vld [vmem:[#allocation6 + $0x24] sm:$0xf]
    %v409 = vld [vmem:[#allocation6 + $0x28] sm:$0xf]
    %v410 = vld [vmem:[#allocation6 + $0x2c] sm:$0xf]
    %v411 = vld [vmem:[#allocation6 + $0x30] sm:$0xf]
    %v412 = vld [vmem:[#allocation6 + $0x34] sm:$0xf]
    %v413 = vld [vmem:[#allocation6 + $0x38] sm:$0xf]
    %v414 = vld [vmem:[#allocation6 + $0x3c] sm:$0xf]
    %v415 = vld [vmem:[#allocation6 + $0x40] sm:$0xf]
    %v416 = vld [vmem:[#allocation6 + $0x44] sm:$0xf]
    %v417 = vld [vmem:[#allocation6 + $0x48] sm:$0xf]
    %v418 = vld [vmem:[#allocation6 + $0x4c] sm:$0xf]
    %v419 = vld [vmem:[#allocation6 + $0x50] sm:$0xf]
    %v420 = vld [vmem:[#allocation6 + $0x54] sm:$0xf]
    %v421 = vld [vmem:[#allocation6 + $0x58] sm:$0xf]
    %v422 = vld [vmem:[#allocation6 + $0x5c] sm:$0xf]
    %v423 = vld [vmem:[#allocation6 + $0x60] sm:$0xf]
    %v424 = vld [vmem:[#allocation6 + $0x64] sm:$0xf]
    %v425 = vld [vmem:[#allocation6 + $0x68] sm:$0xf]
    %v426 = vld [vmem:[#allocation6 + $0x6c] sm:$0xf]
    %v427 = vld [vmem:[#allocation6 + $0x70] sm:$0xf]
    %v428 = vld [vmem:[#allocation6 + $0x74] sm:$0xf]
    %v429 = vld [vmem:[#allocation6 + $0x78] sm:$0xf]
    %v430 = vld [vmem:[#allocation6 + $0x7c] sm:$0xf]
    %v431 = vld [vmem:[#allocation6 + $0x80] sm:$0xf]
    %v432 = vld [vmem:[#allocation6 + $0x84] sm:$0xf]
    %v433 = vld [vmem:[#allocation6 + $0x88] sm:$0xf]
    %v434 = vld [vmem:[#allocation6 + $0x8c] sm:$0xf]
    %v435 = vld [vmem:[#allocation6 + $0x90] sm:$0xf]
    %v436 = vld [vmem:[#allocation6 + $0x94] sm:$0xf]
    %v437 = vld [vmem:[#allocation6 + $0x98] sm:$0xf]
    %v438 = vld [vmem:[#allocation6 + $0x9c] sm:$0xf]
    %v439 = vld [vmem:[#allocation6 + $0xa0] sm:$0xf]
    %v440 = vld [vmem:[#allocation6 + $0xa4] sm:$0xf]
    %v441 = vld [vmem:[#allocation6 + $0xa8] sm:$0xf]
    %v442 = vld [vmem:[#allocation6 + $0xac] sm:$0xf]
    %v443 = vld [vmem:[#allocation6 + $0xb0] sm:$0xf]
    %v444 = vld [vmem:[#allocation6 + $0xb4] sm:$0xf]
    %v445 = vld [vmem:[#allocation6 + $0xb8] sm:$0xf]
    %v446 = vld [vmem:[#allocation6 + $0xbc] sm:$0xf]
    %v447 = vld [vmem:[#allocation6 + $0xc0] sm:$0xf]
    %v448 = vld [vmem:[#allocation6 + $0xc4] sm:$0xf]
    %v449 = vld [vmem:[#allocation6 + $0xc8] sm:$0xf]
    %v450 = vld [vmem:[#allocation6 + $0xcc] sm:$0xf]
    %v451 = vld [vmem:[#allocation6 + $0xd0] sm:$0xf]
    %v452 = vld [vmem:[#allocation6 + $0xd4] sm:$0xf]
    %v453 = vld [vmem:[#allocation6 + $0xd8] sm:$0xf]
    %v454 = vld [vmem:[#allocation6 + $0xdc] sm:$0xf]
    %v455 = vld [vmem:[#allocation6 + $0xe0] sm:$0xf]
    %v456 = vld [vmem:[#allocation6 + $0xe4] sm:$0xf]
    %v457 = vld [vmem:[#allocation6 + $0xe8] sm:$0xf]
    %v458 = vld [vmem:[#allocation6 + $0xec] sm:$0xf]
    %v459 = vld [vmem:[#allocation6 + $0xf0] sm:$0xf]
    %v460 = vld [vmem:[#allocation6 + $0xf4] sm:$0xf]
    %v461 = vld [vmem:[#allocation6 + $0xf8] sm:$0xf]
    %v462 = vld [vmem:[#allocation6 + $0xfc] sm:$0xf]
    %v527 = vunpack.c.l.b16 %v399
    %v528 = vunpack.c.l.b16 %v400
    %v529 = vunpack.c.l.b16 %v401
    %v530 = vunpack.c.l.b16 %v402
    %v531 = vunpack.c.l.b16 %v403
    %v532 = vunpack.c.l.b16 %v404
    %v533 = vunpack.c.l.b16 %v405
    %v534 = vunpack.c.l.b16 %v406
    %v535 = vunpack.c.l.b16 %v407
    %v536 = vunpack.c.l.b16 %v408
    %v537 = vunpack.c.l.b16 %v409
    %v538 = vunpack.c.l.b16 %v410
    %v539 = vunpack.c.l.b16 %v411
    %v540 = vunpack.c.l.b16 %v412
    %v541 = vunpack.c.l.b16 %v413
    %v542 = vunpack.c.l.b16 %v414
    %v543 = vunpack.c.l.b16 %v415
    %v544 = vunpack.c.l.b16 %v416
    %v545 = vunpack.c.l.b16 %v417
    %v546 = vunpack.c.l.b16 %v418
    %v547 = vunpack.c.l.b16 %v419
    %v548 = vunpack.c.l.b16 %v420
    %v549 = vunpack.c.l.b16 %v421
    %v550 = vunpack.c.l.b16 %v422
    %v551 = vunpack.c.l.b16 %v423
    %v552 = vunpack.c.l.b16 %v424
    %v553 = vunpack.c.l.b16 %v425
    %v554 = vunpack.c.l.b16 %v426
    %v555 = vunpack.c.l.b16 %v427
    %v556 = vunpack.c.l.b16 %v428
    %v557 = vunpack.c.l.b16 %v429
    %v558 = vunpack.c.l.b16 %v430
    %v559 = vunpack.c.l.b16 %v431
    %v560 = vunpack.c.l.b16 %v432
    %v561 = vunpack.c.l.b16 %v433
    %v562 = vunpack.c.l.b16 %v434
    %v563 = vunpack.c.l.b16 %v435
    %v564 = vunpack.c.l.b16 %v436
    %v565 = vunpack.c.l.b16 %v437
    %v566 = vunpack.c.l.b16 %v438
    %v567 = vunpack.c.l.b16 %v439
    %v568 = vunpack.c.l.b16 %v440
    %v569 = vunpack.c.l.b16 %v441
    %v570 = vunpack.c.l.b16 %v442
    %v571 = vunpack.c.l.b16 %v443
    %v572 = vunpack.c.l.b16 %v444
    %v573 = vunpack.c.l.b16 %v445
    %v574 = vunpack.c.l.b16 %v446
    %v575 = vunpack.c.l.b16 %v447
    %v576 = vunpack.c.l.b16 %v448
    %v577 = vunpack.c.l.b16 %v449
    %v578 = vunpack.c.l.b16 %v450
    %v579 = vunpack.c.l.b16 %v451
    %v580 = vunpack.c.l.b16 %v452
    %v581 = vunpack.c.l.b16 %v453
    %v582 = vunpack.c.l.b16 %v454
    %v583 = vunpack.c.l.b16 %v455
    %v584 = vunpack.c.l.b16 %v456
    %v585 = vunpack.c.l.b16 %v457
    %v586 = vunpack.c.l.b16 %v458
    %v587 = vunpack.c.l.b16 %v459
    %v588 = vunpack.c.l.b16 %v460
    %v589 = vunpack.c.l.b16 %v461
    %v590 = vunpack.c.l.b16 %v462
    %v591 = vpack.c.b16 %v528, %v527
    %v592 = vpack.c.b16 %v530, %v529
    %v593 = vpack.c.b16 %v532, %v531
    %v594 = vpack.c.b16 %v534, %v533
    %v595 = vpack.c.b16 %v536, %v535
    %v596 = vpack.c.b16 %v538, %v537
    %v597 = vpack.c.b16 %v540, %v539
    %v598 = vpack.c.b16 %v542, %v541
    %v599 = vpack.c.b16 %v544, %v543
    %v600 = vpack.c.b16 %v546, %v545
    %v601 = vpack.c.b16 %v548, %v547
    %v602 = vpack.c.b16 %v550, %v549
    %v603 = vpack.c.b16 %v552, %v551
    %v604 = vpack.c.b16 %v554, %v553
    %v605 = vpack.c.b16 %v556, %v555
    %v606 = vpack.c.b16 %v558, %v557
    %v607 = vpack.c.b16 %v560, %v559
    %v608 = vpack.c.b16 %v562, %v561
    %v609 = vpack.c.b16 %v564, %v563
    %v610 = vpack.c.b16 %v566, %v565
    %v611 = vpack.c.b16 %v568, %v567
    %v612 = vpack.c.b16 %v570, %v569
    %v613 = vpack.c.b16 %v572, %v571
    %v614 = vpack.c.b16 %v574, %v573
    %v615 = vpack.c.b16 %v576, %v575
    %v616 = vpack.c.b16 %v578, %v577
    %v617 = vpack.c.b16 %v580, %v579
    %v618 = vpack.c.b16 %v582, %v581
    %v619 = vpack.c.b16 %v584, %v583
    %v620 = vpack.c.b16 %v586, %v585
    %v621 = vpack.c.b16 %v588, %v587
    %v622 = vpack.c.b16 %v590, %v589
    %655 = vmatprep.subr.bf16.mxu0 0
    %656 = vmatpush1.bf16.msra.mxu0 %v598
    %657 = vmatprep.subr.bf16.mxu0 0
    %658 = vmatpush1.bf16.msra.mxu0 %v597
    %659 = vmatprep.subr.bf16.mxu0 0
    %660 = vmatpush1.bf16.msra.mxu0 %v596
    %661 = vmatprep.subr.bf16.mxu0 0
    %662 = vmatpush1.bf16.msra.mxu0 %v595
    %663 = vmatprep.subr.bf16.mxu0 0
    %664 = vmatpush1.bf16.msra.mxu0 %v594
    %665 = vmatprep.subr.bf16.mxu0 0
    %666 = vmatpush1.bf16.msra.mxu0 %v593
    %667 = vmatprep.subr.bf16.mxu0 0
    %668 = vmatpush1.bf16.msra.mxu0 %v592
    %669 = vmatprep.subr.bf16.mxu0 0
    %670 = vmatpush1.bf16.msra.mxu0 %v591
    %671 = vmatprep.subr.bf16.mxu0 0
    %672 = vmatpush2.bf16.msra.mxu0 %v606
    %673 = vmatprep.subr.bf16.mxu0 0
    %674 = vmatpush2.bf16.msra.mxu0 %v605
    %675 = vmatprep.subr.bf16.mxu0 0
    %676 = vmatpush2.bf16.msra.mxu0 %v604
    %677 = vmatprep.subr.bf16.mxu0 0
    %678 = vmatpush2.bf16.msra.mxu0 %v603
    %679 = vmatprep.subr.bf16.mxu0 0
    %680 = vmatpush2.bf16.msra.mxu0 %v602
    %681 = vmatprep.subr.bf16.mxu0 0
    %682 = vmatpush2.bf16.msra.mxu0 %v601
    %683 = vmatprep.subr.bf16.mxu0 0
    %684 = vmatpush2.bf16.msra.mxu0 %v600
    %685 = vmatprep.subr.bf16.mxu0 0
    %686 = vmatpush2.bf16.msra.mxu0 %v599
    %687 = vmatprep.mubr.bf16.mxu0 %v353
    %688 = vmatmul.mubr.bf16.gmra.mxu0 %v352
    %v689 = vpop.f32.mrf.mxu0
    %v690 = vadd.f32 0.0, %v689
    %v691 = vpop.f32.mrf.mxu0
    %v692 = vpop.f32.mrf.mxu0
    %v693 = vadd.f32 0.0, %v692
    %v694 = vpop.f32.mrf.mxu0
    %695 = vmatprep.mubr.bf16.mxu0 %v357
    %696 = vmatmul.mubr.bf16.gmra.mxu0 %v356
    %v697 = vpop.f32.mrf.mxu0
    %v698 = vadd.f32 0.0, %v697
    %v699 = vpop.f32.mrf.mxu0
    %v700 = vpop.f32.mrf.mxu0
    %v701 = vadd.f32 0.0, %v700
    %v702 = vpop.f32.mrf.mxu0
    %703 = vmatprep.mubr.bf16.mxu0 %v361
    %704 = vmatmul.mubr.bf16.gmra.mxu0 %v360
    %v705 = vpop.f32.mrf.mxu0
    %v706 = vadd.f32 0.0, %v705
    %v707 = vpop.f32.mrf.mxu0
    %v708 = vpop.f32.mrf.mxu0
    %v709 = vadd.f32 0.0, %v708
    %v710 = vpop.f32.mrf.mxu0
    %711 = vmatprep.mubr.bf16.mxu0 %v365
    %712 = vmatmul.mubr.bf16.gmra.mxu0 %v364
    %v713 = vpop.f32.mrf.mxu0
    %v714 = vadd.f32 0.0, %v713
    %v715 = vpop.f32.mrf.mxu0
    %v716 = vpop.f32.mrf.mxu0
    %v717 = vadd.f32 0.0, %v716
    %v718 = vpop.f32.mrf.mxu0
    %719 = vmatprep.mubr.bf16.mxu0 %v369
    %720 = vmatmul.mubr.bf16.gmra.mxu0 %v368
    %v721 = vpop.f32.mrf.mxu0
    %v722 = vadd.f32 0.0, %v721
    %v723 = vpop.f32.mrf.mxu0
    %v724 = vpop.f32.mrf.mxu0
    %v725 = vadd.f32 0.0, %v724
    %v726 = vpop.f32.mrf.mxu0
    %727 = vmatprep.mubr.bf16.mxu0 %v373
    %728 = vmatmul.mubr.bf16.gmra.mxu0 %v372
    %v729 = vpop.f32.mrf.mxu0
    %v730 = vadd.f32 0.0, %v729
    %v731 = vpop.f32.mrf.mxu0
    %v732 = vpop.f32.mrf.mxu0
    %v733 = vadd.f32 0.0, %v732
    %v734 = vpop.f32.mrf.mxu0
    %735 = vmatprep.mubr.bf16.mxu0 %v377
    %736 = vmatmul.mubr.bf16.gmra.mxu0 %v376
    %v737 = vpop.f32.mrf.mxu0
    %v738 = vadd.f32 0.0, %v737
    %v739 = vpop.f32.mrf.mxu0
    %v740 = vpop.f32.mrf.mxu0
    %v741 = vadd.f32 0.0, %v740
    %v742 = vpop.f32.mrf.mxu0
    %743 = vmatprep.mubr.bf16.mxu0 %v381
    %744 = vmatmul.mubr.bf16.gmra.mxu0 %v380
    %v745 = vpop.f32.mrf.mxu0
    %v746 = vadd.f32 0.0, %v745
    %v747 = vpop.f32.mrf.mxu0
    %v748 = vpop.f32.mrf.mxu0
    %v749 = vpop.f32.mrf.mxu0
    %750 = vdwg.mxu0
    %751 = vmatprep.subr.bf16.mxu0 0
    %752 = vmatpush1.bf16.msra.mxu0 %v614
    %753 = vmatprep.subr.bf16.mxu0 0
    %754 = vmatpush1.bf16.msra.mxu0 %v613
    %755 = vmatprep.subr.bf16.mxu0 0
    %756 = vmatpush1.bf16.msra.mxu0 %v612
    %757 = vmatprep.subr.bf16.mxu0 0
    %758 = vmatpush1.bf16.msra.mxu0 %v611
    %759 = vmatprep.subr.bf16.mxu0 0
    %760 = vmatpush1.bf16.msra.mxu0 %v610
    %761 = vmatprep.subr.bf16.mxu0 0
    %762 = vmatpush1.bf16.msra.mxu0 %v609
    %763 = vmatprep.subr.bf16.mxu0 0
    %764 = vmatpush1.bf16.msra.mxu0 %v608
    %765 = vmatprep.subr.bf16.mxu0 0
    %766 = vmatpush1.bf16.msra.mxu0 %v607
    %767 = vmatprep.subr.bf16.mxu0 0
    %768 = vmatpush2.bf16.msra.mxu0 %v622
    %769 = vmatprep.subr.bf16.mxu0 0
    %770 = vmatpush2.bf16.msra.mxu0 %v621
    %771 = vmatprep.subr.bf16.mxu0 0
    %772 = vmatpush2.bf16.msra.mxu0 %v620
    %773 = vmatprep.subr.bf16.mxu0 0
    %774 = vmatpush2.bf16.msra.mxu0 %v619
    %775 = vmatprep.subr.bf16.mxu0 0
    %776 = vmatpush2.bf16.msra.mxu0 %v618
    %777 = vmatprep.subr.bf16.mxu0 0
    %778 = vmatpush2.bf16.msra.mxu0 %v617
    %779 = vmatprep.subr.bf16.mxu0 0
    %780 = vmatpush2.bf16.msra.mxu0 %v616
    %781 = vmatprep.subr.bf16.mxu0 0
    %782 = vmatpush2.bf16.msra.mxu0 %v615
    %783 = vmatprep.mubr.bf16.mxu0 %v355
    %784 = vmatmul.mubr.bf16.gmra.mxu0 %v354
    %v785 = vpop.f32.mrf.mxu0
    %v786 = vadd.f32 %v690, %v785
    %v787 = vpop.f32.mrf.mxu0
    %v788 = vpop.f32.mrf.mxu0
    %v789 = vadd.f32 %v693, %v788
    %v790 = vpop.f32.mrf.mxu0
    %791 = vmatprep.mubr.bf16.mxu0 %v359
    %792 = vmatmul.mubr.bf16.gmra.mxu0 %v358
    %v793 = vpop.f32.mrf.mxu0
    %v794 = vadd.f32 %v698, %v793
    %v795 = vpop.f32.mrf.mxu0
    %v796 = vpop.f32.mrf.mxu0
    %v797 = vadd.f32 %v701, %v796
    %v798 = vpop.f32.mrf.mxu0
    %799 = vmatprep.mubr.bf16.mxu0 %v363
    %800 = vmatmul.mubr.bf16.gmra.mxu0 %v362
    %v801 = vpop.f32.mrf.mxu0
    %v802 = vadd.f32 %v706, %v801
    %v803 = vpop.f32.mrf.mxu0
    %v804 = vpop.f32.mrf.mxu0
    %v805 = vadd.f32 %v709, %v804
    %v806 = vpop.f32.mrf.mxu0
    %807 = vmatprep.mubr.bf16.mxu0 %v367
    %808 = vmatmul.mubr.bf16.gmra.mxu0 %v366
    %v809 = vpop.f32.mrf.mxu0
    %v810 = vadd.f32 %v714, %v809
    %v811 = vpop.f32.mrf.mxu0
    %v812 = vpop.f32.mrf.mxu0
    %v813 = vadd.f32 %v717, %v812
    %v814 = vpop.f32.mrf.mxu0
    %815 = vmatprep.mubr.bf16.mxu0 %v371
    %816 = vmatmul.mubr.bf16.gmra.mxu0 %v370
    %v817 = vpop.f32.mrf.mxu0
    %v818 = vadd.f32 %v722, %v817
    %v819 = vpop.f32.mrf.mxu0
    %v820 = vpop.f32.mrf.mxu0
    %v821 = vadd.f32 %v725, %v820
    %v822 = vpop.f32.mrf.mxu0
    %823 = vmatprep.mubr.bf16.mxu0 %v375
    %824 = vmatmul.mubr.bf16.gmra.mxu0 %v374
    %v825 = vpop.f32.mrf.mxu0
    %v826 = vadd.f32 %v730, %v825
    %v827 = vpop.f32.mrf.mxu0
    %v828 = vpop.f32.mrf.mxu0
    %v829 = vadd.f32 %v733, %v828
    %v830 = vpop.f32.mrf.mxu0
    %831 = vmatprep.mubr.bf16.mxu0 %v379
    %832 = vmatmul.mubr.bf16.gmra.mxu0 %v378
    %v833 = vpop.f32.mrf.mxu0
    %v834 = vadd.f32 %v738, %v833
    %v835 = vpop.f32.mrf.mxu0
    %v836 = vpop.f32.mrf.mxu0
    %v837 = vadd.f32 %v741, %v836
    %v838 = vpop.f32.mrf.mxu0
    %839 = vmatprep.mubr.bf16.mxu0 %v383
    %840 = vmatmul.mubr.bf16.gmra.mxu0 %v382
    %v841 = vpop.f32.mrf.mxu0
    %v842 = vadd.f32 %v746, %v841
    %v843 = vpop.f32.mrf.mxu0
    %v844 = vpop.f32.mrf.mxu0
    %v845 = vpop.f32.mrf.mxu0
    %846 = vdwg.mxu0
    %v847 = vadd.f32 %v384, %v786
    %v848 = vadd.f32 %v385, %v789
    %v849 = vadd.f32 %v386, %v794
    %v850 = vadd.f32 %v387, %v797
    %v851 = vadd.f32 %v388, %v802
    %v852 = vadd.f32 %v389, %v805
    %v853 = vadd.f32 %v390, %v810
    %v854 = vadd.f32 %v391, %v813
    %v855 = vadd.f32 %v392, %v818
    %v856 = vadd.f32 %v393, %v821
    %v857 = vadd.f32 %v394, %v826
    %v858 = vadd.f32 %v395, %v829
    %v859 = vadd.f32 %v396, %v834
    %v860 = vadd.f32 %v397, %v837
    %v861 = vadd.f32 %v398, %v842
    %862 = vst [vmem:[#allocation2] sm:$0xff] %v847
    %863 = vst [vmem:[#allocation2 + $0x8] sm:$0xff] %v848
    %864 = vst [vmem:[#allocation2 + $0x10] sm:$0xff] %v849
    %865 = vst [vmem:[#allocation2 + $0x18] sm:$0xff] %v850
    %866 = vst [vmem:[#allocation2 + $0x20] sm:$0xff] %v851
    %867 = vst [vmem:[#allocation2 + $0x28] sm:$0xff] %v852
    %868 = vst [vmem:[#allocation2 + $0x30] sm:$0xff] %v853
    %869 = vst [vmem:[#allocation2 + $0x38] sm:$0xff] %v854
    %870 = vst [vmem:[#allocation2 + $0x40] sm:$0xff] %v855
    %871 = vst [vmem:[#allocation2 + $0x48] sm:$0xff] %v856
    %872 = vst [vmem:[#allocation2 + $0x50] sm:$0xff] %v857
    %873 = vst [vmem:[#allocation2 + $0x58] sm:$0xff] %v858
    %874 = vst [vmem:[#allocation2 + $0x60] sm:$0xff] %v859
    %875 = vst [vmem:[#allocation2 + $0x68] sm:$0xff] %v860
    %876 = vst [vmem:[#allocation2 + $0x70] sm:$0xff] %v861
    // Predicated region
    $region54: #{tpu_custom_call.1} parent=1 // pred_check
      %p877 = pneg %p103
    $region55: #{tpu_custom_call.1} parent=1 // pred_check_branch
      %879 = sbr.rel (%p877) target = $region57
    $region56: #{tpu_custom_call.1} parent=1 // pred_region
      %v880 = vld [vmem:[#allocation2] sm:$0xff]
      %v881 = vld [vmem:[#allocation2 + $0x8] sm:$0xff]
      %v882 = vld [vmem:[#allocation2 + $0x10] sm:$0xff]
      %v883 = vld [vmem:[#allocation2 + $0x18] sm:$0xff]
      %v884 = vld [vmem:[#allocation2 + $0x20] sm:$0xff]
      %v885 = vld [vmem:[#allocation2 + $0x28] sm:$0xff]
      %v886 = vld [vmem:[#allocation2 + $0x30] sm:$0xff]
      %v887 = vld [vmem:[#allocation2 + $0x38] sm:$0xff]
      %v888 = vld [vmem:[#allocation2 + $0x40] sm:$0xff]
      %v889 = vld [vmem:[#allocation2 + $0x48] sm:$0xff]
      %v890 = vld [vmem:[#allocation2 + $0x50] sm:$0xff]
      %v891 = vld [vmem:[#allocation2 + $0x58] sm:$0xff]
      %v892 = vld [vmem:[#allocation2 + $0x60] sm:$0xff]
      %v893 = vld [vmem:[#allocation2 + $0x68] sm:$0xff]
      %v894 = vld [vmem:[#allocation2 + $0x70] sm:$0xff]
      %v895 = vpack.c.bf16 %v881, %v880
      %v896 = vpack.c.bf16 %v883, %v882
      %v897 = vpack.c.bf16 %v885, %v884
      %v898 = vpack.c.bf16 %v887, %v886
      %v899 = vpack.c.bf16 %v889, %v888
      %v900 = vpack.c.bf16 %v891, %v890
      %v901 = vpack.c.bf16 %v893, %v892
      %v902 = vpack.c.bf16 %v894, %v894
      %v903 = vld [vmem:[#allocation8] sm:$0xf]
      %v904 = vld [vmem:[#allocation8 + $0x4] sm:$0xf]
      %v905 = vld [vmem:[#allocation8 + $0x8] sm:$0xf]
      %v906 = vld [vmem:[#allocation8 + $0xc] sm:$0xf]
      %v907 = vld [vmem:[#allocation8 + $0x10] sm:$0xf]
      %v908 = vld [vmem:[#allocation8 + $0x14] sm:$0xf]
      %v909 = vld [vmem:[#allocation8 + $0x18] sm:$0xf]
      %v910 = vld [vmem:[#allocation8 + $0x1c] sm:$0xf]
      %v911 = vld [vmem:[#allocation8 + $0x20] sm:$0xf]
      %v912 = vld [vmem:[#allocation8 + $0x24] sm:$0xf]
      %v913 = vld [vmem:[#allocation8 + $0x28] sm:$0xf]
      %v914 = vld [vmem:[#allocation8 + $0x2c] sm:$0xf]
      %v915 = vld [vmem:[#allocation8 + $0x30] sm:$0xf]
      %v916 = vld [vmem:[#allocation8 + $0x34] sm:$0xf]
      %v917 = vld [vmem:[#allocation8 + $0x38] sm:$0xf]
      %v918 = vld [vmem:[#allocation8 + $0x3c] sm:$0xf]
      %v935 = vunpack.c.l.b16 %v903
      %v936 = vunpack.c.l.b16 %v904
      %v937 = vunpack.c.l.b16 %v905
      %v938 = vunpack.c.l.b16 %v906
      %v939 = vunpack.c.l.b16 %v907
      %v940 = vunpack.c.l.b16 %v908
      %v941 = vunpack.c.l.b16 %v909
      %v942 = vunpack.c.l.b16 %v910
      %v943 = vunpack.c.l.b16 %v911
      %v944 = vunpack.c.l.b16 %v912
      %v945 = vunpack.c.l.b16 %v913
      %v946 = vunpack.c.l.b16 %v914
      %v947 = vunpack.c.l.b16 %v915
      %v948 = vunpack.c.l.b16 %v916
      %v949 = vunpack.c.l.b16 %v917
      %v950 = vunpack.c.l.b16 %v918
      %v951 = vpack.c.b16 %v936, %v935
      %v952 = vpack.c.b16 %v938, %v937
      %v953 = vpack.c.b16 %v940, %v939
      %v954 = vpack.c.b16 %v942, %v941
      %v955 = vpack.c.b16 %v944, %v943
      %v956 = vpack.c.b16 %v946, %v945
      %v957 = vpack.c.b16 %v948, %v947
      %v958 = vpack.c.b16 %v950, %v949
      %967 = vmatprep.subr.bf16.mxu0 0
      %968 = vmatpush1.bf16.msra.mxu0 %v958
      %969 = vmatprep.subr.bf16.mxu0 0
      %970 = vmatpush1.bf16.msra.mxu0 %v957
      %971 = vmatprep.subr.bf16.mxu0 0
      %972 = vmatpush1.bf16.msra.mxu0 %v956
      %973 = vmatprep.subr.bf16.mxu0 0
      %974 = vmatpush1.bf16.msra.mxu0 %v955
      %975 = vmatprep.subr.bf16.mxu0 0
      %976 = vmatpush1.bf16.msra.mxu0 %v954
      %977 = vmatprep.subr.bf16.mxu0 0
      %978 = vmatpush1.bf16.msra.mxu0 %v953
      %979 = vmatprep.subr.bf16.mxu0 0
      %980 = vmatpush1.bf16.msra.mxu0 %v952
      %981 = vmatprep.subr.bf16.mxu0 0
      %982 = vmatpush1.bf16.msra.mxu0 %v951
      %983 = vmatprep.subr.bf16.mxu0 0
      %984 = vmatpush2.bf16.msra.mxu0 0
      %985 = vmatprep.subr.bf16.mxu0 0
      %986 = vmatpush2.bf16.msra.mxu0 0
      %987 = vmatprep.subr.bf16.mxu0 0
      %988 = vmatpush2.bf16.msra.mxu0 0
      %989 = vmatprep.subr.bf16.mxu0 0
      %990 = vmatpush2.bf16.msra.mxu0 0
      %991 = vmatprep.subr.bf16.mxu0 0
      %992 = vmatpush2.bf16.msra.mxu0 0
      %993 = vmatprep.subr.bf16.mxu0 0
      %994 = vmatpush2.bf16.msra.mxu0 0
      %995 = vmatprep.subr.bf16.mxu0 0
      %996 = vmatpush2.bf16.msra.mxu0 0
      %997 = vmatprep.subr.bf16.mxu0 0
      %998 = vmatpush2.bf16.msra.mxu0 0
      %999 = vmatprep.mubr.bf16.mxu0 0
      %1000 = vmatmul.mubr.bf16.gmra.mxu0 %v895
      %v1001 = vpop.f32.mrf.mxu0
      %v1002 = vadd.f32 0.0, %v1001
      %v1003 = vpop.f32.mrf.mxu0
      %v1004 = vpop.f32.mrf.mxu0
      %v1005 = vadd.f32 0.0, %v1004
      %v1006 = vpop.f32.mrf.mxu0
      %1007 = vmatprep.mubr.bf16.mxu0 0
      %1008 = vmatmul.mubr.bf16.gmra.mxu0 %v896
      %v1009 = vpop.f32.mrf.mxu0
      %v1010 = vadd.f32 0.0, %v1009
      %v1011 = vpop.f32.mrf.mxu0
      %v1012 = vpop.f32.mrf.mxu0
      %v1013 = vadd.f32 0.0, %v1012
      %v1014 = vpop.f32.mrf.mxu0
      %1015 = vmatprep.mubr.bf16.mxu0 0
      %1016 = vmatmul.mubr.bf16.gmra.mxu0 %v897
      %v1017 = vpop.f32.mrf.mxu0
      %v1018 = vadd.f32 0.0, %v1017
      %v1019 = vpop.f32.mrf.mxu0
      %v1020 = vpop.f32.mrf.mxu0
      %v1021 = vadd.f32 0.0, %v1020
      %v1022 = vpop.f32.mrf.mxu0
      %1023 = vmatprep.mubr.bf16.mxu0 0
      %1024 = vmatmul.mubr.bf16.gmra.mxu0 %v898
      %v1025 = vpop.f32.mrf.mxu0
      %v1026 = vadd.f32 0.0, %v1025
      %v1027 = vpop.f32.mrf.mxu0
      %v1028 = vpop.f32.mrf.mxu0
      %v1029 = vadd.f32 0.0, %v1028
      %v1030 = vpop.f32.mrf.mxu0
      %1031 = vmatprep.mubr.bf16.mxu0 0
      %1032 = vmatmul.mubr.bf16.gmra.mxu0 %v899
      %v1033 = vpop.f32.mrf.mxu0
      %v1034 = vadd.f32 0.0, %v1033
      %v1035 = vpop.f32.mrf.mxu0
      %v1036 = vpop.f32.mrf.mxu0
      %v1037 = vadd.f32 0.0, %v1036
      %v1038 = vpop.f32.mrf.mxu0
      %1039 = vmatprep.mubr.bf16.mxu0 0
      %1040 = vmatmul.mubr.bf16.gmra.mxu0 %v900
      %v1041 = vpop.f32.mrf.mxu0
      %v1042 = vadd.f32 0.0, %v1041
      %v1043 = vpop.f32.mrf.mxu0
      %v1044 = vpop.f32.mrf.mxu0
      %v1045 = vadd.f32 0.0, %v1044
      %v1046 = vpop.f32.mrf.mxu0
      %1047 = vmatprep.mubr.bf16.mxu0 0
      %1048 = vmatmul.mubr.bf16.gmra.mxu0 %v901
      %v1049 = vpop.f32.mrf.mxu0
      %v1050 = vadd.f32 0.0, %v1049
      %v1051 = vpop.f32.mrf.mxu0
      %v1052 = vpop.f32.mrf.mxu0
      %v1053 = vadd.f32 0.0, %v1052
      %v1054 = vpop.f32.mrf.mxu0
      %1055 = vmatprep.mubr.bf16.mxu0 0
      %1056 = vmatmul.mubr.bf16.gmra.mxu0 %v902
      %v1057 = vpop.f32.mrf.mxu0
      %v1058 = vadd.f32 0.0, %v1057
      %v1059 = vpop.f32.mrf.mxu0
      %v1060 = vpop.f32.mrf.mxu0
      %v1061 = vpop.f32.mrf.mxu0
      %1062 = vdwg.mxu0
      %v1063 = vpack.c.bf16 %v1005, %v1002
      %v1064 = vpack.c.bf16 %v1013, %v1010
      %v1065 = vpack.c.bf16 %v1021, %v1018
      %v1066 = vpack.c.bf16 %v1029, %v1026
      %v1067 = vpack.c.bf16 %v1037, %v1034
      %v1068 = vpack.c.bf16 %v1045, %v1042
      %v1069 = vpack.c.bf16 %v1053, %v1050
      %v1070 = vpack.c.bf16 %v1058, %v1058
      %v1071 = vld [vmem:[#allocation9] sm:$0xf]
      %v1072 = vld [vmem:[#allocation9 + $0x4] sm:$0xf]
      %v1073 = vld [vmem:[#allocation9 + $0x8] sm:$0xf]
      %v1074 = vld [vmem:[#allocation9 + $0xc] sm:$0xf]
      %v1075 = vld [vmem:[#allocation9 + $0x10] sm:$0xf]
      %v1076 = vld [vmem:[#allocation9 + $0x14] sm:$0xf]
      %v1077 = vld [vmem:[#allocation9 + $0x18] sm:$0xf]
      %v1078 = vld [vmem:[#allocation9 + $0x1c] sm:$0xf]
      %v1079 = vld [vmem:[#allocation9 + $0x20] sm:$0xf]
      %v1080 = vld [vmem:[#allocation9 + $0x24] sm:$0xf]
      %v1081 = vld [vmem:[#allocation9 + $0x28] sm:$0xf]
      %v1082 = vld [vmem:[#allocation9 + $0x2c] sm:$0xf]
      %v1083 = vld [vmem:[#allocation9 + $0x30] sm:$0xf]
      %v1084 = vld [vmem:[#allocation9 + $0x34] sm:$0xf]
      %v1085 = vld [vmem:[#allocation9 + $0x38] sm:$0xf]
      %v1086 = vld [vmem:[#allocation9 + $0x3c] sm:$0xf]
      %v1087 = vld [vmem:[#allocation11] sm:$0x1]
      %v1088 = vlaneseq
      %v1089 = vshrl.u32 %v1088, 7
      %v1090 = vsub.s32 0, %v1089
      %v1091 = vrot.slane %v1087, %v1090
      %v1108 = vunpack.c.l.b16 %v1071
      %v1109 = vunpack.c.l.b16 %v1072
      %v1110 = vunpack.c.l.b16 %v1073
      %v1111 = vunpack.c.l.b16 %v1074
      %v1112 = vunpack.c.l.b16 %v1075
      %v1113 = vunpack.c.l.b16 %v1076
      %v1114 = vunpack.c.l.b16 %v1077
      %v1115 = vunpack.c.l.b16 %v1078
      %v1116 = vunpack.c.l.b16 %v1079
      %v1117 = vunpack.c.l.b16 %v1080
      %v1118 = vunpack.c.l.b16 %v1081
      %v1119 = vunpack.c.l.b16 %v1082
      %v1120 = vunpack.c.l.b16 %v1083
      %v1121 = vunpack.c.l.b16 %v1084
      %v1122 = vunpack.c.l.b16 %v1085
      %v1123 = vunpack.c.l.b16 %v1086
      %v1124 = vpack.c.b16 %v1109, %v1108
      %v1125 = vpack.c.b16 %v1111, %v1110
      %v1126 = vpack.c.b16 %v1113, %v1112
      %v1127 = vpack.c.b16 %v1115, %v1114
      %v1128 = vpack.c.b16 %v1117, %v1116
      %v1129 = vpack.c.b16 %v1119, %v1118
      %v1130 = vpack.c.b16 %v1121, %v1120
      %v1131 = vpack.c.b16 %v1123, %v1122
      %1140 = vmatprep.subr.bf16.mxu0 0
      %1141 = vmatpush1.bf16.msra.mxu0 %v1131
      %1142 = vmatprep.subr.bf16.mxu0 0
      %1143 = vmatpush1.bf16.msra.mxu0 %v1130
      %1144 = vmatprep.subr.bf16.mxu0 0
      %1145 = vmatpush1.bf16.msra.mxu0 %v1129
      %1146 = vmatprep.subr.bf16.mxu0 0
      %1147 = vmatpush1.bf16.msra.mxu0 %v1128
      %1148 = vmatprep.subr.bf16.mxu0 0
      %1149 = vmatpush1.bf16.msra.mxu0 %v1127
      %1150 = vmatprep.subr.bf16.mxu0 0
      %1151 = vmatpush1.bf16.msra.mxu0 %v1126
      %1152 = vmatprep.subr.bf16.mxu0 0
      %1153 = vmatpush1.bf16.msra.mxu0 %v1125
      %1154 = vmatprep.subr.bf16.mxu0 0
      %1155 = vmatpush1.bf16.msra.mxu0 %v1124
      %1156 = vmatprep.subr.bf16.mxu0 0
      %1157 = vmatpush2.bf16.msra.mxu0 0
      %1158 = vmatprep.subr.bf16.mxu0 0
      %1159 = vmatpush2.bf16.msra.mxu0 0
      %1160 = vmatprep.subr.bf16.mxu0 0
      %1161 = vmatpush2.bf16.msra.mxu0 0
      %1162 = vmatprep.subr.bf16.mxu0 0
      %1163 = vmatpush2.bf16.msra.mxu0 0
      %1164 = vmatprep.subr.bf16.mxu0 0
      %1165 = vmatpush2.bf16.msra.mxu0 0
      %1166 = vmatprep.subr.bf16.mxu0 0
      %1167 = vmatpush2.bf16.msra.mxu0 0
      %1168 = vmatprep.subr.bf16.mxu0 0
      %1169 = vmatpush2.bf16.msra.mxu0 0
      %1170 = vmatprep.subr.bf16.mxu0 0
      %1171 = vmatpush2.bf16.msra.mxu0 0
      %1172 = vmatprep.mubr.bf16.mxu0 0
      %1173 = vmatmul.mubr.bf16.gmra.mxu0 %v1063
      %v1174 = vpop.f32.mrf.mxu0
      %v1175 = vadd.f32 %v1091, %v1174
      %v1176 = vpop.f32.mrf.mxu0
      %v1177 = vpop.f32.mrf.mxu0
      %v1178 = vadd.f32 %v1091, %v1177
      %v1179 = vpop.f32.mrf.mxu0
      %1180 = vmatprep.mubr.bf16.mxu0 0
      %1181 = vmatmul.mubr.bf16.gmra.mxu0 %v1064
      %v1182 = vpop.f32.mrf.mxu0
      %v1183 = vadd.f32 %v1091, %v1182
      %v1184 = vpop.f32.mrf.mxu0
      %v1185 = vpop.f32.mrf.mxu0
      %v1186 = vadd.f32 %v1091, %v1185
      %v1187 = vpop.f32.mrf.mxu0
      %1188 = vmatprep.mubr.bf16.mxu0 0
      %1189 = vmatmul.mubr.bf16.gmra.mxu0 %v1065
      %v1190 = vpop.f32.mrf.mxu0
      %v1191 = vadd.f32 %v1091, %v1190
      %v1192 = vpop.f32.mrf.mxu0
      %v1193 = vpop.f32.mrf.mxu0
      %v1194 = vadd.f32 %v1091, %v1193
      %v1195 = vpop.f32.mrf.mxu0
      %1196 = vmatprep.mubr.bf16.mxu0 0
      %1197 = vmatmul.mubr.bf16.gmra.mxu0 %v1066
      %v1198 = vpop.f32.mrf.mxu0
      %v1199 = vadd.f32 %v1091, %v1198
      %v1200 = vpop.f32.mrf.mxu0
      %v1201 = vpop.f32.mrf.mxu0
      %v1202 = vadd.f32 %v1091, %v1201
      %v1203 = vpop.f32.mrf.mxu0
      %1204 = vmatprep.mubr.bf16.mxu0 0
      %1205 = vmatmul.mubr.bf16.gmra.mxu0 %v1067
      %v1206 = vpop.f32.mrf.mxu0
      %v1207 = vadd.f32 %v1091, %v1206
      %v1208 = vpop.f32.mrf.mxu0
      %v1209 = vpop.f32.mrf.mxu0
      %v1210 = vadd.f32 %v1091, %v1209
      %v1211 = vpop.f32.mrf.mxu0
      %1212 = vmatprep.mubr.bf16.mxu0 0
      %1213 = vmatmul.mubr.bf16.gmra.mxu0 %v1068
      %v1214 = vpop.f32.mrf.mxu0
      %v1215 = vadd.f32 %v1091, %v1214
      %v1216 = vpop.f32.mrf.mxu0
      %v1217 = vpop.f32.mrf.mxu0
      %v1218 = vadd.f32 %v1091, %v1217
      %v1219 = vpop.f32.mrf.mxu0
      %1220 = vmatprep.mubr.bf16.mxu0 0
      %1221 = vmatmul.mubr.bf16.gmra.mxu0 %v1069
      %v1222 = vpop.f32.mrf.mxu0
      %v1223 = vadd.f32 %v1091, %v1222
      %v1224 = vpop.f32.mrf.mxu0
      %v1225 = vpop.f32.mrf.mxu0
      %v1226 = vadd.f32 %v1091, %v1225
      %v1227 = vpop.f32.mrf.mxu0
      %1228 = vmatprep.mubr.bf16.mxu0 0
      %1229 = vmatmul.mubr.bf16.gmra.mxu0 %v1070
      %v1230 = vpop.f32.mrf.mxu0
      %v1231 = vadd.f32 %v1091, %v1230
      %v1232 = vpop.f32.mrf.mxu0
      %v1233 = vpop.f32.mrf.mxu0
      %v1234 = vpop.f32.mrf.mxu0
      %1235 = vdwg.mxu0
      %v1236 = vxor.u32 %v1175, 2147483648
      %v1237 = vxor.u32 %v1178, 2147483648
      %v1238 = vxor.u32 %v1183, 2147483648
      %v1239 = vxor.u32 %v1186, 2147483648
      %v1240 = vxor.u32 %v1191, 2147483648
      %v1241 = vxor.u32 %v1194, 2147483648
      %v1242 = vxor.u32 %v1199, 2147483648
      %v1243 = vxor.u32 %v1202, 2147483648
      %v1244 = vxor.u32 %v1207, 2147483648
      %v1245 = vxor.u32 %v1210, 2147483648
      %v1246 = vxor.u32 %v1215, 2147483648
      %v1247 = vxor.u32 %v1218, 2147483648
      %v1248 = vxor.u32 %v1223, 2147483648
      %v1249 = vxor.u32 %v1226, 2147483648
      %v1250 = vxor.u32 %v1231, 2147483648
      %v1251 = vmul.f32 %v1236, 1.442695
      %v1252 = vpow.pop %v1251
      %v1253 = vmul.f32 %v1237, 1.442695
      %v1254 = vpow.pop %v1253
      %v1255 = vmul.f32 %v1238, 1.442695
      %v1256 = vpow.pop %v1255
      %v1257 = vmul.f32 %v1239, 1.442695
      %v1258 = vpow.pop %v1257
      %v1259 = vmul.f32 %v1240, 1.442695
      %v1260 = vpow.pop %v1259
      %v1261 = vmul.f32 %v1241, 1.442695
      %v1262 = vpow.pop %v1261
      %v1263 = vmul.f32 %v1242, 1.442695
      %v1264 = vpow.pop %v1263
      %v1265 = vmul.f32 %v1243, 1.442695
      %v1266 = vpow.pop %v1265
      %v1267 = vmul.f32 %v1244, 1.442695
      %v1268 = vpow.pop %v1267
      %v1269 = vmul.f32 %v1245, 1.442695
      %v1270 = vpow.pop %v1269
      %v1271 = vmul.f32 %v1246, 1.442695
      %v1272 = vpow.pop %v1271
      %v1273 = vmul.f32 %v1247, 1.442695
      %v1274 = vpow.pop %v1273
      %v1275 = vmul.f32 %v1248, 1.442695
      %v1276 = vpow.pop %v1275
      %v1277 = vmul.f32 %v1249, 1.442695
      %v1278 = vpow.pop %v1277
      %v1279 = vmul.f32 %v1250, 1.442695
      %v1280 = vpow.pop %v1279
      %v1281 = vadd.f32 %v1252, 1.0
      %v1282 = vadd.f32 %v1254, 1.0
      %v1283 = vadd.f32 %v1256, 1.0
      %v1284 = vadd.f32 %v1258, 1.0
      %v1285 = vadd.f32 %v1260, 1.0
      %v1286 = vadd.f32 %v1262, 1.0
      %v1287 = vadd.f32 %v1264, 1.0
      %v1288 = vadd.f32 %v1266, 1.0
      %v1289 = vadd.f32 %v1268, 1.0
      %v1290 = vadd.f32 %v1270, 1.0
      %v1291 = vadd.f32 %v1272, 1.0
      %v1292 = vadd.f32 %v1274, 1.0
      %v1293 = vadd.f32 %v1276, 1.0
      %v1294 = vadd.f32 %v1278, 1.0
      %v1295 = vadd.f32 %v1280, 1.0
      %v1296 = vrcp.pop %v1281
      %v1297 = vmul.f32 1.0, %v1296
      %v1298 = vrcp.pop %v1282
      %v1299 = vmul.f32 1.0, %v1298
      %v1300 = vrcp.pop %v1283
      %v1301 = vmul.f32 1.0, %v1300
      %v1302 = vrcp.pop %v1284
      %v1303 = vmul.f32 1.0, %v1302
      %v1304 = vrcp.pop %v1285
      %v1305 = vmul.f32 1.0, %v1304
      %v1306 = vrcp.pop %v1286
      %v1307 = vmul.f32 1.0, %v1306
      %v1308 = vrcp.pop %v1287
      %v1309 = vmul.f32 1.0, %v1308
      %v1310 = vrcp.pop %v1288
      %v1311 = vmul.f32 1.0, %v1310
      %v1312 = vrcp.pop %v1289
      %v1313 = vmul.f32 1.0, %v1312
      %v1314 = vrcp.pop %v1290
      %v1315 = vmul.f32 1.0, %v1314
      %v1316 = vrcp.pop %v1291
      %v1317 = vmul.f32 1.0, %v1316
      %v1318 = vrcp.pop %v1292
      %v1319 = vmul.f32 1.0, %v1318
      %v1320 = vrcp.pop %v1293
      %v1321 = vmul.f32 1.0, %v1320
      %v1322 = vrcp.pop %v1294
      %v1323 = vmul.f32 1.0, %v1322
      %v1324 = vrcp.pop %v1295
      %v1325 = vmul.f32 1.0, %v1324
      %v1326 = vmul.f32 %v1175, %v1297
      %v1327 = vmul.f32 %v1178, %v1299
      %v1328 = vmul.f32 %v1183, %v1301
      %v1329 = vmul.f32 %v1186, %v1303
      %v1330 = vmul.f32 %v1191, %v1305
      %v1331 = vmul.f32 %v1194, %v1307
      %v1332 = vmul.f32 %v1199, %v1309
      %v1333 = vmul.f32 %v1202, %v1311
      %v1334 = vmul.f32 %v1207, %v1313
      %v1335 = vmul.f32 %v1210, %v1315
      %v1336 = vmul.f32 %v1215, %v1317
      %v1337 = vmul.f32 %v1218, %v1319
      %v1338 = vmul.f32 %v1223, %v1321
      %v1339 = vmul.f32 %v1226, %v1323
      %v1340 = vmul.f32 %v1231, %v1325
      %v1341 = vpack.c.bf16 %v1327, %v1326
      %v1342 = vpack.c.bf16 %v1329, %v1328
      %v1343 = vpack.c.bf16 %v1331, %v1330
      %v1344 = vpack.c.bf16 %v1333, %v1332
      %v1345 = vpack.c.bf16 %v1335, %v1334
      %v1346 = vpack.c.bf16 %v1337, %v1336
      %v1347 = vpack.c.bf16 %v1339, %v1338
      %v1348 = vpack.c.bf16 %v1340, %v1340
      %s1349 = scalar_lea.vmem [#allocation9], 64
      %v1350 = vld [vmem:[%s1349] sm:$0xf]
      %v1351 = vld [vmem:[%s1349 + $0x4] sm:$0xf]
      %v1352 = vld [vmem:[%s1349 + $0x8] sm:$0xf]
      %v1353 = vld [vmem:[%s1349 + $0xc] sm:$0xf]
      %v1354 = vld [vmem:[%s1349 + $0x10] sm:$0xf]
      %v1355 = vld [vmem:[%s1349 + $0x14] sm:$0xf]
      %v1356 = vld [vmem:[%s1349 + $0x18] sm:$0xf]
      %v1357 = vld [vmem:[%s1349 + $0x1c] sm:$0xf]
      %v1358 = vld [vmem:[%s1349 + $0x20] sm:$0xf]
      %v1359 = vld [vmem:[%s1349 + $0x24] sm:$0xf]
      %v1360 = vld [vmem:[%s1349 + $0x28] sm:$0xf]
      %v1361 = vld [vmem:[%s1349 + $0x2c] sm:$0xf]
      %v1362 = vld [vmem:[%s1349 + $0x30] sm:$0xf]
      %v1363 = vld [vmem:[%s1349 + $0x34] sm:$0xf]
      %v1364 = vld [vmem:[%s1349 + $0x38] sm:$0xf]
      %v1365 = vld [vmem:[%s1349 + $0x3c] sm:$0xf]
      %v1366 = vld [vmem:[#allocation11 + $0x1] sm:$0x1]
      %v1367 = vlaneseq
      %v1368 = vshrl.u32 %v1367, 7
      %v1369 = vsub.s32 0, %v1368
      %v1370 = vrot.slane %v1366, %v1369
      %v1387 = vunpack.c.l.b16 %v1350
      %v1388 = vunpack.c.l.b16 %v1351
      %v1389 = vunpack.c.l.b16 %v1352
      %v1390 = vunpack.c.l.b16 %v1353
      %v1391 = vunpack.c.l.b16 %v1354
      %v1392 = vunpack.c.l.b16 %v1355
      %v1393 = vunpack.c.l.b16 %v1356
      %v1394 = vunpack.c.l.b16 %v1357
      %v1395 = vunpack.c.l.b16 %v1358
      %v1396 = vunpack.c.l.b16 %v1359
      %v1397 = vunpack.c.l.b16 %v1360
      %v1398 = vunpack.c.l.b16 %v1361
      %v1399 = vunpack.c.l.b16 %v1362
      %v1400 = vunpack.c.l.b16 %v1363
      %v1401 = vunpack.c.l.b16 %v1364
      %v1402 = vunpack.c.l.b16 %v1365
      %v1403 = vpack.c.b16 %v1388, %v1387
      %v1404 = vpack.c.b16 %v1390, %v1389
      %v1405 = vpack.c.b16 %v1392, %v1391
      %v1406 = vpack.c.b16 %v1394, %v1393
      %v1407 = vpack.c.b16 %v1396, %v1395
      %v1408 = vpack.c.b16 %v1398, %v1397
      %v1409 = vpack.c.b16 %v1400, %v1399
      %v1410 = vpack.c.b16 %v1402, %v1401
      %1419 = vmatprep.subr.bf16.mxu0 0
      %1420 = vmatpush1.bf16.msra.mxu0 %v1410
      %1421 = vmatprep.subr.bf16.mxu0 0
      %1422 = vmatpush1.bf16.msra.mxu0 %v1409
      %1423 = vmatprep.subr.bf16.mxu0 0
      %1424 = vmatpush1.bf16.msra.mxu0 %v1408
      %1425 = vmatprep.subr.bf16.mxu0 0
      %1426 = vmatpush1.bf16.msra.mxu0 %v1407
      %1427 = vmatprep.subr.bf16.mxu0 0
      %1428 = vmatpush1.bf16.msra.mxu0 %v1406
      %1429 = vmatprep.subr.bf16.mxu0 0
      %1430 = vmatpush1.bf16.msra.mxu0 %v1405
      %1431 = vmatprep.subr.bf16.mxu0 0
      %1432 = vmatpush1.bf16.msra.mxu0 %v1404
      %1433 = vmatprep.subr.bf16.mxu0 0
      %1434 = vmatpush1.bf16.msra.mxu0 %v1403
      %1435 = vmatprep.subr.bf16.mxu0 0
      %1436 = vmatpush2.bf16.msra.mxu0 0
      %1437 = vmatprep.subr.bf16.mxu0 0
      %1438 = vmatpush2.bf16.msra.mxu0 0
      %1439 = vmatprep.subr.bf16.mxu0 0
      %1440 = vmatpush2.bf16.msra.mxu0 0
      %1441 = vmatprep.subr.bf16.mxu0 0
      %1442 = vmatpush2.bf16.msra.mxu0 0
      %1443 = vmatprep.subr.bf16.mxu0 0
      %1444 = vmatpush2.bf16.msra.mxu0 0
      %1445 = vmatprep.subr.bf16.mxu0 0
      %1446 = vmatpush2.bf16.msra.mxu0 0
      %1447 = vmatprep.subr.bf16.mxu0 0
      %1448 = vmatpush2.bf16.msra.mxu0 0
      %1449 = vmatprep.subr.bf16.mxu0 0
      %1450 = vmatpush2.bf16.msra.mxu0 0
      %1451 = vmatprep.mubr.bf16.mxu0 0
      %1452 = vmatmul.mubr.bf16.gmra.mxu0 %v1341
      %v1453 = vpop.f32.mrf.mxu0
      %v1454 = vadd.f32 %v1370, %v1453
      %v1455 = vpop.f32.mrf.mxu0
      %v1456 = vpop.f32.mrf.mxu0
      %v1457 = vadd.f32 %v1370, %v1456
      %v1458 = vpop.f32.mrf.mxu0
      %1459 = vmatprep.mubr.bf16.mxu0 0
      %1460 = vmatmul.mubr.bf16.gmra.mxu0 %v1342
      %v1461 = vpop.f32.mrf.mxu0
      %v1462 = vadd.f32 %v1370, %v1461
      %v1463 = vpop.f32.mrf.mxu0
      %v1464 = vpop.f32.mrf.mxu0
      %v1465 = vadd.f32 %v1370, %v1464
      %v1466 = vpop.f32.mrf.mxu0
      %1467 = vmatprep.mubr.bf16.mxu0 0
      %1468 = vmatmul.mubr.bf16.gmra.mxu0 %v1343
      %v1469 = vpop.f32.mrf.mxu0
      %v1470 = vadd.f32 %v1370, %v1469
      %v1471 = vpop.f32.mrf.mxu0
      %v1472 = vpop.f32.mrf.mxu0
      %v1473 = vadd.f32 %v1370, %v1472
      %v1474 = vpop.f32.mrf.mxu0
      %1475 = vmatprep.mubr.bf16.mxu0 0
      %1476 = vmatmul.mubr.bf16.gmra.mxu0 %v1344
      %v1477 = vpop.f32.mrf.mxu0
      %v1478 = vadd.f32 %v1370, %v1477
      %v1479 = vpop.f32.mrf.mxu0
      %v1480 = vpop.f32.mrf.mxu0
      %v1481 = vadd.f32 %v1370, %v1480
      %v1482 = vpop.f32.mrf.mxu0
      %1483 = vmatprep.mubr.bf16.mxu0 0
      %1484 = vmatmul.mubr.bf16.gmra.mxu0 %v1345
      %v1485 = vpop.f32.mrf.mxu0
      %v1486 = vadd.f32 %v1370, %v1485
      %v1487 = vpop.f32.mrf.mxu0
      %v1488 = vpop.f32.mrf.mxu0
      %v1489 = vadd.f32 %v1370, %v1488
      %v1490 = vpop.f32.mrf.mxu0
      %1491 = vmatprep.mubr.bf16.mxu0 0
      %1492 = vmatmul.mubr.bf16.gmra.mxu0 %v1346
      %v1493 = vpop.f32.mrf.mxu0
      %v1494 = vadd.f32 %v1370, %v1493
      %v1495 = vpop.f32.mrf.mxu0
      %v1496 = vpop.f32.mrf.mxu0
      %v1497 = vadd.f32 %v1370, %v1496
      %v1498 = vpop.f32.mrf.mxu0
      %1499 = vmatprep.mubr.bf16.mxu0 0
      %1500 = vmatmul.mubr.bf16.gmra.mxu0 %v1347
      %v1501 = vpop.f32.mrf.mxu0
      %v1502 = vadd.f32 %v1370, %v1501
      %v1503 = vpop.f32.mrf.mxu0
      %v1504 = vpop.f32.mrf.mxu0
      %v1505 = vadd.f32 %v1370, %v1504
      %v1506 = vpop.f32.mrf.mxu0
      %1507 = vmatprep.mubr.bf16.mxu0 0
      %1508 = vmatmul.mubr.bf16.gmra.mxu0 %v1348
      %v1509 = vpop.f32.mrf.mxu0
      %v1510 = vadd.f32 %v1370, %v1509
      %v1511 = vpop.f32.mrf.mxu0
      %v1512 = vpop.f32.mrf.mxu0
      %v1513 = vpop.f32.mrf.mxu0
      %1514 = vdwg.mxu0
      %v1515 = vxor.u32 %v1454, 2147483648
      %v1516 = vxor.u32 %v1457, 2147483648
      %v1517 = vxor.u32 %v1462, 2147483648
      %v1518 = vxor.u32 %v1465, 2147483648
      %v1519 = vxor.u32 %v1470, 2147483648
      %v1520 = vxor.u32 %v1473, 2147483648
      %v1521 = vxor.u32 %v1478, 2147483648
      %v1522 = vxor.u32 %v1481, 2147483648
      %v1523 = vxor.u32 %v1486, 2147483648
      %v1524 = vxor.u32 %v1489, 2147483648
      %v1525 = vxor.u32 %v1494, 2147483648
      %v1526 = vxor.u32 %v1497, 2147483648
      %v1527 = vxor.u32 %v1502, 2147483648
      %v1528 = vxor.u32 %v1505, 2147483648
      %v1529 = vxor.u32 %v1510, 2147483648
      %v1530 = vmul.f32 %v1515, 1.442695
      %v1531 = vpow.pop %v1530
      %v1532 = vmul.f32 %v1516, 1.442695
      %v1533 = vpow.pop %v1532
      %v1534 = vmul.f32 %v1517, 1.442695
      %v1535 = vpow.pop %v1534
      %v1536 = vmul.f32 %v1518, 1.442695
      %v1537 = vpow.pop %v1536
      %v1538 = vmul.f32 %v1519, 1.442695
      %v1539 = vpow.pop %v1538
      %v1540 = vmul.f32 %v1520, 1.442695
      %v1541 = vpow.pop %v1540
      %v1542 = vmul.f32 %v1521, 1.442695
      %v1543 = vpow.pop %v1542
      %v1544 = vmul.f32 %v1522, 1.442695
      %v1545 = vpow.pop %v1544
      %v1546 = vmul.f32 %v1523, 1.442695
      %v1547 = vpow.pop %v1546
      %v1548 = vmul.f32 %v1524, 1.442695
      %v1549 = vpow.pop %v1548
      %v1550 = vmul.f32 %v1525, 1.442695
      %v1551 = vpow.pop %v1550
      %v1552 = vmul.f32 %v1526, 1.442695
      %v1553 = vpow.pop %v1552
      %v1554 = vmul.f32 %v1527, 1.442695
      %v1555 = vpow.pop %v1554
      %v1556 = vmul.f32 %v1528, 1.442695
      %v1557 = vpow.pop %v1556
      %v1558 = vmul.f32 %v1529, 1.442695
      %v1559 = vpow.pop %v1558
      %v1560 = vadd.f32 %v1531, 1.0
      %v1561 = vadd.f32 %v1533, 1.0
      %v1562 = vadd.f32 %v1535, 1.0
      %v1563 = vadd.f32 %v1537, 1.0
      %v1564 = vadd.f32 %v1539, 1.0
      %v1565 = vadd.f32 %v1541, 1.0
      %v1566 = vadd.f32 %v1543, 1.0
      %v1567 = vadd.f32 %v1545, 1.0
      %v1568 = vadd.f32 %v1547, 1.0
      %v1569 = vadd.f32 %v1549, 1.0
      %v1570 = vadd.f32 %v1551, 1.0
      %v1571 = vadd.f32 %v1553, 1.0
      %v1572 = vadd.f32 %v1555, 1.0
      %v1573 = vadd.f32 %v1557, 1.0
      %v1574 = vadd.f32 %v1559, 1.0
      %v1575 = vrcp.pop %v1560
      %v1576 = vmul.f32 1.0, %v1575
      %v1577 = vrcp.pop %v1561
      %v1578 = vmul.f32 1.0, %v1577
      %v1579 = vrcp.pop %v1562
      %v1580 = vmul.f32 1.0, %v1579
      %v1581 = vrcp.pop %v1563
      %v1582 = vmul.f32 1.0, %v1581
      %v1583 = vrcp.pop %v1564
      %v1584 = vmul.f32 1.0, %v1583
      %v1585 = vrcp.pop %v1565
      %v1586 = vmul.f32 1.0, %v1585
      %v1587 = vrcp.pop %v1566
      %v1588 = vmul.f32 1.0, %v1587
      %v1589 = vrcp.pop %v1567
      %v1590 = vmul.f32 1.0, %v1589
      %v1591 = vrcp.pop %v1568
      %v1592 = vmul.f32 1.0, %v1591
      %v1593 = vrcp.pop %v1569
      %v1594 = vmul.f32 1.0, %v1593
      %v1595 = vrcp.pop %v1570
      %v1596 = vmul.f32 1.0, %v1595
      %v1597 = vrcp.pop %v1571
      %v1598 = vmul.f32 1.0, %v1597
      %v1599 = vrcp.pop %v1572
      %v1600 = vmul.f32 1.0, %v1599
      %v1601 = vrcp.pop %v1573
      %v1602 = vmul.f32 1.0, %v1601
      %v1603 = vrcp.pop %v1574
      %v1604 = vmul.f32 1.0, %v1603
      %v1605 = vmul.f32 %v1454, %v1576
      %v1606 = vmul.f32 %v1457, %v1578
      %v1607 = vmul.f32 %v1462, %v1580
      %v1608 = vmul.f32 %v1465, %v1582
      %v1609 = vmul.f32 %v1470, %v1584
      %v1610 = vmul.f32 %v1473, %v1586
      %v1611 = vmul.f32 %v1478, %v1588
      %v1612 = vmul.f32 %v1481, %v1590
      %v1613 = vmul.f32 %v1486, %v1592
      %v1614 = vmul.f32 %v1489, %v1594
      %v1615 = vmul.f32 %v1494, %v1596
      %v1616 = vmul.f32 %v1497, %v1598
      %v1617 = vmul.f32 %v1502, %v1600
      %v1618 = vmul.f32 %v1505, %v1602
      %v1619 = vmul.f32 %v1510, %v1604
      %v1620 = vpack.c.bf16 %v1606, %v1605
      %v1621 = vpack.c.bf16 %v1608, %v1607
      %v1622 = vpack.c.bf16 %v1610, %v1609
      %v1623 = vpack.c.bf16 %v1612, %v1611
      %v1624 = vpack.c.bf16 %v1614, %v1613
      %v1625 = vpack.c.bf16 %v1616, %v1615
      %v1626 = vpack.c.bf16 %v1618, %v1617
      %v1627 = vpack.c.bf16 %v1619, %v1619
      %s1628 = scalar_lea.vmem [#allocation9], 128
      %v1629 = vld [vmem:[%s1628] sm:$0xf]
      %v1630 = vld [vmem:[%s1628 + $0x4] sm:$0xf]
      %v1631 = vld [vmem:[%s1628 + $0x8] sm:$0xf]
      %v1632 = vld [vmem:[%s1628 + $0xc] sm:$0xf]
      %v1633 = vld [vmem:[%s1628 + $0x10] sm:$0xf]
      %v1634 = vld [vmem:[%s1628 + $0x14] sm:$0xf]
      %v1635 = vld [vmem:[%s1628 + $0x18] sm:$0xf]
      %v1636 = vld [vmem:[%s1628 + $0x1c] sm:$0xf]
      %v1637 = vld [vmem:[%s1628 + $0x20] sm:$0xf]
      %v1638 = vld [vmem:[%s1628 + $0x24] sm:$0xf]
      %v1639 = vld [vmem:[%s1628 + $0x28] sm:$0xf]
      %v1640 = vld [vmem:[%s1628 + $0x2c] sm:$0xf]
      %v1641 = vld [vmem:[%s1628 + $0x30] sm:$0xf]
      %v1642 = vld [vmem:[%s1628 + $0x34] sm:$0xf]
      %v1643 = vld [vmem:[%s1628 + $0x38] sm:$0xf]
      %v1644 = vld [vmem:[%s1628 + $0x3c] sm:$0xf]
      %v1645 = vld [vmem:[#allocation11 + $0x2] sm:$0x1]
      %v1646 = vlaneseq
      %v1647 = vshrl.u32 %v1646, 7
      %v1648 = vsub.s32 0, %v1647
      %v1649 = vrot.slane %v1645, %v1648
      %v1666 = vunpack.c.l.b16 %v1629
      %v1667 = vunpack.c.l.b16 %v1630
      %v1668 = vunpack.c.l.b16 %v1631
      %v1669 = vunpack.c.l.b16 %v1632
      %v1670 = vunpack.c.l.b16 %v1633
      %v1671 = vunpack.c.l.b16 %v1634
      %v1672 = vunpack.c.l.b16 %v1635
      %v1673 = vunpack.c.l.b16 %v1636
      %v1674 = vunpack.c.l.b16 %v1637
      %v1675 = vunpack.c.l.b16 %v1638
      %v1676 = vunpack.c.l.b16 %v1639
      %v1677 = vunpack.c.l.b16 %v1640
      %v1678 = vunpack.c.l.b16 %v1641
      %v1679 = vunpack.c.l.b16 %v1642
      %v1680 = vunpack.c.l.b16 %v1643
      %v1681 = vunpack.c.l.b16 %v1644
      %v1682 = vpack.c.b16 %v1667, %v1666
      %v1683 = vpack.c.b16 %v1669, %v1668
      %v1684 = vpack.c.b16 %v1671, %v1670
      %v1685 = vpack.c.b16 %v1673, %v1672
      %v1686 = vpack.c.b16 %v1675, %v1674
      %v1687 = vpack.c.b16 %v1677, %v1676
      %v1688 = vpack.c.b16 %v1679, %v1678
      %v1689 = vpack.c.b16 %v1681, %v1680
      %1698 = vmatprep.subr.bf16.mxu0 0
      %1699 = vmatpush1.bf16.msra.mxu0 %v1689
      %1700 = vmatprep.subr.bf16.mxu0 0
      %1701 = vmatpush1.bf16.msra.mxu0 %v1688
      %1702 = vmatprep.subr.bf16.mxu0 0
      %1703 = vmatpush1.bf16.msra.mxu0 %v1687
      %1704 = vmatprep.subr.bf16.mxu0 0
      %1705 = vmatpush1.bf16.msra.mxu0 %v1686
      %1706 = vmatprep.subr.bf16.mxu0 0
      %1707 = vmatpush1.bf16.msra.mxu0 %v1685
      %1708 = vmatprep.subr.bf16.mxu0 0
      %1709 = vmatpush1.bf16.msra.mxu0 %v1684
      %1710 = vmatprep.subr.bf16.mxu0 0
      %1711 = vmatpush1.bf16.msra.mxu0 %v1683
      %1712 = vmatprep.subr.bf16.mxu0 0
      %1713 = vmatpush1.bf16.msra.mxu0 %v1682
      %1714 = vmatprep.subr.bf16.mxu0 0
      %1715 = vmatpush2.bf16.msra.mxu0 0
      %1716 = vmatprep.subr.bf16.mxu0 0
      %1717 = vmatpush2.bf16.msra.mxu0 0
      %1718 = vmatprep.subr.bf16.mxu0 0
      %1719 = vmatpush2.bf16.msra.mxu0 0
      %1720 = vmatprep.subr.bf16.mxu0 0
      %1721 = vmatpush2.bf16.msra.mxu0 0
      %1722 = vmatprep.subr.bf16.mxu0 0
      %1723 = vmatpush2.bf16.msra.mxu0 0
      %1724 = vmatprep.subr.bf16.mxu0 0
      %1725 = vmatpush2.bf16.msra.mxu0 0
      %1726 = vmatprep.subr.bf16.mxu0 0
      %1727 = vmatpush2.bf16.msra.mxu0 0
      %1728 = vmatprep.subr.bf16.mxu0 0
      %1729 = vmatpush2.bf16.msra.mxu0 0
      %1730 = vmatprep.mubr.bf16.mxu0 0
      %1731 = vmatmul.mubr.bf16.gmra.mxu0 %v1620
      %v1732 = vpop.f32.mrf.mxu0
      %v1733 = vadd.f32 %v1649, %v1732
      %v1734 = vpop.f32.mrf.mxu0
      %v1735 = vpop.f32.mrf.mxu0
      %v1736 = vadd.f32 %v1649, %v1735
      %v1737 = vpop.f32.mrf.mxu0
      %1738 = vmatprep.mubr.bf16.mxu0 0
      %1739 = vmatmul.mubr.bf16.gmra.mxu0 %v1621
      %v1740 = vpop.f32.mrf.mxu0
      %v1741 = vadd.f32 %v1649, %v1740
      %v1742 = vpop.f32.mrf.mxu0
      %v1743 = vpop.f32.mrf.mxu0
      %v1744 = vadd.f32 %v1649, %v1743
      %v1745 = vpop.f32.mrf.mxu0
      %1746 = vmatprep.mubr.bf16.mxu0 0
      %1747 = vmatmul.mubr.bf16.gmra.mxu0 %v1622
      %v1748 = vpop.f32.mrf.mxu0
      %v1749 = vadd.f32 %v1649, %v1748
      %v1750 = vpop.f32.mrf.mxu0
      %v1751 = vpop.f32.mrf.mxu0
      %v1752 = vadd.f32 %v1649, %v1751
      %v1753 = vpop.f32.mrf.mxu0
      %1754 = vmatprep.mubr.bf16.mxu0 0
      %1755 = vmatmul.mubr.bf16.gmra.mxu0 %v1623
      %v1756 = vpop.f32.mrf.mxu0
      %v1757 = vadd.f32 %v1649, %v1756
      %v1758 = vpop.f32.mrf.mxu0
      %v1759 = vpop.f32.mrf.mxu0
      %v1760 = vadd.f32 %v1649, %v1759
      %v1761 = vpop.f32.mrf.mxu0
      %1762 = vmatprep.mubr.bf16.mxu0 0
      %1763 = vmatmul.mubr.bf16.gmra.mxu0 %v1624
      %v1764 = vpop.f32.mrf.mxu0
      %v1765 = vadd.f32 %v1649, %v1764
      %v1766 = vpop.f32.mrf.mxu0
      %v1767 = vpop.f32.mrf.mxu0
      %v1768 = vadd.f32 %v1649, %v1767
      %v1769 = vpop.f32.mrf.mxu0
      %1770 = vmatprep.mubr.bf16.mxu0 0
      %1771 = vmatmul.mubr.bf16.gmra.mxu0 %v1625
      %v1772 = vpop.f32.mrf.mxu0
      %v1773 = vadd.f32 %v1649, %v1772
      %v1774 = vpop.f32.mrf.mxu0
      %v1775 = vpop.f32.mrf.mxu0
      %v1776 = vadd.f32 %v1649, %v1775
      %v1777 = vpop.f32.mrf.mxu0
      %1778 = vmatprep.mubr.bf16.mxu0 0
      %1779 = vmatmul.mubr.bf16.gmra.mxu0 %v1626
      %v1780 = vpop.f32.mrf.mxu0
      %v1781 = vadd.f32 %v1649, %v1780
      %v1782 = vpop.f32.mrf.mxu0
      %v1783 = vpop.f32.mrf.mxu0
      %v1784 = vadd.f32 %v1649, %v1783
      %v1785 = vpop.f32.mrf.mxu0
      %1786 = vmatprep.mubr.bf16.mxu0 0
      %1787 = vmatmul.mubr.bf16.gmra.mxu0 %v1627
      %v1788 = vpop.f32.mrf.mxu0
      %v1789 = vadd.f32 %v1649, %v1788
      %v1790 = vpop.f32.mrf.mxu0
      %v1791 = vpop.f32.mrf.mxu0
      %v1792 = vpop.f32.mrf.mxu0
      %1793 = vdwg.mxu0
      %v1794 = vxor.u32 %v1733, 2147483648
      %v1795 = vxor.u32 %v1736, 2147483648
      %v1796 = vxor.u32 %v1741, 2147483648
      %v1797 = vxor.u32 %v1744, 2147483648
      %v1798 = vxor.u32 %v1749, 2147483648
      %v1799 = vxor.u32 %v1752, 2147483648
      %v1800 = vxor.u32 %v1757, 2147483648
      %v1801 = vxor.u32 %v1760, 2147483648
      %v1802 = vxor.u32 %v1765, 2147483648
      %v1803 = vxor.u32 %v1768, 2147483648
      %v1804 = vxor.u32 %v1773, 2147483648
      %v1805 = vxor.u32 %v1776, 2147483648
      %v1806 = vxor.u32 %v1781, 2147483648
      %v1807 = vxor.u32 %v1784, 2147483648
      %v1808 = vxor.u32 %v1789, 2147483648
      %v1809 = vmul.f32 %v1794, 1.442695
      %v1810 = vpow.pop %v1809
      %v1811 = vmul.f32 %v1795, 1.442695
      %v1812 = vpow.pop %v1811
      %v1813 = vmul.f32 %v1796, 1.442695
      %v1814 = vpow.pop %v1813
      %v1815 = vmul.f32 %v1797, 1.442695
      %v1816 = vpow.pop %v1815
      %v1817 = vmul.f32 %v1798, 1.442695
      %v1818 = vpow.pop %v1817
      %v1819 = vmul.f32 %v1799, 1.442695
      %v1820 = vpow.pop %v1819
      %v1821 = vmul.f32 %v1800, 1.442695
      %v1822 = vpow.pop %v1821
      %v1823 = vmul.f32 %v1801, 1.442695
      %v1824 = vpow.pop %v1823
      %v1825 = vmul.f32 %v1802, 1.442695
      %v1826 = vpow.pop %v1825
      %v1827 = vmul.f32 %v1803, 1.442695
      %v1828 = vpow.pop %v1827
      %v1829 = vmul.f32 %v1804, 1.442695
      %v1830 = vpow.pop %v1829
      %v1831 = vmul.f32 %v1805, 1.442695
      %v1832 = vpow.pop %v1831
      %v1833 = vmul.f32 %v1806, 1.442695
      %v1834 = vpow.pop %v1833
      %v1835 = vmul.f32 %v1807, 1.442695
      %v1836 = vpow.pop %v1835
      %v1837 = vmul.f32 %v1808, 1.442695
      %v1838 = vpow.pop %v1837
      %v1839 = vadd.f32 %v1810, 1.0
      %v1840 = vadd.f32 %v1812, 1.0
      %v1841 = vadd.f32 %v1814, 1.0
      %v1842 = vadd.f32 %v1816, 1.0
      %v1843 = vadd.f32 %v1818, 1.0
      %v1844 = vadd.f32 %v1820, 1.0
      %v1845 = vadd.f32 %v1822, 1.0
      %v1846 = vadd.f32 %v1824, 1.0
      %v1847 = vadd.f32 %v1826, 1.0
      %v1848 = vadd.f32 %v1828, 1.0
      %v1849 = vadd.f32 %v1830, 1.0
      %v1850 = vadd.f32 %v1832, 1.0
      %v1851 = vadd.f32 %v1834, 1.0
      %v1852 = vadd.f32 %v1836, 1.0
      %v1853 = vadd.f32 %v1838, 1.0
      %v1854 = vrcp.pop %v1839
      %v1855 = vmul.f32 1.0, %v1854
      %v1856 = vrcp.pop %v1840
      %v1857 = vmul.f32 1.0, %v1856
      %v1858 = vrcp.pop %v1841
      %v1859 = vmul.f32 1.0, %v1858
      %v1860 = vrcp.pop %v1842
      %v1861 = vmul.f32 1.0, %v1860
      %v1862 = vrcp.pop %v1843
      %v1863 = vmul.f32 1.0, %v1862
      %v1864 = vrcp.pop %v1844
      %v1865 = vmul.f32 1.0, %v1864
      %v1866 = vrcp.pop %v1845
      %v1867 = vmul.f32 1.0, %v1866
      %v1868 = vrcp.pop %v1846
      %v1869 = vmul.f32 1.0, %v1868
      %v1870 = vrcp.pop %v1847
      %v1871 = vmul.f32 1.0, %v1870
      %v1872 = vrcp.pop %v1848
      %v1873 = vmul.f32 1.0, %v1872
      %v1874 = vrcp.pop %v1849
      %v1875 = vmul.f32 1.0, %v1874
      %v1876 = vrcp.pop %v1850
      %v1877 = vmul.f32 1.0, %v1876
      %v1878 = vrcp.pop %v1851
      %v1879 = vmul.f32 1.0, %v1878
      %v1880 = vrcp.pop %v1852
      %v1881 = vmul.f32 1.0, %v1880
      %v1882 = vrcp.pop %v1853
      %v1883 = vmul.f32 1.0, %v1882
      %v1884 = vmul.f32 %v1733, %v1855
      %v1885 = vmul.f32 %v1736, %v1857
      %v1886 = vmul.f32 %v1741, %v1859
      %v1887 = vmul.f32 %v1744, %v1861
      %v1888 = vmul.f32 %v1749, %v1863
      %v1889 = vmul.f32 %v1752, %v1865
      %v1890 = vmul.f32 %v1757, %v1867
      %v1891 = vmul.f32 %v1760, %v1869
      %v1892 = vmul.f32 %v1765, %v1871
      %v1893 = vmul.f32 %v1768, %v1873
      %v1894 = vmul.f32 %v1773, %v1875
      %v1895 = vmul.f32 %v1776, %v1877
      %v1896 = vmul.f32 %v1781, %v1879
      %v1897 = vmul.f32 %v1784, %v1881
      %v1898 = vmul.f32 %v1789, %v1883
      %v1899 = vpack.c.bf16 %v1885, %v1884
      %v1900 = vpack.c.bf16 %v1887, %v1886
      %v1901 = vpack.c.bf16 %v1889, %v1888
      %v1902 = vpack.c.bf16 %v1891, %v1890
      %v1903 = vpack.c.bf16 %v1893, %v1892
      %v1904 = vpack.c.bf16 %v1895, %v1894
      %v1905 = vpack.c.bf16 %v1897, %v1896
      %v1906 = vpack.c.bf16 %v1898, %v1898
      %v1907 = vld [vmem:[#allocation12] sm:$0xf]
      %v1908 = vld [vmem:[#allocation12 + $0x4] sm:$0xf]
      %v1909 = vld [vmem:[#allocation12 + $0x8] sm:$0xf]
      %v1910 = vld [vmem:[#allocation12 + $0xc] sm:$0xf]
      %v1911 = vld [vmem:[#allocation12 + $0x10] sm:$0xf]
      %v1912 = vld [vmem:[#allocation12 + $0x14] sm:$0xf]
      %v1913 = vld [vmem:[#allocation12 + $0x18] sm:$0xf]
      %v1914 = vld [vmem:[#allocation12 + $0x1c] sm:$0xf]
      %v1915 = vld [vmem:[#allocation12 + $0x20] sm:$0xf]
      %v1916 = vld [vmem:[#allocation12 + $0x24] sm:$0xf]
      %v1917 = vld [vmem:[#allocation12 + $0x28] sm:$0xf]
      %v1918 = vld [vmem:[#allocation12 + $0x2c] sm:$0xf]
      %v1919 = vld [vmem:[#allocation12 + $0x30] sm:$0xf]
      %v1920 = vld [vmem:[#allocation12 + $0x34] sm:$0xf]
      %v1921 = vld [vmem:[#allocation12 + $0x38] sm:$0xf]
      %v1922 = vld [vmem:[#allocation12 + $0x3c] sm:$0xf]
      %v1939 = vunpack.c.l.b16 %v1907
      %v1940 = vunpack.c.l.b16 %v1908
      %v1941 = vunpack.c.l.b16 %v1909
      %v1942 = vunpack.c.l.b16 %v1910
      %v1943 = vunpack.c.l.b16 %v1911
      %v1944 = vunpack.c.l.b16 %v1912
      %v1945 = vunpack.c.l.b16 %v1913
      %v1946 = vunpack.c.l.b16 %v1914
      %v1947 = vunpack.c.l.b16 %v1915
      %v1948 = vunpack.c.l.b16 %v1916
      %v1949 = vunpack.c.l.b16 %v1917
      %v1950 = vunpack.c.l.b16 %v1918
      %v1951 = vunpack.c.l.b16 %v1919
      %v1952 = vunpack.c.l.b16 %v1920
      %v1953 = vunpack.c.l.b16 %v1921
      %v1954 = vunpack.c.l.b16 %v1922
      %v1955 = vpack.c.b16 %v1940, %v1939
      %v1956 = vpack.c.b16 %v1942, %v1941
      %v1957 = vpack.c.b16 %v1944, %v1943
      %v1958 = vpack.c.b16 %v1946, %v1945
      %v1959 = vpack.c.b16 %v1948, %v1947
      %v1960 = vpack.c.b16 %v1950, %v1949
      %v1961 = vpack.c.b16 %v1952, %v1951
      %v1962 = vpack.c.b16 %v1954, %v1953
      %1971 = vmatprep.subr.bf16.mxu0 0
      %1972 = vmatpush1.bf16.msra.mxu0 %v1962
      %1973 = vmatprep.subr.bf16.mxu0 0
      %1974 = vmatpush1.bf16.msra.mxu0 %v1961
      %1975 = vmatprep.subr.bf16.mxu0 0
      %1976 = vmatpush1.bf16.msra.mxu0 %v1960
      %1977 = vmatprep.subr.bf16.mxu0 0
      %1978 = vmatpush1.bf16.msra.mxu0 %v1959
      %1979 = vmatprep.subr.bf16.mxu0 0
      %1980 = vmatpush1.bf16.msra.mxu0 %v1958
      %1981 = vmatprep.subr.bf16.mxu0 0
      %1982 = vmatpush1.bf16.msra.mxu0 %v1957
      %1983 = vmatprep.subr.bf16.mxu0 0
      %1984 = vmatpush1.bf16.msra.mxu0 %v1956
      %1985 = vmatprep.subr.bf16.mxu0 0
      %1986 = vmatpush1.bf16.msra.mxu0 %v1955
      %1987 = vmatprep.subr.bf16.mxu0 0
      %1988 = vmatpush2.bf16.msra.mxu0 0
      %1989 = vmatprep.subr.bf16.mxu0 0
      %1990 = vmatpush2.bf16.msra.mxu0 0
      %1991 = vmatprep.subr.bf16.mxu0 0
      %1992 = vmatpush2.bf16.msra.mxu0 0
      %1993 = vmatprep.subr.bf16.mxu0 0
      %1994 = vmatpush2.bf16.msra.mxu0 0
      %1995 = vmatprep.subr.bf16.mxu0 0
      %1996 = vmatpush2.bf16.msra.mxu0 0
      %1997 = vmatprep.subr.bf16.mxu0 0
      %1998 = vmatpush2.bf16.msra.mxu0 0
      %1999 = vmatprep.subr.bf16.mxu0 0
      %2000 = vmatpush2.bf16.msra.mxu0 0
      %2001 = vmatprep.subr.bf16.mxu0 0
      %2002 = vmatpush2.bf16.msra.mxu0 0
      %2003 = vmatprep.mubr.bf16.mxu0 0
      %2004 = vmatmul.mubr.bf16.gmra.mxu0 %v1899
      %v2005 = vpop.f32.mrf.mxu0
      %v2006 = vadd.f32 0.0, %v2005
      %v2007 = vpop.f32.mrf.mxu0
      %v2008 = vpop.f32.mrf.mxu0
      %v2009 = vadd.f32 0.0, %v2008
      %v2010 = vpop.f32.mrf.mxu0
      %2011 = vmatprep.mubr.bf16.mxu0 0
      %2012 = vmatmul.mubr.bf16.gmra.mxu0 %v1900
      %v2013 = vpop.f32.mrf.mxu0
      %v2014 = vadd.f32 0.0, %v2013
      %v2015 = vpop.f32.mrf.mxu0
      %v2016 = vpop.f32.mrf.mxu0
      %v2017 = vadd.f32 0.0, %v2016
      %v2018 = vpop.f32.mrf.mxu0
      %2019 = vmatprep.mubr.bf16.mxu0 0
      %2020 = vmatmul.mubr.bf16.gmra.mxu0 %v1901
      %v2021 = vpop.f32.mrf.mxu0
      %v2022 = vadd.f32 0.0, %v2021
      %v2023 = vpop.f32.mrf.mxu0
      %v2024 = vpop.f32.mrf.mxu0
      %v2025 = vadd.f32 0.0, %v2024
      %v2026 = vpop.f32.mrf.mxu0
      %2027 = vmatprep.mubr.bf16.mxu0 0
      %2028 = vmatmul.mubr.bf16.gmra.mxu0 %v1902
      %v2029 = vpop.f32.mrf.mxu0
      %v2030 = vadd.f32 0.0, %v2029
      %v2031 = vpop.f32.mrf.mxu0
      %v2032 = vpop.f32.mrf.mxu0
      %v2033 = vadd.f32 0.0, %v2032
      %v2034 = vpop.f32.mrf.mxu0
      %2035 = vmatprep.mubr.bf16.mxu0 0
      %2036 = vmatmul.mubr.bf16.gmra.mxu0 %v1903
      %v2037 = vpop.f32.mrf.mxu0
      %v2038 = vadd.f32 0.0, %v2037
      %v2039 = vpop.f32.mrf.mxu0
      %v2040 = vpop.f32.mrf.mxu0
      %v2041 = vadd.f32 0.0, %v2040
      %v2042 = vpop.f32.mrf.mxu0
      %2043 = vmatprep.mubr.bf16.mxu0 0
      %2044 = vmatmul.mubr.bf16.gmra.mxu0 %v1904
      %v2045 = vpop.f32.mrf.mxu0
      %v2046 = vadd.f32 0.0, %v2045
      %v2047 = vpop.f32.mrf.mxu0
      %v2048 = vpop.f32.mrf.mxu0
      %v2049 = vadd.f32 0.0, %v2048
      %v2050 = vpop.f32.mrf.mxu0
      %2051 = vmatprep.mubr.bf16.mxu0 0
      %2052 = vmatmul.mubr.bf16.gmra.mxu0 %v1905
      %v2053 = vpop.f32.mrf.mxu0
      %v2054 = vadd.f32 0.0, %v2053
      %v2055 = vpop.f32.mrf.mxu0
      %v2056 = vpop.f32.mrf.mxu0
      %v2057 = vadd.f32 0.0, %v2056
      %v2058 = vpop.f32.mrf.mxu0
      %2059 = vmatprep.mubr.bf16.mxu0 0
      %2060 = vmatmul.mubr.bf16.gmra.mxu0 %v1906
      %v2061 = vpop.f32.mrf.mxu0
      %v2062 = vadd.f32 0.0, %v2061
      %v2063 = vpop.f32.mrf.mxu0
      %v2064 = vpop.f32.mrf.mxu0
      %v2065 = vpop.f32.mrf.mxu0
      %2066 = vdwg.mxu0
      %2067 = vst [vmem:[#allocation14] sm:$0xff] %v2006
      %2068 = vst [vmem:[#allocation14 + $0x8] sm:$0xff] %v2009
      %2069 = vst [vmem:[#allocation14 + $0x10] sm:$0xff] %v2014
      %2070 = vst [vmem:[#allocation14 + $0x18] sm:$0xff] %v2017
      %2071 = vst [vmem:[#allocation14 + $0x20] sm:$0xff] %v2022
      %2072 = vst [vmem:[#allocation14 + $0x28] sm:$0xff] %v2025
      %2073 = vst [vmem:[#allocation14 + $0x30] sm:$0xff] %v2030
      %2074 = vst [vmem:[#allocation14 + $0x38] sm:$0xff] %v2033
      %2075 = vst [vmem:[#allocation14 + $0x40] sm:$0xff] %v2038
      %2076 = vst [vmem:[#allocation14 + $0x48] sm:$0xff] %v2041
      %2077 = vst [vmem:[#allocation14 + $0x50] sm:$0xff] %v2046
      %2078 = vst [vmem:[#allocation14 + $0x58] sm:$0xff] %v2049
      %2079 = vst [vmem:[#allocation14 + $0x60] sm:$0xff] %v2054
      %2080 = vst [vmem:[#allocation14 + $0x68] sm:$0xff] %v2057
      %2081 = vst [vmem:[#allocation14 + $0x70] sm:$0xff] %v2062
      %s2082 = scalar_lea.vmem [#allocation8], 64
      %v2083 = vld [vmem:[%s2082] sm:$0xf]
      %v2084 = vld [vmem:[%s2082 + $0x4] sm:$0xf]
      %v2085 = vld [vmem:[%s2082 + $0x8] sm:$0xf]
      %v2086 = vld [vmem:[%s2082 + $0xc] sm:$0xf]
      %v2087 = vld [vmem:[%s2082 + $0x10] sm:$0xf]
      %v2088 = vld [vmem:[%s2082 + $0x14] sm:$0xf]
      %v2089 = vld [vmem:[%s2082 + $0x18] sm:$0xf]
      %v2090 = vld [vmem:[%s2082 + $0x1c] sm:$0xf]
      %v2091 = vld [vmem:[%s2082 + $0x20] sm:$0xf]
      %v2092 = vld [vmem:[%s2082 + $0x24] sm:$0xf]
      %v2093 = vld [vmem:[%s2082 + $0x28] sm:$0xf]
      %v2094 = vld [vmem:[%s2082 + $0x2c] sm:$0xf]
      %v2095 = vld [vmem:[%s2082 + $0x30] sm:$0xf]
      %v2096 = vld [vmem:[%s2082 + $0x34] sm:$0xf]
      %v2097 = vld [vmem:[%s2082 + $0x38] sm:$0xf]
      %v2098 = vld [vmem:[%s2082 + $0x3c] sm:$0xf]
      %v2115 = vunpack.c.l.b16 %v2083
      %v2116 = vunpack.c.l.b16 %v2084
      %v2117 = vunpack.c.l.b16 %v2085
      %v2118 = vunpack.c.l.b16 %v2086
      %v2119 = vunpack.c.l.b16 %v2087
      %v2120 = vunpack.c.l.b16 %v2088
      %v2121 = vunpack.c.l.b16 %v2089
      %v2122 = vunpack.c.l.b16 %v2090
      %v2123 = vunpack.c.l.b16 %v2091
      %v2124 = vunpack.c.l.b16 %v2092
      %v2125 = vunpack.c.l.b16 %v2093
      %v2126 = vunpack.c.l.b16 %v2094
      %v2127 = vunpack.c.l.b16 %v2095
      %v2128 = vunpack.c.l.b16 %v2096
      %v2129 = vunpack.c.l.b16 %v2097
      %v2130 = vunpack.c.l.b16 %v2098
      %v2131 = vpack.c.b16 %v2116, %v2115
      %v2132 = vpack.c.b16 %v2118, %v2117
      %v2133 = vpack.c.b16 %v2120, %v2119
      %v2134 = vpack.c.b16 %v2122, %v2121
      %v2135 = vpack.c.b16 %v2124, %v2123
      %v2136 = vpack.c.b16 %v2126, %v2125
      %v2137 = vpack.c.b16 %v2128, %v2127
      %v2138 = vpack.c.b16 %v2130, %v2129
      %2147 = vmatprep.subr.bf16.mxu0 0
      %2148 = vmatpush1.bf16.msra.mxu0 %v2138
      %2149 = vmatprep.subr.bf16.mxu0 0
      %2150 = vmatpush1.bf16.msra.mxu0 %v2137
      %2151 = vmatprep.subr.bf16.mxu0 0
      %2152 = vmatpush1.bf16.msra.mxu0 %v2136
      %2153 = vmatprep.subr.bf16.mxu0 0
      %2154 = vmatpush1.bf16.msra.mxu0 %v2135
      %2155 = vmatprep.subr.bf16.mxu0 0
      %2156 = vmatpush1.bf16.msra.mxu0 %v2134
      %2157 = vmatprep.subr.bf16.mxu0 0
      %2158 = vmatpush1.bf16.msra.mxu0 %v2133
      %2159 = vmatprep.subr.bf16.mxu0 0
      %2160 = vmatpush1.bf16.msra.mxu0 %v2132
      %2161 = vmatprep.subr.bf16.mxu0 0
      %2162 = vmatpush1.bf16.msra.mxu0 %v2131
      %2163 = vmatprep.subr.bf16.mxu0 0
      %2164 = vmatpush2.bf16.msra.mxu0 0
      %2165 = vmatprep.subr.bf16.mxu0 0
      %2166 = vmatpush2.bf16.msra.mxu0 0
      %2167 = vmatprep.subr.bf16.mxu0 0
      %2168 = vmatpush2.bf16.msra.mxu0 0
      %2169 = vmatprep.subr.bf16.mxu0 0
      %2170 = vmatpush2.bf16.msra.mxu0 0
      %2171 = vmatprep.subr.bf16.mxu0 0
      %2172 = vmatpush2.bf16.msra.mxu0 0
      %2173 = vmatprep.subr.bf16.mxu0 0
      %2174 = vmatpush2.bf16.msra.mxu0 0
      %2175 = vmatprep.subr.bf16.mxu0 0
      %2176 = vmatpush2.bf16.msra.mxu0 0
      %2177 = vmatprep.subr.bf16.mxu0 0
      %2178 = vmatpush2.bf16.msra.mxu0 0
      %2179 = vmatprep.mubr.bf16.mxu0 0
      %2180 = vmatmul.mubr.bf16.gmra.mxu0 %v895
      %v2181 = vpop.f32.mrf.mxu0
      %v2182 = vadd.f32 0.0, %v2181
      %v2183 = vpop.f32.mrf.mxu0
      %v2184 = vpop.f32.mrf.mxu0
      %v2185 = vadd.f32 0.0, %v2184
      %v2186 = vpop.f32.mrf.mxu0
      %2187 = vmatprep.mubr.bf16.mxu0 0
      %2188 = vmatmul.mubr.bf16.gmra.mxu0 %v896
      %v2189 = vpop.f32.mrf.mxu0
      %v2190 = vadd.f32 0.0, %v2189
      %v2191 = vpop.f32.mrf.mxu0
      %v2192 = vpop.f32.mrf.mxu0
      %v2193 = vadd.f32 0.0, %v2192
      %v2194 = vpop.f32.mrf.mxu0
      %2195 = vmatprep.mubr.bf16.mxu0 0
      %2196 = vmatmul.mubr.bf16.gmra.mxu0 %v897
      %v2197 = vpop.f32.mrf.mxu0
      %v2198 = vadd.f32 0.0, %v2197
      %v2199 = vpop.f32.mrf.mxu0
      %v2200 = vpop.f32.mrf.mxu0
      %v2201 = vadd.f32 0.0, %v2200
      %v2202 = vpop.f32.mrf.mxu0
      %2203 = vmatprep.mubr.bf16.mxu0 0
      %2204 = vmatmul.mubr.bf16.gmra.mxu0 %v898
      %v2205 = vpop.f32.mrf.mxu0
      %v2206 = vadd.f32 0.0, %v2205
      %v2207 = vpop.f32.mrf.mxu0
      %v2208 = vpop.f32.mrf.mxu0
      %v2209 = vadd.f32 0.0, %v2208
      %v2210 = vpop.f32.mrf.mxu0
      %2211 = vmatprep.mubr.bf16.mxu0 0
      %2212 = vmatmul.mubr.bf16.gmra.mxu0 %v899
      %v2213 = vpop.f32.mrf.mxu0
      %v2214 = vadd.f32 0.0, %v2213
      %v2215 = vpop.f32.mrf.mxu0
      %v2216 = vpop.f32.mrf.mxu0
      %v2217 = vadd.f32 0.0, %v2216
      %v2218 = vpop.f32.mrf.mxu0
      %2219 = vmatprep.mubr.bf16.mxu0 0
      %2220 = vmatmul.mubr.bf16.gmra.mxu0 %v900
      %v2221 = vpop.f32.mrf.mxu0
      %v2222 = vadd.f32 0.0, %v2221
      %v2223 = vpop.f32.mrf.mxu0
      %v2224 = vpop.f32.mrf.mxu0
      %v2225 = vadd.f32 0.0, %v2224
      %v2226 = vpop.f32.mrf.mxu0
      %2227 = vmatprep.mubr.bf16.mxu0 0
      %2228 = vmatmul.mubr.bf16.gmra.mxu0 %v901
      %v2229 = vpop.f32.mrf.mxu0
      %v2230 = vadd.f32 0.0, %v2229
      %v2231 = vpop.f32.mrf.mxu0
      %v2232 = vpop.f32.mrf.mxu0
      %v2233 = vadd.f32 0.0, %v2232
      %v2234 = vpop.f32.mrf.mxu0
      %2235 = vmatprep.mubr.bf16.mxu0 0
      %2236 = vmatmul.mubr.bf16.gmra.mxu0 %v902
      %v2237 = vpop.f32.mrf.mxu0
      %v2238 = vadd.f32 0.0, %v2237
      %v2239 = vpop.f32.mrf.mxu0
      %v2240 = vpop.f32.mrf.mxu0
      %v2241 = vpop.f32.mrf.mxu0
      %2242 = vdwg.mxu0
      %v2243 = vpack.c.bf16 %v2185, %v2182
      %v2244 = vpack.c.bf16 %v2193, %v2190
      %v2245 = vpack.c.bf16 %v2201, %v2198
      %v2246 = vpack.c.bf16 %v2209, %v2206
      %v2247 = vpack.c.bf16 %v2217, %v2214
      %v2248 = vpack.c.bf16 %v2225, %v2222
      %v2249 = vpack.c.bf16 %v2233, %v2230
      %v2250 = vpack.c.bf16 %v2238, %v2238
      %s2251 = scalar_lea.vmem [#allocation9], 192
      %v2252 = vld [vmem:[%s2251] sm:$0xf]
      %v2253 = vld [vmem:[%s2251 + $0x4] sm:$0xf]
      %v2254 = vld [vmem:[%s2251 + $0x8] sm:$0xf]
      %v2255 = vld [vmem:[%s2251 + $0xc] sm:$0xf]
      %v2256 = vld [vmem:[%s2251 + $0x10] sm:$0xf]
      %v2257 = vld [vmem:[%s2251 + $0x14] sm:$0xf]
      %v2258 = vld [vmem:[%s2251 + $0x18] sm:$0xf]
      %v2259 = vld [vmem:[%s2251 + $0x1c] sm:$0xf]
      %v2260 = vld [vmem:[%s2251 + $0x20] sm:$0xf]
      %v2261 = vld [vmem:[%s2251 + $0x24] sm:$0xf]
      %v2262 = vld [vmem:[%s2251 + $0x28] sm:$0xf]
      %v2263 = vld [vmem:[%s2251 + $0x2c] sm:$0xf]
      %v2264 = vld [vmem:[%s2251 + $0x30] sm:$0xf]
      %v2265 = vld [vmem:[%s2251 + $0x34] sm:$0xf]
      %v2266 = vld [vmem:[%s2251 + $0x38] sm:$0xf]
      %v2267 = vld [vmem:[%s2251 + $0x3c] sm:$0xf]
      %v2268 = vld [vmem:[#allocation11 + $0x3] sm:$0x1]
      %v2269 = vlaneseq
      %v2270 = vshrl.u32 %v2269, 7
      %v2271 = vsub.s32 0, %v2270
      %v2272 = vrot.slane %v2268, %v2271
      %v2289 = vunpack.c.l.b16 %v2252
      %v2290 = vunpack.c.l.b16 %v2253
      %v2291 = vunpack.c.l.b16 %v2254
      %v2292 = vunpack.c.l.b16 %v2255
      %v2293 = vunpack.c.l.b16 %v2256
      %v2294 = vunpack.c.l.b16 %v2257
      %v2295 = vunpack.c.l.b16 %v2258
      %v2296 = vunpack.c.l.b16 %v2259
      %v2297 = vunpack.c.l.b16 %v2260
      %v2298 = vunpack.c.l.b16 %v2261
      %v2299 = vunpack.c.l.b16 %v2262
      %v2300 = vunpack.c.l.b16 %v2263
      %v2301 = vunpack.c.l.b16 %v2264
      %v2302 = vunpack.c.l.b16 %v2265
      %v2303 = vunpack.c.l.b16 %v2266
      %v2304 = vunpack.c.l.b16 %v2267
      %v2305 = vpack.c.b16 %v2290, %v2289
      %v2306 = vpack.c.b16 %v2292, %v2291
      %v2307 = vpack.c.b16 %v2294, %v2293
      %v2308 = vpack.c.b16 %v2296, %v2295
      %v2309 = vpack.c.b16 %v2298, %v2297
      %v2310 = vpack.c.b16 %v2300, %v2299
      %v2311 = vpack.c.b16 %v2302, %v2301
      %v2312 = vpack.c.b16 %v2304, %v2303
      %2321 = vmatprep.subr.bf16.mxu0 0
      %2322 = vmatpush1.bf16.msra.mxu0 %v2312
      %2323 = vmatprep.subr.bf16.mxu0 0
      %2324 = vmatpush1.bf16.msra.mxu0 %v2311
      %2325 = vmatprep.subr.bf16.mxu0 0
      %2326 = vmatpush1.bf16.msra.mxu0 %v2310
      %2327 = vmatprep.subr.bf16.mxu0 0
      %2328 = vmatpush1.bf16.msra.mxu0 %v2309
      %2329 = vmatprep.subr.bf16.mxu0 0
      %2330 = vmatpush1.bf16.msra.mxu0 %v2308
      %2331 = vmatprep.subr.bf16.mxu0 0
      %2332 = vmatpush1.bf16.msra.mxu0 %v2307
      %2333 = vmatprep.subr.bf16.mxu0 0
      %2334 = vmatpush1.bf16.msra.mxu0 %v2306
      %2335 = vmatprep.subr.bf16.mxu0 0
      %2336 = vmatpush1.bf16.msra.mxu0 %v2305
      %2337 = vmatprep.subr.bf16.mxu0 0
      %2338 = vmatpush2.bf16.msra.mxu0 0
      %2339 = vmatprep.subr.bf16.mxu0 0
      %2340 = vmatpush2.bf16.msra.mxu0 0
      %2341 = vmatprep.subr.bf16.mxu0 0
      %2342 = vmatpush2.bf16.msra.mxu0 0
      %2343 = vmatprep.subr.bf16.mxu0 0
      %2344 = vmatpush2.bf16.msra.mxu0 0
      %2345 = vmatprep.subr.bf16.mxu0 0
      %2346 = vmatpush2.bf16.msra.mxu0 0
      %2347 = vmatprep.subr.bf16.mxu0 0
      %2348 = vmatpush2.bf16.msra.mxu0 0
      %2349 = vmatprep.subr.bf16.mxu0 0
      %2350 = vmatpush2.bf16.msra.mxu0 0
      %2351 = vmatprep.subr.bf16.mxu0 0
      %2352 = vmatpush2.bf16.msra.mxu0 0
      %2353 = vmatprep.mubr.bf16.mxu0 0
      %2354 = vmatmul.mubr.bf16.gmra.mxu0 %v2243
      %v2355 = vpop.f32.mrf.mxu0
      %v2356 = vadd.f32 %v2272, %v2355
      %v2357 = vpop.f32.mrf.mxu0
      %v2358 = vpop.f32.mrf.mxu0
      %v2359 = vadd.f32 %v2272, %v2358
      %v2360 = vpop.f32.mrf.mxu0
      %2361 = vmatprep.mubr.bf16.mxu0 0
      %2362 = vmatmul.mubr.bf16.gmra.mxu0 %v2244
      %v2363 = vpop.f32.mrf.mxu0
      %v2364 = vadd.f32 %v2272, %v2363
      %v2365 = vpop.f32.mrf.mxu0
      %v2366 = vpop.f32.mrf.mxu0
      %v2367 = vadd.f32 %v2272, %v2366
      %v2368 = vpop.f32.mrf.mxu0
      %2369 = vmatprep.mubr.bf16.mxu0 0
      %2370 = vmatmul.mubr.bf16.gmra.mxu0 %v2245
      %v2371 = vpop.f32.mrf.mxu0
      %v2372 = vadd.f32 %v2272, %v2371
      %v2373 = vpop.f32.mrf.mxu0
      %v2374 = vpop.f32.mrf.mxu0
      %v2375 = vadd.f32 %v2272, %v2374
      %v2376 = vpop.f32.mrf.mxu0
      %2377 = vmatprep.mubr.bf16.mxu0 0
      %2378 = vmatmul.mubr.bf16.gmra.mxu0 %v2246
      %v2379 = vpop.f32.mrf.mxu0
      %v2380 = vadd.f32 %v2272, %v2379
      %v2381 = vpop.f32.mrf.mxu0
      %v2382 = vpop.f32.mrf.mxu0
      %v2383 = vadd.f32 %v2272, %v2382
      %v2384 = vpop.f32.mrf.mxu0
      %2385 = vmatprep.mubr.bf16.mxu0 0
      %2386 = vmatmul.mubr.bf16.gmra.mxu0 %v2247
      %v2387 = vpop.f32.mrf.mxu0
      %v2388 = vadd.f32 %v2272, %v2387
      %v2389 = vpop.f32.mrf.mxu0
      %v2390 = vpop.f32.mrf.mxu0
      %v2391 = vadd.f32 %v2272, %v2390
      %v2392 = vpop.f32.mrf.mxu0
      %2393 = vmatprep.mubr.bf16.mxu0 0
      %2394 = vmatmul.mubr.bf16.gmra.mxu0 %v2248
      %v2395 = vpop.f32.mrf.mxu0
      %v2396 = vadd.f32 %v2272, %v2395
      %v2397 = vpop.f32.mrf.mxu0
      %v2398 = vpop.f32.mrf.mxu0
      %v2399 = vadd.f32 %v2272, %v2398
      %v2400 = vpop.f32.mrf.mxu0
      %2401 = vmatprep.mubr.bf16.mxu0 0
      %2402 = vmatmul.mubr.bf16.gmra.mxu0 %v2249
      %v2403 = vpop.f32.mrf.mxu0
      %v2404 = vadd.f32 %v2272, %v2403
      %v2405 = vpop.f32.mrf.mxu0
      %v2406 = vpop.f32.mrf.mxu0
      %v2407 = vadd.f32 %v2272, %v2406
      %v2408 = vpop.f32.mrf.mxu0
      %2409 = vmatprep.mubr.bf16.mxu0 0
      %2410 = vmatmul.mubr.bf16.gmra.mxu0 %v2250
      %v2411 = vpop.f32.mrf.mxu0
      %v2412 = vadd.f32 %v2272, %v2411
      %v2413 = vpop.f32.mrf.mxu0
      %v2414 = vpop.f32.mrf.mxu0
      %v2415 = vpop.f32.mrf.mxu0
      %2416 = vdwg.mxu0
      %v2417 = vxor.u32 %v2356, 2147483648
      %v2418 = vxor.u32 %v2359, 2147483648
      %v2419 = vxor.u32 %v2364, 2147483648
      %v2420 = vxor.u32 %v2367, 2147483648
      %v2421 = vxor.u32 %v2372, 2147483648
      %v2422 = vxor.u32 %v2375, 2147483648
      %v2423 = vxor.u32 %v2380, 2147483648
      %v2424 = vxor.u32 %v2383, 2147483648
      %v2425 = vxor.u32 %v2388, 2147483648
      %v2426 = vxor.u32 %v2391, 2147483648
      %v2427 = vxor.u32 %v2396, 2147483648
      %v2428 = vxor.u32 %v2399, 2147483648
      %v2429 = vxor.u32 %v2404, 2147483648
      %v2430 = vxor.u32 %v2407, 2147483648
      %v2431 = vxor.u32 %v2412, 2147483648
      %v2432 = vmul.f32 %v2417, 1.442695
      %v2433 = vpow.pop %v2432
      %v2434 = vmul.f32 %v2418, 1.442695
      %v2435 = vpow.pop %v2434
      %v2436 = vmul.f32 %v2419, 1.442695
      %v2437 = vpow.pop %v2436
      %v2438 = vmul.f32 %v2420, 1.442695
      %v2439 = vpow.pop %v2438
      %v2440 = vmul.f32 %v2421, 1.442695
      %v2441 = vpow.pop %v2440
      %v2442 = vmul.f32 %v2422, 1.442695
      %v2443 = vpow.pop %v2442
      %v2444 = vmul.f32 %v2423, 1.442695
      %v2445 = vpow.pop %v2444
      %v2446 = vmul.f32 %v2424, 1.442695
      %v2447 = vpow.pop %v2446
      %v2448 = vmul.f32 %v2425, 1.442695
      %v2449 = vpow.pop %v2448
      %v2450 = vmul.f32 %v2426, 1.442695
      %v2451 = vpow.pop %v2450
      %v2452 = vmul.f32 %v2427, 1.442695
      %v2453 = vpow.pop %v2452
      %v2454 = vmul.f32 %v2428, 1.442695
      %v2455 = vpow.pop %v2454
      %v2456 = vmul.f32 %v2429, 1.442695
      %v2457 = vpow.pop %v2456
      %v2458 = vmul.f32 %v2430, 1.442695
      %v2459 = vpow.pop %v2458
      %v2460 = vmul.f32 %v2431, 1.442695
      %v2461 = vpow.pop %v2460
      %v2462 = vadd.f32 %v2433, 1.0
      %v2463 = vadd.f32 %v2435, 1.0
      %v2464 = vadd.f32 %v2437, 1.0
      %v2465 = vadd.f32 %v2439, 1.0
      %v2466 = vadd.f32 %v2441, 1.0
      %v2467 = vadd.f32 %v2443, 1.0
      %v2468 = vadd.f32 %v2445, 1.0
      %v2469 = vadd.f32 %v2447, 1.0
      %v2470 = vadd.f32 %v2449, 1.0
      %v2471 = vadd.f32 %v2451, 1.0
      %v2472 = vadd.f32 %v2453, 1.0
      %v2473 = vadd.f32 %v2455, 1.0
      %v2474 = vadd.f32 %v2457, 1.0
      %v2475 = vadd.f32 %v2459, 1.0
      %v2476 = vadd.f32 %v2461, 1.0
      %v2477 = vrcp.pop %v2462
      %v2478 = vmul.f32 1.0, %v2477
      %v2479 = vrcp.pop %v2463
      %v2480 = vmul.f32 1.0, %v2479
      %v2481 = vrcp.pop %v2464
      %v2482 = vmul.f32 1.0, %v2481
      %v2483 = vrcp.pop %v2465
      %v2484 = vmul.f32 1.0, %v2483
      %v2485 = vrcp.pop %v2466
      %v2486 = vmul.f32 1.0, %v2485
      %v2487 = vrcp.pop %v2467
      %v2488 = vmul.f32 1.0, %v2487
      %v2489 = vrcp.pop %v2468
      %v2490 = vmul.f32 1.0, %v2489
      %v2491 = vrcp.pop %v2469
      %v2492 = vmul.f32 1.0, %v2491
      %v2493 = vrcp.pop %v2470
      %v2494 = vmul.f32 1.0, %v2493
      %v2495 = vrcp.pop %v2471
      %v2496 = vmul.f32 1.0, %v2495
      %v2497 = vrcp.pop %v2472
      %v2498 = vmul.f32 1.0, %v2497
      %v2499 = vrcp.pop %v2473
      %v2500 = vmul.f32 1.0, %v2499
      %v2501 = vrcp.pop %v2474
      %v2502 = vmul.f32 1.0, %v2501
      %v2503 = vrcp.pop %v2475
      %v2504 = vmul.f32 1.0, %v2503
      %v2505 = vrcp.pop %v2476
      %v2506 = vmul.f32 1.0, %v2505
      %v2507 = vmul.f32 %v2356, %v2478
      %v2508 = vmul.f32 %v2359, %v2480
      %v2509 = vmul.f32 %v2364, %v2482
      %v2510 = vmul.f32 %v2367, %v2484
      %v2511 = vmul.f32 %v2372, %v2486
      %v2512 = vmul.f32 %v2375, %v2488
      %v2513 = vmul.f32 %v2380, %v2490
      %v2514 = vmul.f32 %v2383, %v2492
      %v2515 = vmul.f32 %v2388, %v2494
      %v2516 = vmul.f32 %v2391, %v2496
      %v2517 = vmul.f32 %v2396, %v2498
      %v2518 = vmul.f32 %v2399, %v2500
      %v2519 = vmul.f32 %v2404, %v2502
      %v2520 = vmul.f32 %v2407, %v2504
      %v2521 = vmul.f32 %v2412, %v2506
      %v2522 = vpack.c.bf16 %v2508, %v2507
      %v2523 = vpack.c.bf16 %v2510, %v2509
      %v2524 = vpack.c.bf16 %v2512, %v2511
      %v2525 = vpack.c.bf16 %v2514, %v2513
      %v2526 = vpack.c.bf16 %v2516, %v2515
      %v2527 = vpack.c.bf16 %v2518, %v2517
      %v2528 = vpack.c.bf16 %v2520, %v2519
      %v2529 = vpack.c.bf16 %v2521, %v2521
      %s2530 = scalar_lea.vmem [#allocation9], 256
      %v2531 = vld [vmem:[%s2530] sm:$0xf]
      %v2532 = vld [vmem:[%s2530 + $0x4] sm:$0xf]
      %v2533 = vld [vmem:[%s2530 + $0x8] sm:$0xf]
      %v2534 = vld [vmem:[%s2530 + $0xc] sm:$0xf]
      %v2535 = vld [vmem:[%s2530 + $0x10] sm:$0xf]
      %v2536 = vld [vmem:[%s2530 + $0x14] sm:$0xf]
      %v2537 = vld [vmem:[%s2530 + $0x18] sm:$0xf]
      %v2538 = vld [vmem:[%s2530 + $0x1c] sm:$0xf]
      %v2539 = vld [vmem:[%s2530 + $0x20] sm:$0xf]
      %v2540 = vld [vmem:[%s2530 + $0x24] sm:$0xf]
      %v2541 = vld [vmem:[%s2530 + $0x28] sm:$0xf]
      %v2542 = vld [vmem:[%s2530 + $0x2c] sm:$0xf]
      %v2543 = vld [vmem:[%s2530 + $0x30] sm:$0xf]
      %v2544 = vld [vmem:[%s2530 + $0x34] sm:$0xf]
      %v2545 = vld [vmem:[%s2530 + $0x38] sm:$0xf]
      %v2546 = vld [vmem:[%s2530 + $0x3c] sm:$0xf]
      %v2547 = vld [vmem:[#allocation11 + $0x4] sm:$0x1]
      %v2548 = vlaneseq
      %v2549 = vshrl.u32 %v2548, 7
      %v2550 = vsub.s32 0, %v2549
      %v2551 = vrot.slane %v2547, %v2550
      %v2568 = vunpack.c.l.b16 %v2531
      %v2569 = vunpack.c.l.b16 %v2532
      %v2570 = vunpack.c.l.b16 %v2533
      %v2571 = vunpack.c.l.b16 %v2534
      %v2572 = vunpack.c.l.b16 %v2535
      %v2573 = vunpack.c.l.b16 %v2536
      %v2574 = vunpack.c.l.b16 %v2537
      %v2575 = vunpack.c.l.b16 %v2538
      %v2576 = vunpack.c.l.b16 %v2539
      %v2577 = vunpack.c.l.b16 %v2540
      %v2578 = vunpack.c.l.b16 %v2541
      %v2579 = vunpack.c.l.b16 %v2542
      %v2580 = vunpack.c.l.b16 %v2543
      %v2581 = vunpack.c.l.b16 %v2544
      %v2582 = vunpack.c.l.b16 %v2545
      %v2583 = vunpack.c.l.b16 %v2546
      %v2584 = vpack.c.b16 %v2569, %v2568
      %v2585 = vpack.c.b16 %v2571, %v2570
      %v2586 = vpack.c.b16 %v2573, %v2572
      %v2587 = vpack.c.b16 %v2575, %v2574
      %v2588 = vpack.c.b16 %v2577, %v2576
      %v2589 = vpack.c.b16 %v2579, %v2578
      %v2590 = vpack.c.b16 %v2581, %v2580
      %v2591 = vpack.c.b16 %v2583, %v2582
      %2600 = vmatprep.subr.bf16.mxu0 0
      %2601 = vmatpush1.bf16.msra.mxu0 %v2591
      %2602 = vmatprep.subr.bf16.mxu0 0
      %2603 = vmatpush1.bf16.msra.mxu0 %v2590
      %2604 = vmatprep.subr.bf16.mxu0 0
      %2605 = vmatpush1.bf16.msra.mxu0 %v2589
      %2606 = vmatprep.subr.bf16.mxu0 0
      %2607 = vmatpush1.bf16.msra.mxu0 %v2588
      %2608 = vmatprep.subr.bf16.mxu0 0
      %2609 = vmatpush1.bf16.msra.mxu0 %v2587
      %2610 = vmatprep.subr.bf16.mxu0 0
      %2611 = vmatpush1.bf16.msra.mxu0 %v2586
      %2612 = vmatprep.subr.bf16.mxu0 0
      %2613 = vmatpush1.bf16.msra.mxu0 %v2585
      %2614 = vmatprep.subr.bf16.mxu0 0
      %2615 = vmatpush1.bf16.msra.mxu0 %v2584
      %2616 = vmatprep.subr.bf16.mxu0 0
      %2617 = vmatpush2.bf16.msra.mxu0 0
      %2618 = vmatprep.subr.bf16.mxu0 0
      %2619 = vmatpush2.bf16.msra.mxu0 0
      %2620 = vmatprep.subr.bf16.mxu0 0
      %2621 = vmatpush2.bf16.msra.mxu0 0
      %2622 = vmatprep.subr.bf16.mxu0 0
      %2623 = vmatpush2.bf16.msra.mxu0 0
      %2624 = vmatprep.subr.bf16.mxu0 0
      %2625 = vmatpush2.bf16.msra.mxu0 0
      %2626 = vmatprep.subr.bf16.mxu0 0
      %2627 = vmatpush2.bf16.msra.mxu0 0
      %2628 = vmatprep.subr.bf16.mxu0 0
      %2629 = vmatpush2.bf16.msra.mxu0 0
      %2630 = vmatprep.subr.bf16.mxu0 0
      %2631 = vmatpush2.bf16.msra.mxu0 0
      %2632 = vmatprep.mubr.bf16.mxu0 0
      %2633 = vmatmul.mubr.bf16.gmra.mxu0 %v2522
      %v2634 = vpop.f32.mrf.mxu0
      %v2635 = vadd.f32 %v2551, %v2634
      %v2636 = vpop.f32.mrf.mxu0
      %v2637 = vpop.f32.mrf.mxu0
      %v2638 = vadd.f32 %v2551, %v2637
      %v2639 = vpop.f32.mrf.mxu0
      %2640 = vmatprep.mubr.bf16.mxu0 0
      %2641 = vmatmul.mubr.bf16.gmra.mxu0 %v2523
      %v2642 = vpop.f32.mrf.mxu0
      %v2643 = vadd.f32 %v2551, %v2642
      %v2644 = vpop.f32.mrf.mxu0
      %v2645 = vpop.f32.mrf.mxu0
      %v2646 = vadd.f32 %v2551, %v2645
      %v2647 = vpop.f32.mrf.mxu0
      %2648 = vmatprep.mubr.bf16.mxu0 0
      %2649 = vmatmul.mubr.bf16.gmra.mxu0 %v2524
      %v2650 = vpop.f32.mrf.mxu0
      %v2651 = vadd.f32 %v2551, %v2650
      %v2652 = vpop.f32.mrf.mxu0
      %v2653 = vpop.f32.mrf.mxu0
      %v2654 = vadd.f32 %v2551, %v2653
      %v2655 = vpop.f32.mrf.mxu0
      %2656 = vmatprep.mubr.bf16.mxu0 0
      %2657 = vmatmul.mubr.bf16.gmra.mxu0 %v2525
      %v2658 = vpop.f32.mrf.mxu0
      %v2659 = vadd.f32 %v2551, %v2658
      %v2660 = vpop.f32.mrf.mxu0
      %v2661 = vpop.f32.mrf.mxu0
      %v2662 = vadd.f32 %v2551, %v2661
      %v2663 = vpop.f32.mrf.mxu0
      %2664 = vmatprep.mubr.bf16.mxu0 0
      %2665 = vmatmul.mubr.bf16.gmra.mxu0 %v2526
      %v2666 = vpop.f32.mrf.mxu0
      %v2667 = vadd.f32 %v2551, %v2666
      %v2668 = vpop.f32.mrf.mxu0
      %v2669 = vpop.f32.mrf.mxu0
      %v2670 = vadd.f32 %v2551, %v2669
      %v2671 = vpop.f32.mrf.mxu0
      %2672 = vmatprep.mubr.bf16.mxu0 0
      %2673 = vmatmul.mubr.bf16.gmra.mxu0 %v2527
      %v2674 = vpop.f32.mrf.mxu0
      %v2675 = vadd.f32 %v2551, %v2674
      %v2676 = vpop.f32.mrf.mxu0
      %v2677 = vpop.f32.mrf.mxu0
      %v2678 = vadd.f32 %v2551, %v2677
      %v2679 = vpop.f32.mrf.mxu0
      %2680 = vmatprep.mubr.bf16.mxu0 0
      %2681 = vmatmul.mubr.bf16.gmra.mxu0 %v2528
      %v2682 = vpop.f32.mrf.mxu0
      %v2683 = vadd.f32 %v2551, %v2682
      %v2684 = vpop.f32.mrf.mxu0
      %v2685 = vpop.f32.mrf.mxu0
      %v2686 = vadd.f32 %v2551, %v2685
      %v2687 = vpop.f32.mrf.mxu0
      %2688 = vmatprep.mubr.bf16.mxu0 0
      %2689 = vmatmul.mubr.bf16.gmra.mxu0 %v2529
      %v2690 = vpop.f32.mrf.mxu0
      %v2691 = vadd.f32 %v2551, %v2690
      %v2692 = vpop.f32.mrf.mxu0
      %v2693 = vpop.f32.mrf.mxu0
      %v2694 = vpop.f32.mrf.mxu0
      %2695 = vdwg.mxu0
      %v2696 = vxor.u32 %v2635, 2147483648
      %v2697 = vxor.u32 %v2638, 2147483648
      %v2698 = vxor.u32 %v2643, 2147483648
      %v2699 = vxor.u32 %v2646, 2147483648
      %v2700 = vxor.u32 %v2651, 2147483648
      %v2701 = vxor.u32 %v2654, 2147483648
      %v2702 = vxor.u32 %v2659, 2147483648
      %v2703 = vxor.u32 %v2662, 2147483648
      %v2704 = vxor.u32 %v2667, 2147483648
      %v2705 = vxor.u32 %v2670, 2147483648
      %v2706 = vxor.u32 %v2675, 2147483648
      %v2707 = vxor.u32 %v2678, 2147483648
      %v2708 = vxor.u32 %v2683, 2147483648
      %v2709 = vxor.u32 %v2686, 2147483648
      %v2710 = vxor.u32 %v2691, 2147483648
      %v2711 = vmul.f32 %v2696, 1.442695
      %v2712 = vpow.pop %v2711
      %v2713 = vmul.f32 %v2697, 1.442695
      %v2714 = vpow.pop %v2713
      %v2715 = vmul.f32 %v2698, 1.442695
      %v2716 = vpow.pop %v2715
      %v2717 = vmul.f32 %v2699, 1.442695
      %v2718 = vpow.pop %v2717
      %v2719 = vmul.f32 %v2700, 1.442695
      %v2720 = vpow.pop %v2719
      %v2721 = vmul.f32 %v2701, 1.442695
      %v2722 = vpow.pop %v2721
      %v2723 = vmul.f32 %v2702, 1.442695
      %v2724 = vpow.pop %v2723
      %v2725 = vmul.f32 %v2703, 1.442695
      %v2726 = vpow.pop %v2725
      %v2727 = vmul.f32 %v2704, 1.442695
      %v2728 = vpow.pop %v2727
      %v2729 = vmul.f32 %v2705, 1.442695
      %v2730 = vpow.pop %v2729
      %v2731 = vmul.f32 %v2706, 1.442695
      %v2732 = vpow.pop %v2731
      %v2733 = vmul.f32 %v2707, 1.442695
      %v2734 = vpow.pop %v2733
      %v2735 = vmul.f32 %v2708, 1.442695
      %v2736 = vpow.pop %v2735
      %v2737 = vmul.f32 %v2709, 1.442695
      %v2738 = vpow.pop %v2737
      %v2739 = vmul.f32 %v2710, 1.442695
      %v2740 = vpow.pop %v2739
      %v2741 = vadd.f32 %v2712, 1.0
      %v2742 = vadd.f32 %v2714, 1.0
      %v2743 = vadd.f32 %v2716, 1.0
      %v2744 = vadd.f32 %v2718, 1.0
      %v2745 = vadd.f32 %v2720, 1.0
      %v2746 = vadd.f32 %v2722, 1.0
      %v2747 = vadd.f32 %v2724, 1.0
      %v2748 = vadd.f32 %v2726, 1.0
      %v2749 = vadd.f32 %v2728, 1.0
      %v2750 = vadd.f32 %v2730, 1.0
      %v2751 = vadd.f32 %v2732, 1.0
      %v2752 = vadd.f32 %v2734, 1.0
      %v2753 = vadd.f32 %v2736, 1.0
      %v2754 = vadd.f32 %v2738, 1.0
      %v2755 = vadd.f32 %v2740, 1.0
      %v2756 = vrcp.pop %v2741
      %v2757 = vmul.f32 1.0, %v2756
      %v2758 = vrcp.pop %v2742
      %v2759 = vmul.f32 1.0, %v2758
      %v2760 = vrcp.pop %v2743
      %v2761 = vmul.f32 1.0, %v2760
      %v2762 = vrcp.pop %v2744
      %v2763 = vmul.f32 1.0, %v2762
      %v2764 = vrcp.pop %v2745
      %v2765 = vmul.f32 1.0, %v2764
      %v2766 = vrcp.pop %v2746
      %v2767 = vmul.f32 1.0, %v2766
      %v2768 = vrcp.pop %v2747
      %v2769 = vmul.f32 1.0, %v2768
      %v2770 = vrcp.pop %v2748
      %v2771 = vmul.f32 1.0, %v2770
      %v2772 = vrcp.pop %v2749
      %v2773 = vmul.f32 1.0, %v2772
      %v2774 = vrcp.pop %v2750
      %v2775 = vmul.f32 1.0, %v2774
      %v2776 = vrcp.pop %v2751
      %v2777 = vmul.f32 1.0, %v2776
      %v2778 = vrcp.pop %v2752
      %v2779 = vmul.f32 1.0, %v2778
      %v2780 = vrcp.pop %v2753
      %v2781 = vmul.f32 1.0, %v2780
      %v2782 = vrcp.pop %v2754
      %v2783 = vmul.f32 1.0, %v2782
      %v2784 = vrcp.pop %v2755
      %v2785 = vmul.f32 1.0, %v2784
      %v2786 = vmul.f32 %v2635, %v2757
      %v2787 = vmul.f32 %v2638, %v2759
      %v2788 = vmul.f32 %v2643, %v2761
      %v2789 = vmul.f32 %v2646, %v2763
      %v2790 = vmul.f32 %v2651, %v2765
      %v2791 = vmul.f32 %v2654, %v2767
      %v2792 = vmul.f32 %v2659, %v2769
      %v2793 = vmul.f32 %v2662, %v2771
      %v2794 = vmul.f32 %v2667, %v2773
      %v2795 = vmul.f32 %v2670, %v2775
      %v2796 = vmul.f32 %v2675, %v2777
      %v2797 = vmul.f32 %v2678, %v2779
      %v2798 = vmul.f32 %v2683, %v2781
      %v2799 = vmul.f32 %v2686, %v2783
      %v2800 = vmul.f32 %v2691, %v2785
      %v2801 = vpack.c.bf16 %v2787, %v2786
      %v2802 = vpack.c.bf16 %v2789, %v2788
      %v2803 = vpack.c.bf16 %v2791, %v2790
      %v2804 = vpack.c.bf16 %v2793, %v2792
      %v2805 = vpack.c.bf16 %v2795, %v2794
      %v2806 = vpack.c.bf16 %v2797, %v2796
      %v2807 = vpack.c.bf16 %v2799, %v2798
      %v2808 = vpack.c.bf16 %v2800, %v2800
      %s2809 = scalar_lea.vmem [#allocation9], 320
      %v2810 = vld [vmem:[%s2809] sm:$0xf]
      %v2811 = vld [vmem:[%s2809 + $0x4] sm:$0xf]
      %v2812 = vld [vmem:[%s2809 + $0x8] sm:$0xf]
      %v2813 = vld [vmem:[%s2809 + $0xc] sm:$0xf]
      %v2814 = vld [vmem:[%s2809 + $0x10] sm:$0xf]
      %v2815 = vld [vmem:[%s2809 + $0x14] sm:$0xf]
      %v2816 = vld [vmem:[%s2809 + $0x18] sm:$0xf]
      %v2817 = vld [vmem:[%s2809 + $0x1c] sm:$0xf]
      %v2818 = vld [vmem:[%s2809 + $0x20] sm:$0xf]
      %v2819 = vld [vmem:[%s2809 + $0x24] sm:$0xf]
      %v2820 = vld [vmem:[%s2809 + $0x28] sm:$0xf]
      %v2821 = vld [vmem:[%s2809 + $0x2c] sm:$0xf]
      %v2822 = vld [vmem:[%s2809 + $0x30] sm:$0xf]
      %v2823 = vld [vmem:[%s2809 + $0x34] sm:$0xf]
      %v2824 = vld [vmem:[%s2809 + $0x38] sm:$0xf]
      %v2825 = vld [vmem:[%s2809 + $0x3c] sm:$0xf]
      %v2826 = vld [vmem:[#allocation11 + $0x5] sm:$0x1]
      %v2827 = vlaneseq
      %v2828 = vshrl.u32 %v2827, 7
      %v2829 = vsub.s32 0, %v2828
      %v2830 = vrot.slane %v2826, %v2829
      %v2847 = vunpack.c.l.b16 %v2810
      %v2848 = vunpack.c.l.b16 %v2811
      %v2849 = vunpack.c.l.b16 %v2812
      %v2850 = vunpack.c.l.b16 %v2813
      %v2851 = vunpack.c.l.b16 %v2814
      %v2852 = vunpack.c.l.b16 %v2815
      %v2853 = vunpack.c.l.b16 %v2816
      %v2854 = vunpack.c.l.b16 %v2817
      %v2855 = vunpack.c.l.b16 %v2818
      %v2856 = vunpack.c.l.b16 %v2819
      %v2857 = vunpack.c.l.b16 %v2820
      %v2858 = vunpack.c.l.b16 %v2821
      %v2859 = vunpack.c.l.b16 %v2822
      %v2860 = vunpack.c.l.b16 %v2823
      %v2861 = vunpack.c.l.b16 %v2824
      %v2862 = vunpack.c.l.b16 %v2825
      %v2863 = vpack.c.b16 %v2848, %v2847
      %v2864 = vpack.c.b16 %v2850, %v2849
      %v2865 = vpack.c.b16 %v2852, %v2851
      %v2866 = vpack.c.b16 %v2854, %v2853
      %v2867 = vpack.c.b16 %v2856, %v2855
      %v2868 = vpack.c.b16 %v2858, %v2857
      %v2869 = vpack.c.b16 %v2860, %v2859
      %v2870 = vpack.c.b16 %v2862, %v2861
      %2879 = vmatprep.subr.bf16.mxu0 0
      %2880 = vmatpush1.bf16.msra.mxu0 %v2870
      %2881 = vmatprep.subr.bf16.mxu0 0
      %2882 = vmatpush1.bf16.msra.mxu0 %v2869
      %2883 = vmatprep.subr.bf16.mxu0 0
      %2884 = vmatpush1.bf16.msra.mxu0 %v2868
      %2885 = vmatprep.subr.bf16.mxu0 0
      %2886 = vmatpush1.bf16.msra.mxu0 %v2867
      %2887 = vmatprep.subr.bf16.mxu0 0
      %2888 = vmatpush1.bf16.msra.mxu0 %v2866
      %2889 = vmatprep.subr.bf16.mxu0 0
      %2890 = vmatpush1.bf16.msra.mxu0 %v2865
      %2891 = vmatprep.subr.bf16.mxu0 0
      %2892 = vmatpush1.bf16.msra.mxu0 %v2864
      %2893 = vmatprep.subr.bf16.mxu0 0
      %2894 = vmatpush1.bf16.msra.mxu0 %v2863
      %2895 = vmatprep.subr.bf16.mxu0 0
      %2896 = vmatpush2.bf16.msra.mxu0 0
      %2897 = vmatprep.subr.bf16.mxu0 0
      %2898 = vmatpush2.bf16.msra.mxu0 0
      %2899 = vmatprep.subr.bf16.mxu0 0
      %2900 = vmatpush2.bf16.msra.mxu0 0
      %2901 = vmatprep.subr.bf16.mxu0 0
      %2902 = vmatpush2.bf16.msra.mxu0 0
      %2903 = vmatprep.subr.bf16.mxu0 0
      %2904 = vmatpush2.bf16.msra.mxu0 0
      %2905 = vmatprep.subr.bf16.mxu0 0
      %2906 = vmatpush2.bf16.msra.mxu0 0
      %2907 = vmatprep.subr.bf16.mxu0 0
      %2908 = vmatpush2.bf16.msra.mxu0 0
      %2909 = vmatprep.subr.bf16.mxu0 0
      %2910 = vmatpush2.bf16.msra.mxu0 0
      %2911 = vmatprep.mubr.bf16.mxu0 0
      %2912 = vmatmul.mubr.bf16.gmra.mxu0 %v2801
      %v2913 = vpop.f32.mrf.mxu0
      %v2914 = vadd.f32 %v2830, %v2913
      %v2915 = vpop.f32.mrf.mxu0
      %v2916 = vpop.f32.mrf.mxu0
      %v2917 = vadd.f32 %v2830, %v2916
      %v2918 = vpop.f32.mrf.mxu0
      %2919 = vmatprep.mubr.bf16.mxu0 0
      %2920 = vmatmul.mubr.bf16.gmra.mxu0 %v2802
      %v2921 = vpop.f32.mrf.mxu0
      %v2922 = vadd.f32 %v2830, %v2921
      %v2923 = vpop.f32.mrf.mxu0
      %v2924 = vpop.f32.mrf.mxu0
      %v2925 = vadd.f32 %v2830, %v2924
      %v2926 = vpop.f32.mrf.mxu0
      %2927 = vmatprep.mubr.bf16.mxu0 0
      %2928 = vmatmul.mubr.bf16.gmra.mxu0 %v2803
      %v2929 = vpop.f32.mrf.mxu0
      %v2930 = vadd.f32 %v2830, %v2929
      %v2931 = vpop.f32.mrf.mxu0
      %v2932 = vpop.f32.mrf.mxu0
      %v2933 = vadd.f32 %v2830, %v2932
      %v2934 = vpop.f32.mrf.mxu0
      %2935 = vmatprep.mubr.bf16.mxu0 0
      %2936 = vmatmul.mubr.bf16.gmra.mxu0 %v2804
      %v2937 = vpop.f32.mrf.mxu0
      %v2938 = vadd.f32 %v2830, %v2937
      %v2939 = vpop.f32.mrf.mxu0
      %v2940 = vpop.f32.mrf.mxu0
      %v2941 = vadd.f32 %v2830, %v2940
      %v2942 = vpop.f32.mrf.mxu0
      %2943 = vmatprep.mubr.bf16.mxu0 0
      %2944 = vmatmul.mubr.bf16.gmra.mxu0 %v2805
      %v2945 = vpop.f32.mrf.mxu0
      %v2946 = vadd.f32 %v2830, %v2945
      %v2947 = vpop.f32.mrf.mxu0
      %v2948 = vpop.f32.mrf.mxu0
      %v2949 = vadd.f32 %v2830, %v2948
      %v2950 = vpop.f32.mrf.mxu0
      %2951 = vmatprep.mubr.bf16.mxu0 0
      %2952 = vmatmul.mubr.bf16.gmra.mxu0 %v2806
      %v2953 = vpop.f32.mrf.mxu0
      %v2954 = vadd.f32 %v2830, %v2953
      %v2955 = vpop.f32.mrf.mxu0
      %v2956 = vpop.f32.mrf.mxu0
      %v2957 = vadd.f32 %v2830, %v2956
      %v2958 = vpop.f32.mrf.mxu0
      %2959 = vmatprep.mubr.bf16.mxu0 0
      %2960 = vmatmul.mubr.bf16.gmra.mxu0 %v2807
      %v2961 = vpop.f32.mrf.mxu0
      %v2962 = vadd.f32 %v2830, %v2961
      %v2963 = vpop.f32.mrf.mxu0
      %v2964 = vpop.f32.mrf.mxu0
      %v2965 = vadd.f32 %v2830, %v2964
      %v2966 = vpop.f32.mrf.mxu0
      %2967 = vmatprep.mubr.bf16.mxu0 0
      %2968 = vmatmul.mubr.bf16.gmra.mxu0 %v2808
      %v2969 = vpop.f32.mrf.mxu0
      %v2970 = vadd.f32 %v2830, %v2969
      %v2971 = vpop.f32.mrf.mxu0
      %v2972 = vpop.f32.mrf.mxu0
      %v2973 = vpop.f32.mrf.mxu0
      %2974 = vdwg.mxu0
      %v2975 = vxor.u32 %v2914, 2147483648
      %v2976 = vxor.u32 %v2917, 2147483648
      %v2977 = vxor.u32 %v2922, 2147483648
      %v2978 = vxor.u32 %v2925, 2147483648
      %v2979 = vxor.u32 %v2930, 2147483648
      %v2980 = vxor.u32 %v2933, 2147483648
      %v2981 = vxor.u32 %v2938, 2147483648
      %v2982 = vxor.u32 %v2941, 2147483648
      %v2983 = vxor.u32 %v2946, 2147483648
      %v2984 = vxor.u32 %v2949, 2147483648
      %v2985 = vxor.u32 %v2954, 2147483648
      %v2986 = vxor.u32 %v2957, 2147483648
      %v2987 = vxor.u32 %v2962, 2147483648
      %v2988 = vxor.u32 %v2965, 2147483648
      %v2989 = vxor.u32 %v2970, 2147483648
      %v2990 = vmul.f32 %v2975, 1.442695
      %v2991 = vpow.pop %v2990
      %v2992 = vmul.f32 %v2976, 1.442695
      %v2993 = vpow.pop %v2992
      %v2994 = vmul.f32 %v2977, 1.442695
      %v2995 = vpow.pop %v2994
      %v2996 = vmul.f32 %v2978, 1.442695
      %v2997 = vpow.pop %v2996
      %v2998 = vmul.f32 %v2979, 1.442695
      %v2999 = vpow.pop %v2998
      %v3000 = vmul.f32 %v2980, 1.442695
      %v3001 = vpow.pop %v3000
      %v3002 = vmul.f32 %v2981, 1.442695
      %v3003 = vpow.pop %v3002
      %v3004 = vmul.f32 %v2982, 1.442695
      %v3005 = vpow.pop %v3004
      %v3006 = vmul.f32 %v2983, 1.442695
      %v3007 = vpow.pop %v3006
      %v3008 = vmul.f32 %v2984, 1.442695
      %v3009 = vpow.pop %v3008
      %v3010 = vmul.f32 %v2985, 1.442695
      %v3011 = vpow.pop %v3010
      %v3012 = vmul.f32 %v2986, 1.442695
      %v3013 = vpow.pop %v3012
      %v3014 = vmul.f32 %v2987, 1.442695
      %v3015 = vpow.pop %v3014
      %v3016 = vmul.f32 %v2988, 1.442695
      %v3017 = vpow.pop %v3016
      %v3018 = vmul.f32 %v2989, 1.442695
      %v3019 = vpow.pop %v3018
      %v3020 = vadd.f32 %v2991, 1.0
      %v3021 = vadd.f32 %v2993, 1.0
      %v3022 = vadd.f32 %v2995, 1.0
      %v3023 = vadd.f32 %v2997, 1.0
      %v3024 = vadd.f32 %v2999, 1.0
      %v3025 = vadd.f32 %v3001, 1.0
      %v3026 = vadd.f32 %v3003, 1.0
      %v3027 = vadd.f32 %v3005, 1.0
      %v3028 = vadd.f32 %v3007, 1.0
      %v3029 = vadd.f32 %v3009, 1.0
      %v3030 = vadd.f32 %v3011, 1.0
      %v3031 = vadd.f32 %v3013, 1.0
      %v3032 = vadd.f32 %v3015, 1.0
      %v3033 = vadd.f32 %v3017, 1.0
      %v3034 = vadd.f32 %v3019, 1.0
      %v3035 = vrcp.pop %v3020
      %v3036 = vmul.f32 1.0, %v3035
      %v3037 = vrcp.pop %v3021
      %v3038 = vmul.f32 1.0, %v3037
      %v3039 = vrcp.pop %v3022
      %v3040 = vmul.f32 1.0, %v3039
      %v3041 = vrcp.pop %v3023
      %v3042 = vmul.f32 1.0, %v3041
      %v3043 = vrcp.pop %v3024
      %v3044 = vmul.f32 1.0, %v3043
      %v3045 = vrcp.pop %v3025
      %v3046 = vmul.f32 1.0, %v3045
      %v3047 = vrcp.pop %v3026
      %v3048 = vmul.f32 1.0, %v3047
      %v3049 = vrcp.pop %v3027
      %v3050 = vmul.f32 1.0, %v3049
      %v3051 = vrcp.pop %v3028
      %v3052 = vmul.f32 1.0, %v3051
      %v3053 = vrcp.pop %v3029
      %v3054 = vmul.f32 1.0, %v3053
      %v3055 = vrcp.pop %v3030
      %v3056 = vmul.f32 1.0, %v3055
      %v3057 = vrcp.pop %v3031
      %v3058 = vmul.f32 1.0, %v3057
      %v3059 = vrcp.pop %v3032
      %v3060 = vmul.f32 1.0, %v3059
      %v3061 = vrcp.pop %v3033
      %v3062 = vmul.f32 1.0, %v3061
      %v3063 = vrcp.pop %v3034
      %v3064 = vmul.f32 1.0, %v3063
      %v3065 = vmul.f32 %v2914, %v3036
      %v3066 = vmul.f32 %v2917, %v3038
      %v3067 = vmul.f32 %v2922, %v3040
      %v3068 = vmul.f32 %v2925, %v3042
      %v3069 = vmul.f32 %v2930, %v3044
      %v3070 = vmul.f32 %v2933, %v3046
      %v3071 = vmul.f32 %v2938, %v3048
      %v3072 = vmul.f32 %v2941, %v3050
      %v3073 = vmul.f32 %v2946, %v3052
      %v3074 = vmul.f32 %v2949, %v3054
      %v3075 = vmul.f32 %v2954, %v3056
      %v3076 = vmul.f32 %v2957, %v3058
      %v3077 = vmul.f32 %v2962, %v3060
      %v3078 = vmul.f32 %v2965, %v3062
      %v3079 = vmul.f32 %v2970, %v3064
      %v3080 = vpack.c.bf16 %v3066, %v3065
      %v3081 = vpack.c.bf16 %v3068, %v3067
      %v3082 = vpack.c.bf16 %v3070, %v3069
      %v3083 = vpack.c.bf16 %v3072, %v3071
      %v3084 = vpack.c.bf16 %v3074, %v3073
      %v3085 = vpack.c.bf16 %v3076, %v3075
      %v3086 = vpack.c.bf16 %v3078, %v3077
      %v3087 = vpack.c.bf16 %v3079, %v3079
      %s3088 = scalar_lea.vmem [#allocation12], 64
      %v3089 = vld [vmem:[%s3088] sm:$0xf]
      %v3090 = vld [vmem:[%s3088 + $0x4] sm:$0xf]
      %v3091 = vld [vmem:[%s3088 + $0x8] sm:$0xf]
      %v3092 = vld [vmem:[%s3088 + $0xc] sm:$0xf]
      %v3093 = vld [vmem:[%s3088 + $0x10] sm:$0xf]
      %v3094 = vld [vmem:[%s3088 + $0x14] sm:$0xf]
      %v3095 = vld [vmem:[%s3088 + $0x18] sm:$0xf]
      %v3096 = vld [vmem:[%s3088 + $0x1c] sm:$0xf]
      %v3097 = vld [vmem:[%s3088 + $0x20] sm:$0xf]
      %v3098 = vld [vmem:[%s3088 + $0x24] sm:$0xf]
      %v3099 = vld [vmem:[%s3088 + $0x28] sm:$0xf]
      %v3100 = vld [vmem:[%s3088 + $0x2c] sm:$0xf]
      %v3101 = vld [vmem:[%s3088 + $0x30] sm:$0xf]
      %v3102 = vld [vmem:[%s3088 + $0x34] sm:$0xf]
      %v3103 = vld [vmem:[%s3088 + $0x38] sm:$0xf]
      %v3104 = vld [vmem:[%s3088 + $0x3c] sm:$0xf]
      %v3121 = vunpack.c.l.b16 %v3089
      %v3122 = vunpack.c.l.b16 %v3090
      %v3123 = vunpack.c.l.b16 %v3091
      %v3124 = vunpack.c.l.b16 %v3092
      %v3125 = vunpack.c.l.b16 %v3093
      %v3126 = vunpack.c.l.b16 %v3094
      %v3127 = vunpack.c.l.b16 %v3095
      %v3128 = vunpack.c.l.b16 %v3096
      %v3129 = vunpack.c.l.b16 %v3097
      %v3130 = vunpack.c.l.b16 %v3098
      %v3131 = vunpack.c.l.b16 %v3099
      %v3132 = vunpack.c.l.b16 %v3100
      %v3133 = vunpack.c.l.b16 %v3101
      %v3134 = vunpack.c.l.b16 %v3102
      %v3135 = vunpack.c.l.b16 %v3103
      %v3136 = vunpack.c.l.b16 %v3104
      %v3137 = vpack.c.b16 %v3122, %v3121
      %v3138 = vpack.c.b16 %v3124, %v3123
      %v3139 = vpack.c.b16 %v3126, %v3125
      %v3140 = vpack.c.b16 %v3128, %v3127
      %v3141 = vpack.c.b16 %v3130, %v3129
      %v3142 = vpack.c.b16 %v3132, %v3131
      %v3143 = vpack.c.b16 %v3134, %v3133
      %v3144 = vpack.c.b16 %v3136, %v3135
      %3153 = vmatprep.subr.bf16.mxu0 0
      %3154 = vmatpush1.bf16.msra.mxu0 %v3144
      %3155 = vmatprep.subr.bf16.mxu0 0
      %3156 = vmatpush1.bf16.msra.mxu0 %v3143
      %3157 = vmatprep.subr.bf16.mxu0 0
      %3158 = vmatpush1.bf16.msra.mxu0 %v3142
      %3159 = vmatprep.subr.bf16.mxu0 0
      %3160 = vmatpush1.bf16.msra.mxu0 %v3141
      %3161 = vmatprep.subr.bf16.mxu0 0
      %3162 = vmatpush1.bf16.msra.mxu0 %v3140
      %3163 = vmatprep.subr.bf16.mxu0 0
      %3164 = vmatpush1.bf16.msra.mxu0 %v3139
      %3165 = vmatprep.subr.bf16.mxu0 0
      %3166 = vmatpush1.bf16.msra.mxu0 %v3138
      %3167 = vmatprep.subr.bf16.mxu0 0
      %3168 = vmatpush1.bf16.msra.mxu0 %v3137
      %3169 = vmatprep.subr.bf16.mxu0 0
      %3170 = vmatpush2.bf16.msra.mxu0 0
      %3171 = vmatprep.subr.bf16.mxu0 0
      %3172 = vmatpush2.bf16.msra.mxu0 0
      %3173 = vmatprep.subr.bf16.mxu0 0
      %3174 = vmatpush2.bf16.msra.mxu0 0
      %3175 = vmatprep.subr.bf16.mxu0 0
      %3176 = vmatpush2.bf16.msra.mxu0 0
      %3177 = vmatprep.subr.bf16.mxu0 0
      %3178 = vmatpush2.bf16.msra.mxu0 0
      %3179 = vmatprep.subr.bf16.mxu0 0
      %3180 = vmatpush2.bf16.msra.mxu0 0
      %3181 = vmatprep.subr.bf16.mxu0 0
      %3182 = vmatpush2.bf16.msra.mxu0 0
      %3183 = vmatprep.subr.bf16.mxu0 0
      %3184 = vmatpush2.bf16.msra.mxu0 0
      %3185 = vmatprep.mubr.bf16.mxu0 0
      %3186 = vmatmul.mubr.bf16.gmra.mxu0 %v3080
      %v3187 = vpop.f32.mrf.mxu0
      %v3188 = vadd.f32 0.0, %v3187
      %v3189 = vpop.f32.mrf.mxu0
      %v3190 = vpop.f32.mrf.mxu0
      %v3191 = vadd.f32 0.0, %v3190
      %v3192 = vpop.f32.mrf.mxu0
      %3193 = vmatprep.mubr.bf16.mxu0 0
      %3194 = vmatmul.mubr.bf16.gmra.mxu0 %v3081
      %v3195 = vpop.f32.mrf.mxu0
      %v3196 = vadd.f32 0.0, %v3195
      %v3197 = vpop.f32.mrf.mxu0
      %v3198 = vpop.f32.mrf.mxu0
      %v3199 = vadd.f32 0.0, %v3198
      %v3200 = vpop.f32.mrf.mxu0
      %3201 = vmatprep.mubr.bf16.mxu0 0
      %3202 = vmatmul.mubr.bf16.gmra.mxu0 %v3082
      %v3203 = vpop.f32.mrf.mxu0
      %v3204 = vadd.f32 0.0, %v3203
      %v3205 = vpop.f32.mrf.mxu0
      %v3206 = vpop.f32.mrf.mxu0
      %v3207 = vadd.f32 0.0, %v3206
      %v3208 = vpop.f32.mrf.mxu0
      %3209 = vmatprep.mubr.bf16.mxu0 0
      %3210 = vmatmul.mubr.bf16.gmra.mxu0 %v3083
      %v3211 = vpop.f32.mrf.mxu0
      %v3212 = vadd.f32 0.0, %v3211
      %v3213 = vpop.f32.mrf.mxu0
      %v3214 = vpop.f32.mrf.mxu0
      %v3215 = vadd.f32 0.0, %v3214
      %v3216 = vpop.f32.mrf.mxu0
      %3217 = vmatprep.mubr.bf16.mxu0 0
      %3218 = vmatmul.mubr.bf16.gmra.mxu0 %v3084
      %v3219 = vpop.f32.mrf.mxu0
      %v3220 = vadd.f32 0.0, %v3219
      %v3221 = vpop.f32.mrf.mxu0
      %v3222 = vpop.f32.mrf.mxu0
      %v3223 = vadd.f32 0.0, %v3222
      %v3224 = vpop.f32.mrf.mxu0
      %3225 = vmatprep.mubr.bf16.mxu0 0
      %3226 = vmatmul.mubr.bf16.gmra.mxu0 %v3085
      %v3227 = vpop.f32.mrf.mxu0
      %v3228 = vadd.f32 0.0, %v3227
      %v3229 = vpop.f32.mrf.mxu0
      %v3230 = vpop.f32.mrf.mxu0
      %v3231 = vadd.f32 0.0, %v3230
      %v3232 = vpop.f32.mrf.mxu0
      %3233 = vmatprep.mubr.bf16.mxu0 0
      %3234 = vmatmul.mubr.bf16.gmra.mxu0 %v3086
      %v3235 = vpop.f32.mrf.mxu0
      %v3236 = vadd.f32 0.0, %v3235
      %v3237 = vpop.f32.mrf.mxu0
      %v3238 = vpop.f32.mrf.mxu0
      %v3239 = vadd.f32 0.0, %v3238
      %v3240 = vpop.f32.mrf.mxu0
      %3241 = vmatprep.mubr.bf16.mxu0 0
      %3242 = vmatmul.mubr.bf16.gmra.mxu0 %v3087
      %v3243 = vpop.f32.mrf.mxu0
      %v3244 = vadd.f32 0.0, %v3243
      %v3245 = vpop.f32.mrf.mxu0
      %v3246 = vpop.f32.mrf.mxu0
      %v3247 = vpop.f32.mrf.mxu0
      %3248 = vdwg.mxu0
      %s3249 = scalar_lea.vmem [#allocation14], 120
      %3250 = vst [vmem:[%s3249] sm:$0xff] %v3188
      %3251 = vst [vmem:[%s3249 + $0x8] sm:$0xff] %v3191
      %3252 = vst [vmem:[%s3249 + $0x10] sm:$0xff] %v3196
      %3253 = vst [vmem:[%s3249 + $0x18] sm:$0xff] %v3199
      %3254 = vst [vmem:[%s3249 + $0x20] sm:$0xff] %v3204
      %3255 = vst [vmem:[%s3249 + $0x28] sm:$0xff] %v3207
      %3256 = vst [vmem:[%s3249 + $0x30] sm:$0xff] %v3212
      %3257 = vst [vmem:[%s3249 + $0x38] sm:$0xff] %v3215
      %3258 = vst [vmem:[%s3249 + $0x40] sm:$0xff] %v3220
      %3259 = vst [vmem:[%s3249 + $0x48] sm:$0xff] %v3223
      %3260 = vst [vmem:[%s3249 + $0x50] sm:$0xff] %v3228
      %3261 = vst [vmem:[%s3249 + $0x58] sm:$0xff] %v3231
      %3262 = vst [vmem:[%s3249 + $0x60] sm:$0xff] %v3236
      %3263 = vst [vmem:[%s3249 + $0x68] sm:$0xff] %v3239
      %3264 = vst [vmem:[%s3249 + $0x70] sm:$0xff] %v3244
    $region57: #{tpu_custom_call.1} parent=1 // pred_fallthru
      _
    // Predicated region
    $region58: #{tpu_custom_call.1} parent=1 // pred_check
      _
    $region59: #{tpu_custom_call.1} parent=1 // pred_check_branch
      %3266 = sbr.rel (0) target = $region61
    $region60: #{tpu_custom_call.1} parent=1 // pred_region
      %s3268 = ssub.s32 3840, 3840
      %3269 = vsyncadd [#allocation5], %s3268
      %s3270 = sshll.u32 [#allocation14], 4
      %s3271 = int_to_ptr.vmem [resolvable:$true] %s3270
      %3276 = dma.vmem_to_hbm [thread:$0]  %s3271, 3840, %s6, [#allocation5], 128, 128, 8
    $region61: #{tpu_custom_call.1} parent=1 // pred_fallthru
      _
    // Predicated region
    $region62: #{tpu_custom_call.1} parent=1 // pred_check
      _
    $region63: #{tpu_custom_call.1} parent=1 // pred_check_branch
      %3278 = sbr.rel (0) target = $region65
    $region64: #{tpu_custom_call.1} parent=1 // pred_region
      %3279 = dma.done [#allocation5], 3840
    $region65: #{tpu_custom_call.1} parent=1 // pred_fallthru
      _
    %3280 = vsyncpa [#allocation4], 1
    %3281 = vsyncpa [#allocation7], 1
    %3282 = vsyncpa [#allocation10], 1
    %3283 = vsyncpa [#allocation13], 1
    %3284 = vsyncpa [#allocation5], 1

</llo_original>
